<compile_context>
chip_gen: v7x
topology: tpu7x:2x2x1
jax: 0.10.0
libtpu: 0.0.40
codegen_flags: <defaults>
</compile_context>

<pallas_src>
import functools

import jax
import jax.numpy as jnp
import numpy as np
from jax.experimental import pallas as pl
from jax.experimental.pallas import tpu as pltpu

TRANS_STD = 0.005            # BilinearPooling(trans_std=0.005)
PAD = 2                      # reference-side halo; translation clamped to +/-(PAD-1)=1 px
LANE = 128
VMEM_BUDGET = 48 * 1024 * 1024


# --------------------------------------------------------------------------
# Kernel 1: avg-pool over H*W + folded affine -> packed bilinear weights (N,8)
#   d  = clip(offset * trans_std, -1, 1)          (column 0 = dy, column 1 = dx)
#   wm = max(-d, 0), w0 = 1 - |d|, wp = max(d, 0) (1-D lerp weights, taps -1/0/+1)
#   packed layout: [wm_y wm_x w0_y w0_x wp_y wp_x 0 0]
# --------------------------------------------------------------------------
def _pool_mlp_kernel(of_ref, wf_ref, bf_ref, out_ref, acc_ref, *, inv_hw, trans_std):
    k = pl.program_id(0)

    @pl.when(k == 0)
    def _():
        acc_ref[...] = jnp.zeros_like(acc_ref)

    # partial sum of this H*W tile (lane-axis reduce)
    acc_ref[...] += jnp.sum(of_ref[...], axis=2)                          # (N, C)

    @pl.when(k == pl.num_programs(0) - 1)
    def _():
        pooled = acc_ref[...] * inv_hw                                    # (N, C)
        off = jnp.dot(pooled, wf_ref[...],
                      preferred_element_type=jnp.float32) + bf_ref[...]   # (N, 2)
        d = jnp.clip(off * trans_std, -1.0, 1.0)                          # (dy, dx) px
        wm = jnp.maximum(-d, 0.0)
        w0 = 1.0 - jnp.abs(d)
        wp = jnp.maximum(d, 0.0)
        out_ref[...] = jnp.concatenate([wm, w0, wp, jnp.zeros_like(d)], axis=1)


def _choose_thw(hw):
    if hw % LANE != 0:
        return hw                              # full-extent (non-aligned) block
    t = LANE
    while hw % (2 * t) == 0 and 2 * t <= 4096:
        t *= 2
    return t


def _run_pool_mlp(of_ncl, wf, bf):
    n, c, hw = of_ncl.shape
    thw = _choose_thw(hw)
    kernel = functools.partial(_pool_mlp_kernel, inv_hw=1.0 / hw, trans_std=TRANS_STD)
    return pl.pallas_call(
        kernel,
        out_shape=jax.ShapeDtypeStruct((n, 8), jnp.float32),
        grid_spec=pltpu.PrefetchScalarGridSpec(
            num_scalar_prefetch=0,
            grid=(hw // thw,),
            in_specs=[
                pl.BlockSpec((n, c, thw), lambda k: (0, 0, k)),
                pl.BlockSpec((c, 2), lambda k: (0, 0)),   # folded weight, resident
                pl.BlockSpec((1, 2), lambda k: (0, 0)),   # folded bias, resident
            ],
            out_specs=pl.BlockSpec((n, 8), lambda k: (0, 0)),
            scratch_shapes=[pltpu.VMEM((n, c), jnp.float32)],
        ),
        compiler_params=pltpu.CompilerParams(
            dimension_semantics=("arbitrary",),
            vmem_limit_bytes=VMEM_BUDGET),
    )(of_ncl, wf, bf)


# --------------------------------------------------------------------------
# Kernel 2: per-sample global-translation bilinear sampling on the flattened
#           (C, H*Wpad) layout.  Spatial lives on the lane axis; the zero-pad
#           halo is realised with XLU rolls + precomputed 0/1 mask planes.
# --------------------------------------------------------------------------
def _bilinear_kernel(w_ref, mask_ref, feat_ref, out_ref, *, w, hwp):
    i = pl.program_id(0)                              # sample index
    wy_m, wx_m = w_ref[i, 0], w_ref[i, 1]
    wy_0, wx_0 = w_ref[i, 2], w_ref[i, 3]
    wy_p, wx_p = w_ref[i, 4], w_ref[i, 5]

    f = feat_ref[0]                                   # (cblk, hwp)
    m_l = mask_ref[0:1, :]                            # col != 0     (and not pad)
    m_r = mask_ref[1:2, :]                            # col != w-1
    m_u = mask_ref[2:3, :]                            # row != 0
    m_d = mask_ref[3:4, :]                            # row != h-1

    # horizontal taps x-1 / x / x+1 (rolls run on the XLU, masks zero the halo)
    left = m_l * pltpu.roll(f, 1, axis=1)             # f[y, x-1]
    right = m_r * pltpu.roll(f, hwp - 1, axis=1)      # f[y, x+1]
    tx = wx_m * left + wx_0 * f + wx_p * right

    # vertical taps y-1 / y / y+1
    up = m_u * pltpu.roll(tx, w, axis=1)              # tx[y-1, x]
    down = m_d * pltpu.roll(tx, hwp - w, axis=1)      # tx[y+1, x]
    out_ref[0] = wy_m * up + wy_0 * tx + wy_p * down


def _make_masks(h, w, hwp):
    """(8, hwp) 0/1 planes: [left-ok, right-ok, up-ok, down-ok, unused...]."""
    j = np.arange(hwp)
    col = j % w
    valid = j < h * w
    m = np.zeros((8, hwp), np.float32)
    m[0] = (valid & (col != 0)).astype(np.float32)
    m[1] = (valid & (col != w - 1)).astype(np.float32)
    m[2] = (valid & (j >= w)).astype(np.float32)
    m[3] = (valid & (j < (h - 1) * w)).astype(np.float32)
    return jnp.asarray(m)


def _choose_cblk(n, c, hwp):
    if c % LANE != 0:
        return c
    cands = [b for b in range(LANE, c + 1, LANE) if c % b == 0]
    if n == 1 and len(cands) > 1:
        cands = [b for b in cands if b < c]     # keep >=2 parallel steps (v7x, 2 TCs)
    # ~9x block bytes: double-buffered in+out plus roll/blend temporaries.
    fits = [b for b in cands if 9 * b * hwp * 4 <= VMEM_BUDGET]
    return max(fits) if fits else min(cands)


def _run_bilinear(wpack, masks, feat_ncl, w):
    n, c, hwp = feat_ncl.shape
    cblk = _choose_cblk(n, c, hwp)
    kernel = functools.partial(_bilinear_kernel, w=w, hwp=hwp)
    return pl.pallas_call(
        kernel,
        out_shape=jax.ShapeDtypeStruct((n, c, hwp), jnp.float32),
        grid_spec=pltpu.PrefetchScalarGridSpec(
            num_scalar_prefetch=0,
            grid=(n, c // cblk),
            in_specs=[
                pl.BlockSpec(memory_space=pltpu.MemorySpace.SMEM),       # (n,8) weights
                pl.BlockSpec((8, hwp), lambda i, g: (0, 0)),             # masks, resident
                pl.BlockSpec((1, cblk, hwp), lambda i, g: (i, g, 0)),    # feature
            ],
            out_specs=pl.BlockSpec((1, cblk, hwp), lambda i, g: (i, g, 0)),
        ),
        compiler_params=pltpu.CompilerParams(
            dimension_semantics=("parallel", "parallel"),
            vmem_limit_bytes=VMEM_BUDGET),
    )(wpack, masks, feat_ncl)


# --------------------------------------------------------------------------
# Parameter folding (hoisted out of the hot path) and full forward.
# --------------------------------------------------------------------------
def fold_params(params):
    """fc1/fc2/fc3 have no activations -> exact fold into one (256,2) affine."""
    wf = (params["w1"] @ params["w2"]) @ params["w3"]
    bf = (params["b1"] @ params["w2"] + params["b2"]) @ params["w3"] + params["b3"]
    return wf, bf


def offset_head_forward(feature_nchw, offset_feature_nchw, folded):
    wf, bf = folded
    n, c, h, w = feature_nchw.shape
    hw = h * w
    hwp = ((hw + LANE - 1) // LANE) * LANE          # lane-dense output width

    # NCHW viewed as (N, C, H*W): contiguous-minor reshape, no data movement.
    of_ncl = offset_feature_nchw.reshape(n, c, hw)
    wpack = _run_pool_mlp(of_ncl, wf, bf)           # (N, 8) packed weights

    feat_ncl = feature_nchw.reshape(n, c, hw)
    if hwp != hw:                                   # pad only when not lane-aligned
        feat_ncl = jnp.pad(feat_ncl, ((0, 0), (0, 0), (0, hwp - hw)))
    masks = _make_masks(h, w, hwp)                  # (8, hwp) resident boundary masks

    out_ncl = _run_bilinear(wpack, masks, feat_ncl, w)   # (N, C, hwp)
    if hwp != hw:
        out_ncl = out_ncl[:, :, :hw]
    return out_ncl.reshape(n, c, h, w)              # NCHW, like PyTorch


# --------------------------------------------------------------------------
# Deterministic parameter init (mirrors make_fc: kaiming_uniform_(a=1), bias=0)
# Weights stored as (in, out) so kernels compute x @ W.
# --------------------------------------------------------------------------
def init_params(key):
    def kaiming_uniform(k, fan_in, fan_out):
        bound = (6.0 / ((1.0 + 1.0) * fan_in)) ** 0.5   # a=1 -> sqrt(3/fan_in)
        return jax.random.uniform(k, (fan_in, fan_out), jnp.float32, -bound, bound)

    k1, k2, k3 = jax.random.split(key, 3)
    return {
        "w1": kaiming_uniform(k1, 256, 256), "b1": jnp.zeros((1, 256), jnp.float32),
        "w2": kaiming_uniform(k2, 256, 256), "b2": jnp.zeros((1, 256), jnp.float32),
        "w3": kaiming_uniform(k3, 256, 2),   "b3": jnp.zeros((1, 2), jnp.float32),
    }


# --------------------------------------------------------------------------
# Pure-JAX reference for validation (un-folded MLP, floor/frac 4-tap sampler)
# --------------------------------------------------------------------------
def reference_forward(feature_nchw, offset_feature_nchw, params):
    n, c, h, w = feature_nchw.shape
    x = offset_feature_nchw.mean(axis=(2, 3))                             # (N, C)
    x = x @ params["w1"] + params["b1"]
    x = x @ params["w2"] + params["b2"]
    offset = x @ params["w3"] + params["b3"]                              # (N, 2)

    d = jnp.clip(offset * TRANS_STD, -(PAD - 1.0), PAD - 1.0)
    k = jnp.floor(d).astype(jnp.int32)
    frac = d - jnp.floor(d)

    feat_nhwc = jnp.transpose(feature_nchw, (0, 2, 3, 1))
    feat_pad = jnp.pad(feat_nhwc, ((0, 0), (PAD, PAD), (PAD, PAD), (0, 0)))

    def one(fp, kk, ff):
        y0, x0 = kk[0] + PAD, kk[1] + PAD
        s00 = jax.lax.dynamic_slice(fp, (y0, x0, 0), (h, w, c))
        s01 = jax.lax.dynamic_slice(fp, (y0, x0 + 1, 0), (h, w, c))
        s10 = jax.lax.dynamic_slice(fp, (y0 + 1, x0, 0), (h, w, c))
        s11 = jax.lax.dynamic_slice(fp, (y0 + 1, x0 + 1, 0), (h, w, c))
        fy, fx = ff[0], ff[1]
        return ((1 - fy) * (1 - fx) * s00 + (1 - fy) * fx * s01
                + fy * (1 - fx) * s10 + fy * fx * s11)

    out = jax.vmap(one)(feat_pad, k, frac)                                # (N,H,W,C)
    return jnp.transpose(out, (0, 3, 1, 2))


if __name__ == "__main__":
    key = jax.random.PRNGKey(0)
    kp, kd = jax.random.split(key)
    params = init_params(kp)
    folded = fold_params(params)          # folded once, reused for every forward

    fwd = jax.jit(offset_head_forward)

    # channels must be 256 (fc1 expects 256 inputs); two spatial sizes:
    # 16x16 (lane-aligned) and 13x14 (exercises the lane-pad + crop path).
    for (N, C, H, W) in [(2, 256, 16, 16), (2, 256, 13, 14)]:
        kf, ko, kd = jax.random.split(kd, 3)
        feature = jax.random.normal(kf, (N, C, H, W), jnp.float32)
        offset_feature = jax.random.normal(ko, (N, C, H, W), jnp.float32)

        out = jax.block_until_ready(fwd(feature, offset_feature, folded))
        ref = reference_forward(feature, offset_feature, params)

        assert out.shape == (N, C, H, W)
        assert out.dtype == jnp.float32
        max_err = float(jnp.max(jnp.abs(out - ref)))
        assert jnp.allclose(out, ref, rtol=1e-3, atol=1e-3), (H, W, max_err)

    print("KERNEL_OK")
</pallas_src>

<mosaic_0001>
module attributes {stable_mosaic.version = 11 : i64} {
  func.func @_pool_mlp_kernel(%arg0: i32, %arg1: memref<2x256x256xf32, #tpu.memory_space<vmem>>, %arg2: memref<256x2xf32, #tpu.memory_space<vmem>>, %arg3: memref<1x2xf32, #tpu.memory_space<vmem>>, %arg4: memref<2x8xf32, #tpu.memory_space<vmem>>, %arg5: memref<2x256xf32, #tpu.memory_space<vmem>>) attributes {dimension_semantics = [#tpu.dimension_semantics<arbitrary>], iteration_bounds = array<i64: 1>, scalar_prefetch = 0 : i64, scratch_operands = 1 : i64, tpu.core_type = #tpu.core_type<tc>, window_params = [{transform_indices = @transform_0, window_bounds = array<i64: 2, 256, 256>}, {pipeline_mode = #tpu.pipeline_mode<synchronous>, transform_indices = @transform_1, window_bounds = array<i64: 256, 2>}, {pipeline_mode = #tpu.pipeline_mode<synchronous>, transform_indices = @transform_2, window_bounds = array<i64: 1, 2>}, {pipeline_mode = #tpu.pipeline_mode<synchronous>, transform_indices = @transform_3, window_bounds = array<i64: 2, 8>}]} {
    %c0_i32 = arith.constant 0 : i32
    %0 = arith.cmpi eq, %arg0, %c0_i32 : i32
    %1 = arith.extui %0 : i1 to i32
    %c0_i32_0 = arith.constant 0 : i32
    %2 = arith.cmpi ne, %1, %c0_i32_0 : i32
    scf.if %2 {
      %cst_9 = arith.constant 0.000000e+00 : f32
      %11 = vector.broadcast %cst_9 : f32 to vector<2x256xf32>
      %c0_10 = arith.constant 0 : index
      %c0_11 = arith.constant 0 : index
      %12 = vector.load %arg5[%c0_10, %c0_11] : memref<2x256xf32, #tpu.memory_space<vmem>>, vector<2x256xf32>
      tpu.vector_store %arg5[%c0_10, %c0_11], %11 {strides = array<i32>} : memref<2x256xf32, #tpu.memory_space<vmem>>, vector<2x256xf32>,
    } else {
    }
    %c0 = arith.constant 0 : index
    %c0_1 = arith.constant 0 : index
    %3 = vector.load %arg5[%c0, %c0_1] : memref<2x256xf32, #tpu.memory_space<vmem>>, vector<2x256xf32>
    %c0_2 = arith.constant 0 : index
    %c0_3 = arith.constant 0 : index
    %c0_4 = arith.constant 0 : index
    %4 = vector.load %arg1[%c0_2, %c0_3, %c0_4] : memref<2x256x256xf32, #tpu.memory_space<vmem>>, vector<2x256x256xf32>
    %cst = arith.constant dense<0.000000e+00> : vector<2x256xf32>
    %5 = vector.multi_reduction <add>, %4, %cst [2] : vector<2x256x256xf32> to vector<2x256xf32>
    %6 = arith.addf %3, %5 : vector<2x256xf32>
    %c0_5 = arith.constant 0 : index
    %c0_6 = arith.constant 0 : index
    %7 = vector.load %arg5[%c0_5, %c0_6] : memref<2x256xf32, #tpu.memory_space<vmem>>, vector<2x256xf32>
    tpu.vector_store %arg5[%c0_5, %c0_6], %6 {strides = array<i32>} : memref<2x256xf32, #tpu.memory_space<vmem>>, vector<2x256xf32>,
    %c0_i32_7 = arith.constant 0 : i32
    %8 = arith.cmpi eq, %arg0, %c0_i32_7 : i32
    %9 = arith.extui %8 : i1 to i32
    %c0_i32_8 = arith.constant 0 : i32
    %10 = arith.cmpi ne, %9, %c0_i32_8 : i32
    scf.if %10 {
      %c0_9 = arith.constant 0 : index
      %c0_10 = arith.constant 0 : index
      %11 = vector.load %arg5[%c0_9, %c0_10] : memref<2x256xf32, #tpu.memory_space<vmem>>, vector<2x256xf32>
      %cst_11 = arith.constant 3.906250e-03 : f32
      %12 = vector.broadcast %cst_11 : f32 to vector<2x256xf32>
      %13 = arith.mulf %11, %12 : vector<2x256xf32>
      %c0_12 = arith.constant 0 : index
      %c0_13 = arith.constant 0 : index
      %14 = vector.load %arg2[%c0_12, %c0_13] : memref<256x2xf32, #tpu.memory_space<vmem>>, vector<256x2xf32>
      %cst_14 = arith.constant dense<0.000000e+00> : vector<2x2xf32>
      %15 = tpu.matmul %13, %14, %cst_14 {dimension_numbers = #tpu.dot_dimension_numbers<[1], [0], [0], [1], [0, 0, 1, 1], [], []>} : vector<2x256xf32>, vector<256x2xf32>, vector<2x2xf32> -> vector<2x2xf32>
      %c0_15 = arith.constant 0 : index
      %c0_16 = arith.constant 0 : index
      %16 = vector.load %arg3[%c0_15, %c0_16] : memref<1x2xf32, #tpu.memory_space<vmem>>, vector<1x2xf32>
      %17 = vector.broadcast %16 : vector<1x2xf32> to vector<2x2xf32>
      %18 = arith.addf %15, %17 : vector<2x2xf32>
      %cst_17 = arith.constant 5.000000e-03 : f32
      %19 = vector.broadcast %cst_17 : f32 to vector<2x2xf32>
      %20 = arith.mulf %18, %19 : vector<2x2xf32>
      %cst_18 = arith.constant -1.000000e+00 : f32
      %cst_19 = arith.constant 1.000000e+00 : f32
      %21 = vector.broadcast %cst_18 : f32 to vector<2x2xf32>
      %22 = arith.maximumf %21, %20 : vector<2x2xf32>
      %23 = vector.broadcast %cst_19 : f32 to vector<2x2xf32>
      %24 = arith.minimumf %23, %22 : vector<2x2xf32>
      %cst_20 = arith.constant 0.000000e+00 : f32
      %25 = vector.broadcast %cst_20 : f32 to vector<2x2xf32>
      %26 = arith.subf %25, %24 : vector<2x2xf32>
      %cst_21 = arith.constant 0.000000e+00 : f32
      %27 = vector.broadcast %cst_21 : f32 to vector<2x2xf32>
      %28 = arith.maximumf %26, %27 : vector<2x2xf32>
      %29 = math.absf %24 : vector<2x2xf32>
      %cst_22 = arith.constant 1.000000e+00 : f32
      %30 = vector.broadcast %cst_22 : f32 to vector<2x2xf32>
      %31 = arith.subf %30, %29 : vector<2x2xf32>
      %cst_23 = arith.constant 0.000000e+00 : f32
      %32 = vector.broadcast %cst_23 : f32 to vector<2x2xf32>
      %33 = arith.maximumf %24, %32 : vector<2x2xf32>
      %cst_24 = arith.constant 0.000000e+00 : f32
      %34 = vector.broadcast %cst_24 : f32 to vector<2x2xf32>
      %35 = tpu.concatenate %28, %31, %33, %34 in 1 : vector<2x2xf32>, vector<2x2xf32>, vector<2x2xf32>, vector<2x2xf32> -> vector<2x8xf32>
      %c0_25 = arith.constant 0 : index
      %c0_26 = arith.constant 0 : index
      %36 = vector.load %arg4[%c0_25, %c0_26] : memref<2x8xf32, #tpu.memory_space<vmem>>, vector<2x8xf32>
      tpu.vector_store %arg4[%c0_25, %c0_26], %35 {strides = array<i32>} : memref<2x8xf32, #tpu.memory_space<vmem>>, vector<2x8xf32>,
    } else {
    }
    return
  }
  func.func @transform_0(%arg0: i32) -> (i32, i32, i32) {
    %c0_i32 = arith.constant 0 : i32
    %c0_i32_0 = arith.constant 0 : i32
    %c0_i32_1 = arith.constant 0 : i32
    return %c0_i32, %c0_i32_0, %arg0 : i32, i32, i32
  }
  func.func @transform_1(%arg0: i32) -> (i32, i32) {
    %c0_i32 = arith.constant 0 : i32
    %c0_i32_0 = arith.constant 0 : i32
    %c0_i32_1 = arith.constant 0 : i32
    return %c0_i32, %c0_i32_0 : i32, i32
  }
  func.func @transform_2(%arg0: i32) -> (i32, i32) {
    %c0_i32 = arith.constant 0 : i32
    %c0_i32_0 = arith.constant 0 : i32
    %c0_i32_1 = arith.constant 0 : i32
    return %c0_i32, %c0_i32_0 : i32, i32
  }
  func.func @transform_3(%arg0: i32) -> (i32, i32) {
    %c0_i32 = arith.constant 0 : i32
    %c0_i32_0 = arith.constant 0 : i32
    %c0_i32_1 = arith.constant 0 : i32
    return %c0_i32, %c0_i32_0 : i32, i32
  }
}

module attributes {stable_mosaic.version = 11 : i64} {
  func.func @_bilinear_kernel(%arg0: i32, %arg1: i32, %arg2: memref<2x8xf32, #tpu.memory_space<smem>>, %arg3: memref<8x256xf32, #tpu.memory_space<vmem>>, %arg4: memref<1x256x256xf32, #tpu.memory_space<vmem>>, %arg5: memref<1x256x256xf32, #tpu.memory_space<vmem>>) attributes {dimension_semantics = [#tpu.dimension_semantics<parallel>, #tpu.dimension_semantics<parallel>], iteration_bounds = array<i64: 2, 1>, scalar_prefetch = 0 : i64, scratch_operands = 0 : i64, tpu.core_type = #tpu.core_type<tc>, window_params = [{transform_indices = @transform_0, window_bounds = array<i64: 2, 8>}, {pipeline_mode = #tpu.pipeline_mode<synchronous>, transform_indices = @transform_1, window_bounds = array<i64: 8, 256>}, {transform_indices = @transform_2, window_bounds = array<i64: 1, 256, 256>}, {transform_indices = @transform_3, window_bounds = array<i64: 1, 256, 256>}]} {
    %0 = arith.index_cast %arg0 : i32 to index
    %c0 = arith.constant 0 : index
    %1 = memref.load %arg2[%0, %c0] : memref<2x8xf32, #tpu.memory_space<smem>>
    %2 = arith.index_cast %arg0 : i32 to index
    %c1 = arith.constant 1 : index
    %3 = memref.load %arg2[%2, %c1] : memref<2x8xf32, #tpu.memory_space<smem>>
    %4 = arith.index_cast %arg0 : i32 to index
    %c2 = arith.constant 2 : index
    %5 = memref.load %arg2[%4, %c2] : memref<2x8xf32, #tpu.memory_space<smem>>
    %6 = arith.index_cast %arg0 : i32 to index
    %c3 = arith.constant 3 : index
    %7 = memref.load %arg2[%6, %c3] : memref<2x8xf32, #tpu.memory_space<smem>>
    %8 = arith.index_cast %arg0 : i32 to index
    %c4 = arith.constant 4 : index
    %9 = memref.load %arg2[%8, %c4] : memref<2x8xf32, #tpu.memory_space<smem>>
    %10 = arith.index_cast %arg0 : i32 to index
    %c5 = arith.constant 5 : index
    %11 = memref.load %arg2[%10, %c5] : memref<2x8xf32, #tpu.memory_space<smem>>
    %c0_0 = arith.constant 0 : index
    %c0_1 = arith.constant 0 : index
    %c0_2 = arith.constant 0 : index
    %12 = vector.load %arg4[%c0_0, %c0_1, %c0_2] : memref<1x256x256xf32, #tpu.memory_space<vmem>>, vector<1x256x256xf32>
    %13 = vector.shape_cast %12 : vector<1x256x256xf32> to vector<256x256xf32>
    %c0_3 = arith.constant 0 : index
    %c0_4 = arith.constant 0 : index
    %14 = vector.load %arg3[%c0_3, %c0_4] : memref<8x256xf32, #tpu.memory_space<vmem>>, vector<1x256xf32>
    %c1_5 = arith.constant 1 : index
    %c0_6 = arith.constant 0 : index
    %15 = vector.load %arg3[%c1_5, %c0_6] : memref<8x256xf32, #tpu.memory_space<vmem>>, vector<1x256xf32>
    %c2_7 = arith.constant 2 : index
    %c0_8 = arith.constant 0 : index
    %16 = vector.load %arg3[%c2_7, %c0_8] : memref<8x256xf32, #tpu.memory_space<vmem>>, vector<1x256xf32>
    %c3_9 = arith.constant 3 : index
    %c0_10 = arith.constant 0 : index
    %17 = vector.load %arg3[%c3_9, %c0_10] : memref<8x256xf32, #tpu.memory_space<vmem>>, vector<1x256xf32>
    %c1_i32 = arith.constant 1 : i32
    %18 = tpu.dynamic_rotate %13 by %c1_i32 dim 1 : vector<256x256xf32>, i32 -> vector<256x256xf32>
    %19 = vector.broadcast %14 : vector<1x256xf32> to vector<256x256xf32>
    %20 = arith.mulf %19, %18 : vector<256x256xf32>
    %c255_i32 = arith.constant 255 : i32
    %21 = tpu.dynamic_rotate %13 by %c255_i32 dim 1 : vector<256x256xf32>, i32 -> vector<256x256xf32>
    %22 = vector.broadcast %15 : vector<1x256xf32> to vector<256x256xf32>
    %23 = arith.mulf %22, %21 : vector<256x256xf32>
    %24 = vector.broadcast %3 : f32 to vector<256x256xf32>
    %25 = arith.mulf %24, %20 : vector<256x256xf32>
    %26 = vector.broadcast %7 : f32 to vector<256x256xf32>
    %27 = arith.mulf %26, %13 : vector<256x256xf32>
    %28 = arith.addf %25, %27 : vector<256x256xf32>
    %29 = vector.broadcast %11 : f32 to vector<256x256xf32>
    %30 = arith.mulf %29, %23 : vector<256x256xf32>
    %31 = arith.addf %28, %30 : vector<256x256xf32>
    %c16_i32 = arith.constant 16 : i32
    %32 = tpu.dynamic_rotate %31 by %c16_i32 dim 1 : vector<256x256xf32>, i32 -> vector<256x256xf32>
    %33 = vector.broadcast %16 : vector<1x256xf32> to vector<256x256xf32>
    %34 = arith.mulf %33, %32 : vector<256x256xf32>
    %c240_i32 = arith.constant 240 : i32
    %35 = tpu.dynamic_rotate %31 by %c240_i32 dim 1 : vector<256x256xf32>, i32 -> vector<256x256xf32>
    %36 = vector.broadcast %17 : vector<1x256xf32> to vector<256x256xf32>
    %37 = arith.mulf %36, %35 : vector<256x256xf32>
    %38 = vector.broadcast %1 : f32 to vector<256x256xf32>
    %39 = arith.mulf %38, %34 : vector<256x256xf32>
    %40 = vector.broadcast %5 : f32 to vector<256x256xf32>
    %41 = arith.mulf %40, %31 : vector<256x256xf32>
    %42 = arith.addf %39, %41 : vector<256x256xf32>
    %43 = vector.broadcast %9 : f32 to vector<256x256xf32>
    %44 = arith.mulf %43, %37 : vector<256x256xf32>
    %45 = arith.addf %42, %44 : vector<256x256xf32>
    %c0_11 = arith.constant 0 : index
    %c0_12 = arith.constant 0 : index
    %c0_13 = arith.constant 0 : index
    %46 = vector.load %arg5[%c0_11, %c0_12, %c0_13] : memref<1x256x256xf32, #tpu.memory_space<vmem>>, vector<1x256x256xf32>
    %47 = vector.shape_cast %46 : vector<1x256x256xf32> to vector<256x256xf32>
    %48 = vector.shape_cast %45 : vector<256x256xf32> to vector<1x256x256xf32>
    tpu.vector_store %arg5[%c0_11, %c0_12, %c0_13], %48 {strides = array<i32>} : memref<1x256x256xf32, #tpu.memory_space<vmem>>, vector<1x256x256xf32>,
    return
  }
  func.func @transform_0(%arg0: i32, %arg1: i32) -> (i32, i32) {
    %c0_i32 = arith.constant 0 : i32
    %c0_i32_0 = arith.constant 0 : i32
    %c0_i32_1 = arith.constant 0 : i32
    return %c0_i32, %c0_i32_0 : i32, i32
  }
  func.func @transform_1(%arg0: i32, %arg1: i32) -> (i32, i32) {
    %c0_i32 = arith.constant 0 : i32
    %c0_i32_0 = arith.constant 0 : i32
    %c0_i32_1 = arith.constant 0 : i32
    return %c0_i32, %c0_i32_0 : i32, i32
  }
  func.func @transform_2(%arg0: i32, %arg1: i32) -> (i32, i32, i32) {
    %c0_i32 = arith.constant 0 : i32
    %c0_i32_0 = arith.constant 0 : i32
    return %arg0, %arg1, %c0_i32 : i32, i32, i32
  }
  func.func @transform_3(%arg0: i32, %arg1: i32) -> (i32, i32, i32) {
    %c0_i32 = arith.constant 0 : i32
    %c0_i32_0 = arith.constant 0 : i32
    return %arg0, %arg1, %c0_i32 : i32, i32, i32
  }
}

</mosaic_0001>

<llo_original>
// kernel: offset_head_forward.2
$region0: #{offset_head_forward.2}
  #allocation0 [shape = 'u32[]', space=smem, size = 0x4, offset = 0x4, fixed_abs, tag = 'smem constant byte address 0x4 - core index']
  #allocation1 [shape = 'u32[144,128]{1,0:T(1,128)}', space=vmem, size = 0x12000, scoped, tag = 'internal scratch']
  #allocation2 [shape = 'f32[2,256]{1,0:T(2,128)}', space=vmem, size = 0x800, scoped, tag = 'scratch operand']
  %s0 = inlined_call_operand.vmem [shape: f32[2,256,256], index: 0, kind: input, shape index: {}]
  %s1 = inlined_call_operand.vmem [shape: f32[256,2], index: 1, kind: input, shape index: {}]
  %s2 = inlined_call_operand.vmem [shape: f32[1,2], index: 2, kind: input, shape index: {}]
  %s3 = inlined_call_operand.vmem [shape: f32[2,8], index: 3, kind: output, shape index: {}]
  %s4 = sld [smem:[#allocation0]]
  $region30: #{offset_head_forward.2} parent=0
    _
  %s6 = ssub.s32 1, %s4
  %s7 = scalar_select 0, %s6, %s4
  // Predicated region
  $region2: #{offset_head_forward.2} parent=0 // pred_check
    _
  $region3: #{offset_head_forward.2} parent=0 // pred_check_branch
    %9 = sbr.rel (0) target = $region5
  $region4: #{offset_head_forward.2} parent=0 // pred_region
    _
  $region5: #{offset_head_forward.2} parent=0 // pred_fallthru
    _
  // Predicated region
  $region6: #{offset_head_forward.2} parent=0 // pred_check
    _
  $region7: #{offset_head_forward.2} parent=0 // pred_check_branch
    %11 = sbr.rel (0) target = $region9
  $region8: #{offset_head_forward.2} parent=0 // pred_region
    _
  $region9: #{offset_head_forward.2} parent=0 // pred_fallthru
    _
  // Predicated region
  $region10: #{offset_head_forward.2} parent=0 // pred_check
    _
  $region11: #{offset_head_forward.2} parent=0 // pred_check_branch
    %13 = sbr.rel (0) target = $region13
  $region12: #{offset_head_forward.2} parent=0 // pred_region
    _
  $region13: #{offset_head_forward.2} parent=0 // pred_fallthru
    _
  %p14 = scmp.eq.s32.totalorder 0, 0
  // Predicated region
  $region14: #{offset_head_forward.2} parent=0 // pred_check
    %p15 = pneg %p14
  $region15: #{offset_head_forward.2} parent=0 // pred_check_branch
    %17 = sbr.rel (%p15) target = $region17
  $region16: #{offset_head_forward.2} parent=0 // pred_region
    %18 = vst [vmem:[#allocation2] sm:$0xf] 0.0
  $region17: #{offset_head_forward.2} parent=0 // pred_fallthru
    _
  %v19 = vld [vmem:[#allocation2] sm:$0xf]
  %v20 = vld [vmem:[%s0] sm:$0xff]
  %v21 = vld [vmem:[%s0 + $0x8] sm:$0xff]
  %v22 = vld [vmem:[%s0 + $0x10] sm:$0xff]
  %v23 = vld [vmem:[%s0 + $0x18] sm:$0xff]
  %v24 = vld [vmem:[%s0 + $0x20] sm:$0xff]
  %v25 = vld [vmem:[%s0 + $0x28] sm:$0xff]
  %v26 = vld [vmem:[%s0 + $0x30] sm:$0xff]
  %v27 = vld [vmem:[%s0 + $0x38] sm:$0xff]
  %v28 = vld [vmem:[%s0 + $0x40] sm:$0xff]
  %v29 = vld [vmem:[%s0 + $0x48] sm:$0xff]
  %v30 = vld [vmem:[%s0 + $0x50] sm:$0xff]
  %v31 = vld [vmem:[%s0 + $0x58] sm:$0xff]
  %v32 = vld [vmem:[%s0 + $0x60] sm:$0xff]
  %v33 = vld [vmem:[%s0 + $0x68] sm:$0xff]
  %v34 = vld [vmem:[%s0 + $0x70] sm:$0xff]
  %v35 = vld [vmem:[%s0 + $0x78] sm:$0xff]
  %v36 = vld [vmem:[%s0 + $0x80] sm:$0xff]
  %v37 = vld [vmem:[%s0 + $0x88] sm:$0xff]
  %v38 = vld [vmem:[%s0 + $0x90] sm:$0xff]
  %v39 = vld [vmem:[%s0 + $0x98] sm:$0xff]
  %v40 = vld [vmem:[%s0 + $0xa0] sm:$0xff]
  %v41 = vld [vmem:[%s0 + $0xa8] sm:$0xff]
  %v42 = vld [vmem:[%s0 + $0xb0] sm:$0xff]
  %v43 = vld [vmem:[%s0 + $0xb8] sm:$0xff]
  %v44 = vld [vmem:[%s0 + $0xc0] sm:$0xff]
  %v45 = vld [vmem:[%s0 + $0xc8] sm:$0xff]
  %v46 = vld [vmem:[%s0 + $0xd0] sm:$0xff]
  %v47 = vld [vmem:[%s0 + $0xd8] sm:$0xff]
  %v48 = vld [vmem:[%s0 + $0xe0] sm:$0xff]
  %v49 = vld [vmem:[%s0 + $0xe8] sm:$0xff]
  %v50 = vld [vmem:[%s0 + $0xf0] sm:$0xff]
  %v51 = vld [vmem:[%s0 + $0xf8] sm:$0xff]
  %v52 = vld [vmem:[%s0 + $0x100] sm:$0xff]
  %v53 = vld [vmem:[%s0 + $0x108] sm:$0xff]
  %v54 = vld [vmem:[%s0 + $0x110] sm:$0xff]
  %v55 = vld [vmem:[%s0 + $0x118] sm:$0xff]
  %v56 = vld [vmem:[%s0 + $0x120] sm:$0xff]
  %v57 = vld [vmem:[%s0 + $0x128] sm:$0xff]
  %v58 = vld [vmem:[%s0 + $0x130] sm:$0xff]
  %v59 = vld [vmem:[%s0 + $0x138] sm:$0xff]
  %v60 = vld [vmem:[%s0 + $0x140] sm:$0xff]
  %v61 = vld [vmem:[%s0 + $0x148] sm:$0xff]
  %v62 = vld [vmem:[%s0 + $0x150] sm:$0xff]
  %v63 = vld [vmem:[%s0 + $0x158] sm:$0xff]
  %v64 = vld [vmem:[%s0 + $0x160] sm:$0xff]
  %v65 = vld [vmem:[%s0 + $0x168] sm:$0xff]
  %v66 = vld [vmem:[%s0 + $0x170] sm:$0xff]
  %v67 = vld [vmem:[%s0 + $0x178] sm:$0xff]
  %v68 = vld [vmem:[%s0 + $0x180] sm:$0xff]
  %v69 = vld [vmem:[%s0 + $0x188] sm:$0xff]
  %v70 = vld [vmem:[%s0 + $0x190] sm:$0xff]
  %v71 = vld [vmem:[%s0 + $0x198] sm:$0xff]
  %v72 = vld [vmem:[%s0 + $0x1a0] sm:$0xff]
  %v73 = vld [vmem:[%s0 + $0x1a8] sm:$0xff]
  %v74 = vld [vmem:[%s0 + $0x1b0] sm:$0xff]
  %v75 = vld [vmem:[%s0 + $0x1b8] sm:$0xff]
  %v76 = vld [vmem:[%s0 + $0x1c0] sm:$0xff]
  %v77 = vld [vmem:[%s0 + $0x1c8] sm:$0xff]
  %v78 = vld [vmem:[%s0 + $0x1d0] sm:$0xff]
  %v79 = vld [vmem:[%s0 + $0x1d8] sm:$0xff]
  %v80 = vld [vmem:[%s0 + $0x1e0] sm:$0xff]
  %v81 = vld [vmem:[%s0 + $0x1e8] sm:$0xff]
  %v82 = vld [vmem:[%s0 + $0x1f0] sm:$0xff]
  %v83 = vld [vmem:[%s0 + $0x1f8] sm:$0xff]
  %v84 = vld [vmem:[%s0 + $0x200] sm:$0xff]
  %v85 = vld [vmem:[%s0 + $0x208] sm:$0xff]
  %v86 = vld [vmem:[%s0 + $0x210] sm:$0xff]
  %v87 = vld [vmem:[%s0 + $0x218] sm:$0xff]
  %v88 = vld [vmem:[%s0 + $0x220] sm:$0xff]
  %v89 = vld [vmem:[%s0 + $0x228] sm:$0xff]
  %v90 = vld [vmem:[%s0 + $0x230] sm:$0xff]
  %v91 = vld [vmem:[%s0 + $0x238] sm:$0xff]
  %v92 = vld [vmem:[%s0 + $0x240] sm:$0xff]
  %v93 = vld [vmem:[%s0 + $0x248] sm:$0xff]
  %v94 = vld [vmem:[%s0 + $0x250] sm:$0xff]
  %v95 = vld [vmem:[%s0 + $0x258] sm:$0xff]
  %v96 = vld [vmem:[%s0 + $0x260] sm:$0xff]
  %v97 = vld [vmem:[%s0 + $0x268] sm:$0xff]
  %v98 = vld [vmem:[%s0 + $0x270] sm:$0xff]
  %v99 = vld [vmem:[%s0 + $0x278] sm:$0xff]
  %v100 = vld [vmem:[%s0 + $0x280] sm:$0xff]
  %v101 = vld [vmem:[%s0 + $0x288] sm:$0xff]
  %v102 = vld [vmem:[%s0 + $0x290] sm:$0xff]
  %v103 = vld [vmem:[%s0 + $0x298] sm:$0xff]
  %v104 = vld [vmem:[%s0 + $0x2a0] sm:$0xff]
  %v105 = vld [vmem:[%s0 + $0x2a8] sm:$0xff]
  %v106 = vld [vmem:[%s0 + $0x2b0] sm:$0xff]
  %v107 = vld [vmem:[%s0 + $0x2b8] sm:$0xff]
  %v108 = vld [vmem:[%s0 + $0x2c0] sm:$0xff]
  %v109 = vld [vmem:[%s0 + $0x2c8] sm:$0xff]
  %v110 = vld [vmem:[%s0 + $0x2d0] sm:$0xff]
  %v111 = vld [vmem:[%s0 + $0x2d8] sm:$0xff]
  %v112 = vld [vmem:[%s0 + $0x2e0] sm:$0xff]
  %v113 = vld [vmem:[%s0 + $0x2e8] sm:$0xff]
  %v114 = vld [vmem:[%s0 + $0x2f0] sm:$0xff]
  %v115 = vld [vmem:[%s0 + $0x2f8] sm:$0xff]
  %v116 = vld [vmem:[%s0 + $0x300] sm:$0xff]
  %v117 = vld [vmem:[%s0 + $0x308] sm:$0xff]
  %v118 = vld [vmem:[%s0 + $0x310] sm:$0xff]
  %v119 = vld [vmem:[%s0 + $0x318] sm:$0xff]
  %v120 = vld [vmem:[%s0 + $0x320] sm:$0xff]
  %v121 = vld [vmem:[%s0 + $0x328] sm:$0xff]
  %v122 = vld [vmem:[%s0 + $0x330] sm:$0xff]
  %v123 = vld [vmem:[%s0 + $0x338] sm:$0xff]
  %v124 = vld [vmem:[%s0 + $0x340] sm:$0xff]
  %v125 = vld [vmem:[%s0 + $0x348] sm:$0xff]
  %v126 = vld [vmem:[%s0 + $0x350] sm:$0xff]
  %v127 = vld [vmem:[%s0 + $0x358] sm:$0xff]
  %v128 = vld [vmem:[%s0 + $0x360] sm:$0xff]
  %v129 = vld [vmem:[%s0 + $0x368] sm:$0xff]
  %v130 = vld [vmem:[%s0 + $0x370] sm:$0xff]
  %v131 = vld [vmem:[%s0 + $0x378] sm:$0xff]
  %v132 = vld [vmem:[%s0 + $0x380] sm:$0xff]
  %v133 = vld [vmem:[%s0 + $0x388] sm:$0xff]
  %v134 = vld [vmem:[%s0 + $0x390] sm:$0xff]
  %v135 = vld [vmem:[%s0 + $0x398] sm:$0xff]
  %v136 = vld [vmem:[%s0 + $0x3a0] sm:$0xff]
  %v137 = vld [vmem:[%s0 + $0x3a8] sm:$0xff]
  %v138 = vld [vmem:[%s0 + $0x3b0] sm:$0xff]
  %v139 = vld [vmem:[%s0 + $0x3b8] sm:$0xff]
  %v140 = vld [vmem:[%s0 + $0x3c0] sm:$0xff]
  %v141 = vld [vmem:[%s0 + $0x3c8] sm:$0xff]
  %v142 = vld [vmem:[%s0 + $0x3d0] sm:$0xff]
  %v143 = vld [vmem:[%s0 + $0x3d8] sm:$0xff]
  %v144 = vld [vmem:[%s0 + $0x3e0] sm:$0xff]
  %v145 = vld [vmem:[%s0 + $0x3e8] sm:$0xff]
  %v146 = vld [vmem:[%s0 + $0x3f0] sm:$0xff]
  %v147 = vld [vmem:[%s0 + $0x3f8] sm:$0xff]
  %v148 = vadd.f32 %v20, %v21
  %149 = vadd.xlane.f32.xlu0 %v148
  %v150 = vpop.xlane.xlu0 %149
  %v151 = vadd.f32 %v22, %v23
  %152 = vadd.xlane.f32.xlu0 %v151
  %v153 = vpop.xlane.xlu0 %152
  %v154 = vadd.f32 %v24, %v25
  %155 = vadd.xlane.f32.xlu0 %v154
  %v156 = vpop.xlane.xlu0 %155
  %v157 = vadd.f32 %v26, %v27
  %158 = vadd.xlane.f32.xlu0 %v157
  %v159 = vpop.xlane.xlu0 %158
  %v160 = vadd.f32 %v28, %v29
  %161 = vadd.xlane.f32.xlu0 %v160
  %v162 = vpop.xlane.xlu0 %161
  %v163 = vadd.f32 %v30, %v31
  %164 = vadd.xlane.f32.xlu0 %v163
  %v165 = vpop.xlane.xlu0 %164
  %v166 = vadd.f32 %v32, %v33
  %167 = vadd.xlane.f32.xlu0 %v166
  %v168 = vpop.xlane.xlu0 %167
  %v169 = vadd.f32 %v34, %v35
  %170 = vadd.xlane.f32.xlu0 %v169
  %v171 = vpop.xlane.xlu0 %170
  %v172 = vadd.f32 %v36, %v37
  %173 = vadd.xlane.f32.xlu0 %v172
  %v174 = vpop.xlane.xlu0 %173
  %v175 = vadd.f32 %v38, %v39
  %176 = vadd.xlane.f32.xlu0 %v175
  %v177 = vpop.xlane.xlu0 %176
  %v178 = vadd.f32 %v40, %v41
  %179 = vadd.xlane.f32.xlu0 %v178
  %v180 = vpop.xlane.xlu0 %179
  %v181 = vadd.f32 %v42, %v43
  %182 = vadd.xlane.f32.xlu0 %v181
  %v183 = vpop.xlane.xlu0 %182
  %v184 = vadd.f32 %v44, %v45
  %185 = vadd.xlane.f32.xlu0 %v184
  %v186 = vpop.xlane.xlu0 %185
  %v187 = vadd.f32 %v46, %v47
  %188 = vadd.xlane.f32.xlu0 %v187
  %v189 = vpop.xlane.xlu0 %188
  %v190 = vadd.f32 %v48, %v49
  %191 = vadd.xlane.f32.xlu0 %v190
  %v192 = vpop.xlane.xlu0 %191
  %v193 = vadd.f32 %v50, %v51
  %194 = vadd.xlane.f32.xlu0 %v193
  %v195 = vpop.xlane.xlu0 %194
  %v196 = vadd.f32 %v52, %v53
  %197 = vadd.xlane.f32.xlu0 %v196
  %v198 = vpop.xlane.xlu0 %197
  %v199 = vadd.f32 %v54, %v55
  %200 = vadd.xlane.f32.xlu0 %v199
  %v201 = vpop.xlane.xlu0 %200
  %v202 = vadd.f32 %v56, %v57
  %203 = vadd.xlane.f32.xlu0 %v202
  %v204 = vpop.xlane.xlu0 %203
  %v205 = vadd.f32 %v58, %v59
  %206 = vadd.xlane.f32.xlu0 %v205
  %v207 = vpop.xlane.xlu0 %206
  %v208 = vadd.f32 %v60, %v61
  %209 = vadd.xlane.f32.xlu0 %v208
  %v210 = vpop.xlane.xlu0 %209
  %v211 = vadd.f32 %v62, %v63
  %212 = vadd.xlane.f32.xlu0 %v211
  %v213 = vpop.xlane.xlu0 %212
  %v214 = vadd.f32 %v64, %v65
  %215 = vadd.xlane.f32.xlu0 %v214
  %v216 = vpop.xlane.xlu0 %215
  %v217 = vadd.f32 %v66, %v67
  %218 = vadd.xlane.f32.xlu0 %v217
  %v219 = vpop.xlane.xlu0 %218
  %v220 = vadd.f32 %v68, %v69
  %221 = vadd.xlane.f32.xlu0 %v220
  %v222 = vpop.xlane.xlu0 %221
  %v223 = vadd.f32 %v70, %v71
  %224 = vadd.xlane.f32.xlu0 %v223
  %v225 = vpop.xlane.xlu0 %224
  %v226 = vadd.f32 %v72, %v73
  %227 = vadd.xlane.f32.xlu0 %v226
  %v228 = vpop.xlane.xlu0 %227
  %v229 = vadd.f32 %v74, %v75
  %230 = vadd.xlane.f32.xlu0 %v229
  %v231 = vpop.xlane.xlu0 %230
  %v232 = vadd.f32 %v76, %v77
  %233 = vadd.xlane.f32.xlu0 %v232
  %v234 = vpop.xlane.xlu0 %233
  %v235 = vadd.f32 %v78, %v79
  %236 = vadd.xlane.f32.xlu0 %v235
  %v237 = vpop.xlane.xlu0 %236
  %v238 = vadd.f32 %v80, %v81
  %239 = vadd.xlane.f32.xlu0 %v238
  %v240 = vpop.xlane.xlu0 %239
  %v241 = vadd.f32 %v82, %v83
  %242 = vadd.xlane.f32.xlu0 %v241
  %v243 = vpop.xlane.xlu0 %242
  %v244 = vadd.f32 %v84, %v85
  %245 = vadd.xlane.f32.xlu0 %v244
  %v246 = vpop.xlane.xlu0 %245
  %v247 = vadd.f32 %v86, %v87
  %248 = vadd.xlane.f32.xlu0 %v247
  %v249 = vpop.xlane.xlu0 %248
  %v250 = vadd.f32 %v88, %v89
  %251 = vadd.xlane.f32.xlu0 %v250
  %v252 = vpop.xlane.xlu0 %251
  %v253 = vadd.f32 %v90, %v91
  %254 = vadd.xlane.f32.xlu0 %v253
  %v255 = vpop.xlane.xlu0 %254
  %v256 = vadd.f32 %v92, %v93
  %257 = vadd.xlane.f32.xlu0 %v256
  %v258 = vpop.xlane.xlu0 %257
  %v259 = vadd.f32 %v94, %v95
  %260 = vadd.xlane.f32.xlu0 %v259
  %v261 = vpop.xlane.xlu0 %260
  %v262 = vadd.f32 %v96, %v97
  %263 = vadd.xlane.f32.xlu0 %v262
  %v264 = vpop.xlane.xlu0 %263
  %v265 = vadd.f32 %v98, %v99
  %266 = vadd.xlane.f32.xlu0 %v265
  %v267 = vpop.xlane.xlu0 %266
  %v268 = vadd.f32 %v100, %v101
  %269 = vadd.xlane.f32.xlu0 %v268
  %v270 = vpop.xlane.xlu0 %269
  %v271 = vadd.f32 %v102, %v103
  %272 = vadd.xlane.f32.xlu0 %v271
  %v273 = vpop.xlane.xlu0 %272
  %v274 = vadd.f32 %v104, %v105
  %275 = vadd.xlane.f32.xlu0 %v274
  %v276 = vpop.xlane.xlu0 %275
  %v277 = vadd.f32 %v106, %v107
  %278 = vadd.xlane.f32.xlu0 %v277
  %v279 = vpop.xlane.xlu0 %278
  %v280 = vadd.f32 %v108, %v109
  %281 = vadd.xlane.f32.xlu0 %v280
  %v282 = vpop.xlane.xlu0 %281
  %v283 = vadd.f32 %v110, %v111
  %284 = vadd.xlane.f32.xlu0 %v283
  %v285 = vpop.xlane.xlu0 %284
  %v286 = vadd.f32 %v112, %v113
  %287 = vadd.xlane.f32.xlu0 %v286
  %v288 = vpop.xlane.xlu0 %287
  %v289 = vadd.f32 %v114, %v115
  %290 = vadd.xlane.f32.xlu0 %v289
  %v291 = vpop.xlane.xlu0 %290
  %v292 = vadd.f32 %v116, %v117
  %293 = vadd.xlane.f32.xlu0 %v292
  %v294 = vpop.xlane.xlu0 %293
  %v295 = vadd.f32 %v118, %v119
  %296 = vadd.xlane.f32.xlu0 %v295
  %v297 = vpop.xlane.xlu0 %296
  %v298 = vadd.f32 %v120, %v121
  %299 = vadd.xlane.f32.xlu0 %v298
  %v300 = vpop.xlane.xlu0 %299
  %v301 = vadd.f32 %v122, %v123
  %302 = vadd.xlane.f32.xlu0 %v301
  %v303 = vpop.xlane.xlu0 %302
  %v304 = vadd.f32 %v124, %v125
  %305 = vadd.xlane.f32.xlu0 %v304
  %v306 = vpop.xlane.xlu0 %305
  %v307 = vadd.f32 %v126, %v127
  %308 = vadd.xlane.f32.xlu0 %v307
  %v309 = vpop.xlane.xlu0 %308
  %v310 = vadd.f32 %v128, %v129
  %311 = vadd.xlane.f32.xlu0 %v310
  %v312 = vpop.xlane.xlu0 %311
  %v313 = vadd.f32 %v130, %v131
  %314 = vadd.xlane.f32.xlu0 %v313
  %v315 = vpop.xlane.xlu0 %314
  %v316 = vadd.f32 %v132, %v133
  %317 = vadd.xlane.f32.xlu0 %v316
  %v318 = vpop.xlane.xlu0 %317
  %v319 = vadd.f32 %v134, %v135
  %320 = vadd.xlane.f32.xlu0 %v319
  %v321 = vpop.xlane.xlu0 %320
  %v322 = vadd.f32 %v136, %v137
  %323 = vadd.xlane.f32.xlu0 %v322
  %v324 = vpop.xlane.xlu0 %323
  %v325 = vadd.f32 %v138, %v139
  %326 = vadd.xlane.f32.xlu0 %v325
  %v327 = vpop.xlane.xlu0 %326
  %v328 = vadd.f32 %v140, %v141
  %329 = vadd.xlane.f32.xlu0 %v328
  %v330 = vpop.xlane.xlu0 %329
  %v331 = vadd.f32 %v142, %v143
  %332 = vadd.xlane.f32.xlu0 %v331
  %v333 = vpop.xlane.xlu0 %332
  %v334 = vadd.f32 %v144, %v145
  %335 = vadd.xlane.f32.xlu0 %v334
  %v336 = vpop.xlane.xlu0 %335
  %v337 = vadd.f32 %v146, %v147
  %338 = vadd.xlane.f32.xlu0 %v337
  %v339 = vpop.xlane.xlu0 %338
  %v405 = vunpack.c.l.s4 269488144
  %v406 = vunpack.c.0.s8 %v405
  %v407 = vlaneseq
  %v408 = vshrl.u32 %v407, 7
  %v409 = vsub.s32 %v406, %v408
  %v410 = vrot.slane %v150, %v409
  %v412 = vunpack.c.l.s4 842150450
  %v413 = vunpack.c.0.s8 %v412
  %v414 = vlaneseq
  %v415 = vshrl.u32 %v414, 7
  %v416 = vsub.s32 %v413, %v415
  %v417 = vrot.slane %v150, %v416
  %v419 = vunpack.c.l.s4 1414812756
  %v420 = vunpack.c.0.s8 %v419
  %v421 = vlaneseq
  %v422 = vshrl.u32 %v421, 7
  %v423 = vsub.s32 %v420, %v422
  %v424 = vrot.slane %v150, %v423
  %v426 = vunpack.c.l.s4 1987475062
  %v427 = vunpack.c.0.s8 %v426
  %v428 = vlaneseq
  %v429 = vshrl.u32 %v428, 7
  %v430 = vsub.s32 %v427, %v429
  %v431 = vrot.slane %v150, %v430
  %v433 = vunpack.c.l.s4 269488144
  %v434 = vunpack.c.0.s8 %v433
  %v435 = vlaneseq
  %v436 = vshrl.u32 %v435, 7
  %v437 = vsub.s32 %v434, %v436
  %v438 = vrot.slane %v153, %v437
  %v440 = vunpack.c.l.s4 842150450
  %v441 = vunpack.c.0.s8 %v440
  %v442 = vlaneseq
  %v443 = vshrl.u32 %v442, 7
  %v444 = vsub.s32 %v441, %v443
  %v445 = vrot.slane %v153, %v444
  %v447 = vunpack.c.l.s4 1414812756
  %v448 = vunpack.c.0.s8 %v447
  %v449 = vlaneseq
  %v450 = vshrl.u32 %v449, 7
  %v451 = vsub.s32 %v448, %v450
  %v452 = vrot.slane %v153, %v451
  %v454 = vunpack.c.l.s4 1987475062
  %v455 = vunpack.c.0.s8 %v454
  %v456 = vlaneseq
  %v457 = vshrl.u32 %v456, 7
  %v458 = vsub.s32 %v455, %v457
  %v459 = vrot.slane %v153, %v458
  %v461 = vunpack.c.l.s4 269488144
  %v462 = vunpack.c.0.s8 %v461
  %v463 = vlaneseq
  %v464 = vshrl.u32 %v463, 7
  %v465 = vsub.s32 %v462, %v464
  %v466 = vrot.slane %v156, %v465
  %v468 = vunpack.c.l.s4 842150450
  %v469 = vunpack.c.0.s8 %v468
  %v470 = vlaneseq
  %v471 = vshrl.u32 %v470, 7
  %v472 = vsub.s32 %v469, %v471
  %v473 = vrot.slane %v156, %v472
  %v475 = vunpack.c.l.s4 1414812756
  %v476 = vunpack.c.0.s8 %v475
  %v477 = vlaneseq
  %v478 = vshrl.u32 %v477, 7
  %v479 = vsub.s32 %v476, %v478
  %v480 = vrot.slane %v156, %v479
  %v482 = vunpack.c.l.s4 1987475062
  %v483 = vunpack.c.0.s8 %v482
  %v484 = vlaneseq
  %v485 = vshrl.u32 %v484, 7
  %v486 = vsub.s32 %v483, %v485
  %v487 = vrot.slane %v156, %v486
  %v489 = vunpack.c.l.s4 269488144
  %v490 = vunpack.c.0.s8 %v489
  %v491 = vlaneseq
  %v492 = vshrl.u32 %v491, 7
  %v493 = vsub.s32 %v490, %v492
  %v494 = vrot.slane %v159, %v493
  %v496 = vunpack.c.l.s4 842150450
  %v497 = vunpack.c.0.s8 %v496
  %v498 = vlaneseq
  %v499 = vshrl.u32 %v498, 7
  %v500 = vsub.s32 %v497, %v499
  %v501 = vrot.slane %v159, %v500
  %v503 = vunpack.c.l.s4 1414812756
  %v504 = vunpack.c.0.s8 %v503
  %v505 = vlaneseq
  %v506 = vshrl.u32 %v505, 7
  %v507 = vsub.s32 %v504, %v506
  %v508 = vrot.slane %v159, %v507
  %v510 = vunpack.c.l.s4 1987475062
  %v511 = vunpack.c.0.s8 %v510
  %v512 = vlaneseq
  %v513 = vshrl.u32 %v512, 7
  %v514 = vsub.s32 %v511, %v513
  %v515 = vrot.slane %v159, %v514
  %v517 = vunpack.c.l.s4 269488144
  %v518 = vunpack.c.0.s8 %v517
  %v519 = vlaneseq
  %v520 = vshrl.u32 %v519, 7
  %v521 = vsub.s32 %v518, %v520
  %v522 = vrot.slane %v162, %v521
  %v524 = vunpack.c.l.s4 842150450
  %v525 = vunpack.c.0.s8 %v524
  %v526 = vlaneseq
  %v527 = vshrl.u32 %v526, 7
  %v528 = vsub.s32 %v525, %v527
  %v529 = vrot.slane %v162, %v528
  %v531 = vunpack.c.l.s4 1414812756
  %v532 = vunpack.c.0.s8 %v531
  %v533 = vlaneseq
  %v534 = vshrl.u32 %v533, 7
  %v535 = vsub.s32 %v532, %v534
  %v536 = vrot.slane %v162, %v535
  %v538 = vunpack.c.l.s4 1987475062
  %v539 = vunpack.c.0.s8 %v538
  %v540 = vlaneseq
  %v541 = vshrl.u32 %v540, 7
  %v542 = vsub.s32 %v539, %v541
  %v543 = vrot.slane %v162, %v542
  %v545 = vunpack.c.l.s4 269488144
  %v546 = vunpack.c.0.s8 %v545
  %v547 = vlaneseq
  %v548 = vshrl.u32 %v547, 7
  %v549 = vsub.s32 %v546, %v548
  %v550 = vrot.slane %v165, %v549
  %v552 = vunpack.c.l.s4 842150450
  %v553 = vunpack.c.0.s8 %v552
  %v554 = vlaneseq
  %v555 = vshrl.u32 %v554, 7
  %v556 = vsub.s32 %v553, %v555
  %v557 = vrot.slane %v165, %v556
  %v559 = vunpack.c.l.s4 1414812756
  %v560 = vunpack.c.0.s8 %v559
  %v561 = vlaneseq
  %v562 = vshrl.u32 %v561, 7
  %v563 = vsub.s32 %v560, %v562
  %v564 = vrot.slane %v165, %v563
  %v566 = vunpack.c.l.s4 1987475062
  %v567 = vunpack.c.0.s8 %v566
  %v568 = vlaneseq
  %v569 = vshrl.u32 %v568, 7
  %v570 = vsub.s32 %v567, %v569
  %v571 = vrot.slane %v165, %v570
  %v573 = vunpack.c.l.s4 269488144
  %v574 = vunpack.c.0.s8 %v573
  %v575 = vlaneseq
  %v576 = vshrl.u32 %v575, 7
  %v577 = vsub.s32 %v574, %v576
  %v578 = vrot.slane %v168, %v577
  %v580 = vunpack.c.l.s4 842150450
  %v581 = vunpack.c.0.s8 %v580
  %v582 = vlaneseq
  %v583 = vshrl.u32 %v582, 7
  %v584 = vsub.s32 %v581, %v583
  %v585 = vrot.slane %v168, %v584
  %v587 = vunpack.c.l.s4 1414812756
  %v588 = vunpack.c.0.s8 %v587
  %v589 = vlaneseq
  %v590 = vshrl.u32 %v589, 7
  %v591 = vsub.s32 %v588, %v590
  %v592 = vrot.slane %v168, %v591
  %v594 = vunpack.c.l.s4 1987475062
  %v595 = vunpack.c.0.s8 %v594
  %v596 = vlaneseq
  %v597 = vshrl.u32 %v596, 7
  %v598 = vsub.s32 %v595, %v597
  %v599 = vrot.slane %v168, %v598
  %v601 = vunpack.c.l.s4 269488144
  %v602 = vunpack.c.0.s8 %v601
  %v603 = vlaneseq
  %v604 = vshrl.u32 %v603, 7
  %v605 = vsub.s32 %v602, %v604
  %v606 = vrot.slane %v171, %v605
  %v608 = vunpack.c.l.s4 842150450
  %v609 = vunpack.c.0.s8 %v608
  %v610 = vlaneseq
  %v611 = vshrl.u32 %v610, 7
  %v612 = vsub.s32 %v609, %v611
  %v613 = vrot.slane %v171, %v612
  %v615 = vunpack.c.l.s4 1414812756
  %v616 = vunpack.c.0.s8 %v615
  %v617 = vlaneseq
  %v618 = vshrl.u32 %v617, 7
  %v619 = vsub.s32 %v616, %v618
  %v620 = vrot.slane %v171, %v619
  %v622 = vunpack.c.l.s4 1987475062
  %v623 = vunpack.c.0.s8 %v622
  %v624 = vlaneseq
  %v625 = vshrl.u32 %v624, 7
  %v626 = vsub.s32 %v623, %v625
  %v627 = vrot.slane %v171, %v626
  %v629 = vunpack.c.l.s4 269488144
  %v630 = vunpack.c.0.s8 %v629
  %v631 = vlaneseq
  %v632 = vshrl.u32 %v631, 7
  %v633 = vsub.s32 %v630, %v632
  %v634 = vrot.slane %v174, %v633
  %v636 = vunpack.c.l.s4 842150450
  %v637 = vunpack.c.0.s8 %v636
  %v638 = vlaneseq
  %v639 = vshrl.u32 %v638, 7
  %v640 = vsub.s32 %v637, %v639
  %v641 = vrot.slane %v174, %v640
  %v643 = vunpack.c.l.s4 1414812756
  %v644 = vunpack.c.0.s8 %v643
  %v645 = vlaneseq
  %v646 = vshrl.u32 %v645, 7
  %v647 = vsub.s32 %v644, %v646
  %v648 = vrot.slane %v174, %v647
  %v650 = vunpack.c.l.s4 1987475062
  %v651 = vunpack.c.0.s8 %v650
  %v652 = vlaneseq
  %v653 = vshrl.u32 %v652, 7
  %v654 = vsub.s32 %v651, %v653
  %v655 = vrot.slane %v174, %v654
  %v657 = vunpack.c.l.s4 269488144
  %v658 = vunpack.c.0.s8 %v657
  %v659 = vlaneseq
  %v660 = vshrl.u32 %v659, 7
  %v661 = vsub.s32 %v658, %v660
  %v662 = vrot.slane %v177, %v661
  %v664 = vunpack.c.l.s4 842150450
  %v665 = vunpack.c.0.s8 %v664
  %v666 = vlaneseq
  %v667 = vshrl.u32 %v666, 7
  %v668 = vsub.s32 %v665, %v667
  %v669 = vrot.slane %v177, %v668
  %v671 = vunpack.c.l.s4 1414812756
  %v672 = vunpack.c.0.s8 %v671
  %v673 = vlaneseq
  %v674 = vshrl.u32 %v673, 7
  %v675 = vsub.s32 %v672, %v674
  %v676 = vrot.slane %v177, %v675
  %v678 = vunpack.c.l.s4 1987475062
  %v679 = vunpack.c.0.s8 %v678
  %v680 = vlaneseq
  %v681 = vshrl.u32 %v680, 7
  %v682 = vsub.s32 %v679, %v681
  %v683 = vrot.slane %v177, %v682
  %v685 = vunpack.c.l.s4 269488144
  %v686 = vunpack.c.0.s8 %v685
  %v687 = vlaneseq
  %v688 = vshrl.u32 %v687, 7
  %v689 = vsub.s32 %v686, %v688
  %v690 = vrot.slane %v180, %v689
  %v692 = vunpack.c.l.s4 842150450
  %v693 = vunpack.c.0.s8 %v692
  %v694 = vlaneseq
  %v695 = vshrl.u32 %v694, 7
  %v696 = vsub.s32 %v693, %v695
  %v697 = vrot.slane %v180, %v696
  %v699 = vunpack.c.l.s4 1414812756
  %v700 = vunpack.c.0.s8 %v699
  %v701 = vlaneseq
  %v702 = vshrl.u32 %v701, 7
  %v703 = vsub.s32 %v700, %v702
  %v704 = vrot.slane %v180, %v703
  %v706 = vunpack.c.l.s4 1987475062
  %v707 = vunpack.c.0.s8 %v706
  %v708 = vlaneseq
  %v709 = vshrl.u32 %v708, 7
  %v710 = vsub.s32 %v707, %v709
  %v711 = vrot.slane %v180, %v710
  %v713 = vunpack.c.l.s4 269488144
  %v714 = vunpack.c.0.s8 %v713
  %v715 = vlaneseq
  %v716 = vshrl.u32 %v715, 7
  %v717 = vsub.s32 %v714, %v716
  %v718 = vrot.slane %v183, %v717
  %v720 = vunpack.c.l.s4 842150450
  %v721 = vunpack.c.0.s8 %v720
  %v722 = vlaneseq
  %v723 = vshrl.u32 %v722, 7
  %v724 = vsub.s32 %v721, %v723
  %v725 = vrot.slane %v183, %v724
  %v727 = vunpack.c.l.s4 1414812756
  %v728 = vunpack.c.0.s8 %v727
  %v729 = vlaneseq
  %v730 = vshrl.u32 %v729, 7
  %v731 = vsub.s32 %v728, %v730
  %v732 = vrot.slane %v183, %v731
  %v734 = vunpack.c.l.s4 1987475062
  %v735 = vunpack.c.0.s8 %v734
  %v736 = vlaneseq
  %v737 = vshrl.u32 %v736, 7
  %v738 = vsub.s32 %v735, %v737
  %v739 = vrot.slane %v183, %v738
  %v741 = vunpack.c.l.s4 269488144
  %v742 = vunpack.c.0.s8 %v741
  %v743 = vlaneseq
  %v744 = vshrl.u32 %v743, 7
  %v745 = vsub.s32 %v742, %v744
  %v746 = vrot.slane %v186, %v745
  %v748 = vunpack.c.l.s4 842150450
  %v749 = vunpack.c.0.s8 %v748
  %v750 = vlaneseq
  %v751 = vshrl.u32 %v750, 7
  %v752 = vsub.s32 %v749, %v751
  %v753 = vrot.slane %v186, %v752
  %v755 = vunpack.c.l.s4 1414812756
  %v756 = vunpack.c.0.s8 %v755
  %v757 = vlaneseq
  %v758 = vshrl.u32 %v757, 7
  %v759 = vsub.s32 %v756, %v758
  %v760 = vrot.slane %v186, %v759
  %v762 = vunpack.c.l.s4 1987475062
  %v763 = vunpack.c.0.s8 %v762
  %v764 = vlaneseq
  %v765 = vshrl.u32 %v764, 7
  %v766 = vsub.s32 %v763, %v765
  %v767 = vrot.slane %v186, %v766
  %v769 = vunpack.c.l.s4 269488144
  %v770 = vunpack.c.0.s8 %v769
  %v771 = vlaneseq
  %v772 = vshrl.u32 %v771, 7
  %v773 = vsub.s32 %v770, %v772
  %v774 = vrot.slane %v189, %v773
  %v776 = vunpack.c.l.s4 842150450
  %v777 = vunpack.c.0.s8 %v776
  %v778 = vlaneseq
  %v779 = vshrl.u32 %v778, 7
  %v780 = vsub.s32 %v777, %v779
  %v781 = vrot.slane %v189, %v780
  %v783 = vunpack.c.l.s4 1414812756
  %v784 = vunpack.c.0.s8 %v783
  %v785 = vlaneseq
  %v786 = vshrl.u32 %v785, 7
  %v787 = vsub.s32 %v784, %v786
  %v788 = vrot.slane %v189, %v787
  %v790 = vunpack.c.l.s4 1987475062
  %v791 = vunpack.c.0.s8 %v790
  %v792 = vlaneseq
  %v793 = vshrl.u32 %v792, 7
  %v794 = vsub.s32 %v791, %v793
  %v795 = vrot.slane %v189, %v794
  %v797 = vunpack.c.l.s4 269488144
  %v798 = vunpack.c.0.s8 %v797
  %v799 = vlaneseq
  %v800 = vshrl.u32 %v799, 7
  %v801 = vsub.s32 %v798, %v800
  %v802 = vrot.slane %v192, %v801
  %v804 = vunpack.c.l.s4 842150450
  %v805 = vunpack.c.0.s8 %v804
  %v806 = vlaneseq
  %v807 = vshrl.u32 %v806, 7
  %v808 = vsub.s32 %v805, %v807
  %v809 = vrot.slane %v192, %v808
  %v811 = vunpack.c.l.s4 1414812756
  %v812 = vunpack.c.0.s8 %v811
  %v813 = vlaneseq
  %v814 = vshrl.u32 %v813, 7
  %v815 = vsub.s32 %v812, %v814
  %v816 = vrot.slane %v192, %v815
  %v818 = vunpack.c.l.s4 1987475062
  %v819 = vunpack.c.0.s8 %v818
  %v820 = vlaneseq
  %v821 = vshrl.u32 %v820, 7
  %v822 = vsub.s32 %v819, %v821
  %v823 = vrot.slane %v192, %v822
  %v825 = vunpack.c.l.s4 269488144
  %v826 = vunpack.c.0.s8 %v825
  %v827 = vlaneseq
  %v828 = vshrl.u32 %v827, 7
  %v829 = vsub.s32 %v826, %v828
  %v830 = vrot.slane %v195, %v829
  %v832 = vunpack.c.l.s4 842150450
  %v833 = vunpack.c.0.s8 %v832
  %v834 = vlaneseq
  %v835 = vshrl.u32 %v834, 7
  %v836 = vsub.s32 %v833, %v835
  %v837 = vrot.slane %v195, %v836
  %v839 = vunpack.c.l.s4 1414812756
  %v840 = vunpack.c.0.s8 %v839
  %v841 = vlaneseq
  %v842 = vshrl.u32 %v841, 7
  %v843 = vsub.s32 %v840, %v842
  %v844 = vrot.slane %v195, %v843
  %v846 = vunpack.c.l.s4 1987475062
  %v847 = vunpack.c.0.s8 %v846
  %v848 = vlaneseq
  %v849 = vshrl.u32 %v848, 7
  %v850 = vsub.s32 %v847, %v849
  %v851 = vrot.slane %v195, %v850
  %v853 = vunpack.c.l.s4 269488144
  %v854 = vunpack.c.0.s8 %v853
  %v855 = vlaneseq
  %v856 = vshrl.u32 %v855, 7
  %v857 = vsub.s32 %v854, %v856
  %v858 = vrot.slane %v198, %v857
  %v860 = vunpack.c.l.s4 842150450
  %v861 = vunpack.c.0.s8 %v860
  %v862 = vlaneseq
  %v863 = vshrl.u32 %v862, 7
  %v864 = vsub.s32 %v861, %v863
  %v865 = vrot.slane %v198, %v864
  %v867 = vunpack.c.l.s4 1414812756
  %v868 = vunpack.c.0.s8 %v867
  %v869 = vlaneseq
  %v870 = vshrl.u32 %v869, 7
  %v871 = vsub.s32 %v868, %v870
  %v872 = vrot.slane %v198, %v871
  %v874 = vunpack.c.l.s4 1987475062
  %v875 = vunpack.c.0.s8 %v874
  %v876 = vlaneseq
  %v877 = vshrl.u32 %v876, 7
  %v878 = vsub.s32 %v875, %v877
  %v879 = vrot.slane %v198, %v878
  %v881 = vunpack.c.l.s4 269488144
  %v882 = vunpack.c.0.s8 %v881
  %v883 = vlaneseq
  %v884 = vshrl.u32 %v883, 7
  %v885 = vsub.s32 %v882, %v884
  %v886 = vrot.slane %v201, %v885
  %v888 = vunpack.c.l.s4 842150450
  %v889 = vunpack.c.0.s8 %v888
  %v890 = vlaneseq
  %v891 = vshrl.u32 %v890, 7
  %v892 = vsub.s32 %v889, %v891
  %v893 = vrot.slane %v201, %v892
  %v895 = vunpack.c.l.s4 1414812756
  %v896 = vunpack.c.0.s8 %v895
  %v897 = vlaneseq
  %v898 = vshrl.u32 %v897, 7
  %v899 = vsub.s32 %v896, %v898
  %v900 = vrot.slane %v201, %v899
  %v902 = vunpack.c.l.s4 1987475062
  %v903 = vunpack.c.0.s8 %v902
  %v904 = vlaneseq
  %v905 = vshrl.u32 %v904, 7
  %v906 = vsub.s32 %v903, %v905
  %v907 = vrot.slane %v201, %v906
  %v909 = vunpack.c.l.s4 269488144
  %v910 = vunpack.c.0.s8 %v909
  %v911 = vlaneseq
  %v912 = vshrl.u32 %v911, 7
  %v913 = vsub.s32 %v910, %v912
  %v914 = vrot.slane %v204, %v913
  %v916 = vunpack.c.l.s4 842150450
  %v917 = vunpack.c.0.s8 %v916
  %v918 = vlaneseq
  %v919 = vshrl.u32 %v918, 7
  %v920 = vsub.s32 %v917, %v919
  %v921 = vrot.slane %v204, %v920
  %v923 = vunpack.c.l.s4 1414812756
  %v924 = vunpack.c.0.s8 %v923
  %v925 = vlaneseq
  %v926 = vshrl.u32 %v925, 7
  %v927 = vsub.s32 %v924, %v926
  %v928 = vrot.slane %v204, %v927
  %v930 = vunpack.c.l.s4 1987475062
  %v931 = vunpack.c.0.s8 %v930
  %v932 = vlaneseq
  %v933 = vshrl.u32 %v932, 7
  %v934 = vsub.s32 %v931, %v933
  %v935 = vrot.slane %v204, %v934
  %v937 = vunpack.c.l.s4 269488144
  %v938 = vunpack.c.0.s8 %v937
  %v939 = vlaneseq
  %v940 = vshrl.u32 %v939, 7
  %v941 = vsub.s32 %v938, %v940
  %v942 = vrot.slane %v207, %v941
  %v944 = vunpack.c.l.s4 842150450
  %v945 = vunpack.c.0.s8 %v944
  %v946 = vlaneseq
  %v947 = vshrl.u32 %v946, 7
  %v948 = vsub.s32 %v945, %v947
  %v949 = vrot.slane %v207, %v948
  %v951 = vunpack.c.l.s4 1414812756
  %v952 = vunpack.c.0.s8 %v951
  %v953 = vlaneseq
  %v954 = vshrl.u32 %v953, 7
  %v955 = vsub.s32 %v952, %v954
  %v956 = vrot.slane %v207, %v955
  %v958 = vunpack.c.l.s4 1987475062
  %v959 = vunpack.c.0.s8 %v958
  %v960 = vlaneseq
  %v961 = vshrl.u32 %v960, 7
  %v962 = vsub.s32 %v959, %v961
  %v963 = vrot.slane %v207, %v962
  %v965 = vunpack.c.l.s4 269488144
  %v966 = vunpack.c.0.s8 %v965
  %v967 = vlaneseq
  %v968 = vshrl.u32 %v967, 7
  %v969 = vsub.s32 %v966, %v968
  %v970 = vrot.slane %v210, %v969
  %v972 = vunpack.c.l.s4 842150450
  %v973 = vunpack.c.0.s8 %v972
  %v974 = vlaneseq
  %v975 = vshrl.u32 %v974, 7
  %v976 = vsub.s32 %v973, %v975
  %v977 = vrot.slane %v210, %v976
  %v979 = vunpack.c.l.s4 1414812756
  %v980 = vunpack.c.0.s8 %v979
  %v981 = vlaneseq
  %v982 = vshrl.u32 %v981, 7
  %v983 = vsub.s32 %v980, %v982
  %v984 = vrot.slane %v210, %v983
  %v986 = vunpack.c.l.s4 1987475062
  %v987 = vunpack.c.0.s8 %v986
  %v988 = vlaneseq
  %v989 = vshrl.u32 %v988, 7
  %v990 = vsub.s32 %v987, %v989
  %v991 = vrot.slane %v210, %v990
  %v993 = vunpack.c.l.s4 269488144
  %v994 = vunpack.c.0.s8 %v993
  %v995 = vlaneseq
  %v996 = vshrl.u32 %v995, 7
  %v997 = vsub.s32 %v994, %v996
  %v998 = vrot.slane %v213, %v997
  %v1000 = vunpack.c.l.s4 842150450
  %v1001 = vunpack.c.0.s8 %v1000
  %v1002 = vlaneseq
  %v1003 = vshrl.u32 %v1002, 7
  %v1004 = vsub.s32 %v1001, %v1003
  %v1005 = vrot.slane %v213, %v1004
  %v1007 = vunpack.c.l.s4 1414812756
  %v1008 = vunpack.c.0.s8 %v1007
  %v1009 = vlaneseq
  %v1010 = vshrl.u32 %v1009, 7
  %v1011 = vsub.s32 %v1008, %v1010
  %v1012 = vrot.slane %v213, %v1011
  %v1014 = vunpack.c.l.s4 1987475062
  %v1015 = vunpack.c.0.s8 %v1014
  %v1016 = vlaneseq
  %v1017 = vshrl.u32 %v1016, 7
  %v1018 = vsub.s32 %v1015, %v1017
  %v1019 = vrot.slane %v213, %v1018
  %v1021 = vunpack.c.l.s4 269488144
  %v1022 = vunpack.c.0.s8 %v1021
  %v1023 = vlaneseq
  %v1024 = vshrl.u32 %v1023, 7
  %v1025 = vsub.s32 %v1022, %v1024
  %v1026 = vrot.slane %v216, %v1025
  %v1028 = vunpack.c.l.s4 842150450
  %v1029 = vunpack.c.0.s8 %v1028
  %v1030 = vlaneseq
  %v1031 = vshrl.u32 %v1030, 7
  %v1032 = vsub.s32 %v1029, %v1031
  %v1033 = vrot.slane %v216, %v1032
  %v1035 = vunpack.c.l.s4 1414812756
  %v1036 = vunpack.c.0.s8 %v1035
  %v1037 = vlaneseq
  %v1038 = vshrl.u32 %v1037, 7
  %v1039 = vsub.s32 %v1036, %v1038
  %v1040 = vrot.slane %v216, %v1039
  %v1042 = vunpack.c.l.s4 1987475062
  %v1043 = vunpack.c.0.s8 %v1042
  %v1044 = vlaneseq
  %v1045 = vshrl.u32 %v1044, 7
  %v1046 = vsub.s32 %v1043, %v1045
  %v1047 = vrot.slane %v216, %v1046
  %v1049 = vunpack.c.l.s4 269488144
  %v1050 = vunpack.c.0.s8 %v1049
  %v1051 = vlaneseq
  %v1052 = vshrl.u32 %v1051, 7
  %v1053 = vsub.s32 %v1050, %v1052
  %v1054 = vrot.slane %v219, %v1053
  %v1056 = vunpack.c.l.s4 842150450
  %v1057 = vunpack.c.0.s8 %v1056
  %v1058 = vlaneseq
  %v1059 = vshrl.u32 %v1058, 7
  %v1060 = vsub.s32 %v1057, %v1059
  %v1061 = vrot.slane %v219, %v1060
  %v1063 = vunpack.c.l.s4 1414812756
  %v1064 = vunpack.c.0.s8 %v1063
  %v1065 = vlaneseq
  %v1066 = vshrl.u32 %v1065, 7
  %v1067 = vsub.s32 %v1064, %v1066
  %v1068 = vrot.slane %v219, %v1067
  %v1070 = vunpack.c.l.s4 1987475062
  %v1071 = vunpack.c.0.s8 %v1070
  %v1072 = vlaneseq
  %v1073 = vshrl.u32 %v1072, 7
  %v1074 = vsub.s32 %v1071, %v1073
  %v1075 = vrot.slane %v219, %v1074
  %v1077 = vunpack.c.l.s4 269488144
  %v1078 = vunpack.c.0.s8 %v1077
  %v1079 = vlaneseq
  %v1080 = vshrl.u32 %v1079, 7
  %v1081 = vsub.s32 %v1078, %v1080
  %v1082 = vrot.slane %v222, %v1081
  %v1084 = vunpack.c.l.s4 842150450
  %v1085 = vunpack.c.0.s8 %v1084
  %v1086 = vlaneseq
  %v1087 = vshrl.u32 %v1086, 7
  %v1088 = vsub.s32 %v1085, %v1087
  %v1089 = vrot.slane %v222, %v1088
  %v1091 = vunpack.c.l.s4 1414812756
  %v1092 = vunpack.c.0.s8 %v1091
  %v1093 = vlaneseq
  %v1094 = vshrl.u32 %v1093, 7
  %v1095 = vsub.s32 %v1092, %v1094
  %v1096 = vrot.slane %v222, %v1095
  %v1098 = vunpack.c.l.s4 1987475062
  %v1099 = vunpack.c.0.s8 %v1098
  %v1100 = vlaneseq
  %v1101 = vshrl.u32 %v1100, 7
  %v1102 = vsub.s32 %v1099, %v1101
  %v1103 = vrot.slane %v222, %v1102
  %v1105 = vunpack.c.l.s4 269488144
  %v1106 = vunpack.c.0.s8 %v1105
  %v1107 = vlaneseq
  %v1108 = vshrl.u32 %v1107, 7
  %v1109 = vsub.s32 %v1106, %v1108
  %v1110 = vrot.slane %v225, %v1109
  %v1112 = vunpack.c.l.s4 842150450
  %v1113 = vunpack.c.0.s8 %v1112
  %v1114 = vlaneseq
  %v1115 = vshrl.u32 %v1114, 7
  %v1116 = vsub.s32 %v1113, %v1115
  %v1117 = vrot.slane %v225, %v1116
  %v1119 = vunpack.c.l.s4 1414812756
  %v1120 = vunpack.c.0.s8 %v1119
  %v1121 = vlaneseq
  %v1122 = vshrl.u32 %v1121, 7
  %v1123 = vsub.s32 %v1120, %v1122
  %v1124 = vrot.slane %v225, %v1123
  %v1126 = vunpack.c.l.s4 1987475062
  %v1127 = vunpack.c.0.s8 %v1126
  %v1128 = vlaneseq
  %v1129 = vshrl.u32 %v1128, 7
  %v1130 = vsub.s32 %v1127, %v1129
  %v1131 = vrot.slane %v225, %v1130
  %v1133 = vunpack.c.l.s4 269488144
  %v1134 = vunpack.c.0.s8 %v1133
  %v1135 = vlaneseq
  %v1136 = vshrl.u32 %v1135, 7
  %v1137 = vsub.s32 %v1134, %v1136
  %v1138 = vrot.slane %v228, %v1137
  %v1140 = vunpack.c.l.s4 842150450
  %v1141 = vunpack.c.0.s8 %v1140
  %v1142 = vlaneseq
  %v1143 = vshrl.u32 %v1142, 7
  %v1144 = vsub.s32 %v1141, %v1143
  %v1145 = vrot.slane %v228, %v1144
  %v1147 = vunpack.c.l.s4 1414812756
  %v1148 = vunpack.c.0.s8 %v1147
  %v1149 = vlaneseq
  %v1150 = vshrl.u32 %v1149, 7
  %v1151 = vsub.s32 %v1148, %v1150
  %v1152 = vrot.slane %v228, %v1151
  %v1154 = vunpack.c.l.s4 1987475062
  %v1155 = vunpack.c.0.s8 %v1154
  %v1156 = vlaneseq
  %v1157 = vshrl.u32 %v1156, 7
  %v1158 = vsub.s32 %v1155, %v1157
  %v1159 = vrot.slane %v228, %v1158
  %v1161 = vunpack.c.l.s4 269488144
  %v1162 = vunpack.c.0.s8 %v1161
  %v1163 = vlaneseq
  %v1164 = vshrl.u32 %v1163, 7
  %v1165 = vsub.s32 %v1162, %v1164
  %v1166 = vrot.slane %v231, %v1165
  %v1168 = vunpack.c.l.s4 842150450
  %v1169 = vunpack.c.0.s8 %v1168
  %v1170 = vlaneseq
  %v1171 = vshrl.u32 %v1170, 7
  %v1172 = vsub.s32 %v1169, %v1171
  %v1173 = vrot.slane %v231, %v1172
  %v1175 = vunpack.c.l.s4 1414812756
  %v1176 = vunpack.c.0.s8 %v1175
  %v1177 = vlaneseq
  %v1178 = vshrl.u32 %v1177, 7
  %v1179 = vsub.s32 %v1176, %v1178
  %v1180 = vrot.slane %v231, %v1179
  %v1182 = vunpack.c.l.s4 1987475062
  %v1183 = vunpack.c.0.s8 %v1182
  %v1184 = vlaneseq
  %v1185 = vshrl.u32 %v1184, 7
  %v1186 = vsub.s32 %v1183, %v1185
  %v1187 = vrot.slane %v231, %v1186
  %v1189 = vunpack.c.l.s4 269488144
  %v1190 = vunpack.c.0.s8 %v1189
  %v1191 = vlaneseq
  %v1192 = vshrl.u32 %v1191, 7
  %v1193 = vsub.s32 %v1190, %v1192
  %v1194 = vrot.slane %v234, %v1193
  %v1196 = vunpack.c.l.s4 842150450
  %v1197 = vunpack.c.0.s8 %v1196
  %v1198 = vlaneseq
  %v1199 = vshrl.u32 %v1198, 7
  %v1200 = vsub.s32 %v1197, %v1199
  %v1201 = vrot.slane %v234, %v1200
  %v1203 = vunpack.c.l.s4 1414812756
  %v1204 = vunpack.c.0.s8 %v1203
  %v1205 = vlaneseq
  %v1206 = vshrl.u32 %v1205, 7
  %v1207 = vsub.s32 %v1204, %v1206
  %v1208 = vrot.slane %v234, %v1207
  %v1210 = vunpack.c.l.s4 1987475062
  %v1211 = vunpack.c.0.s8 %v1210
  %v1212 = vlaneseq
  %v1213 = vshrl.u32 %v1212, 7
  %v1214 = vsub.s32 %v1211, %v1213
  %v1215 = vrot.slane %v234, %v1214
  %v1217 = vunpack.c.l.s4 269488144
  %v1218 = vunpack.c.0.s8 %v1217
  %v1219 = vlaneseq
  %v1220 = vshrl.u32 %v1219, 7
  %v1221 = vsub.s32 %v1218, %v1220
  %v1222 = vrot.slane %v237, %v1221
  %v1224 = vunpack.c.l.s4 842150450
  %v1225 = vunpack.c.0.s8 %v1224
  %v1226 = vlaneseq
  %v1227 = vshrl.u32 %v1226, 7
  %v1228 = vsub.s32 %v1225, %v1227
  %v1229 = vrot.slane %v237, %v1228
  %v1231 = vunpack.c.l.s4 1414812756
  %v1232 = vunpack.c.0.s8 %v1231
  %v1233 = vlaneseq
  %v1234 = vshrl.u32 %v1233, 7
  %v1235 = vsub.s32 %v1232, %v1234
  %v1236 = vrot.slane %v237, %v1235
  %v1238 = vunpack.c.l.s4 1987475062
  %v1239 = vunpack.c.0.s8 %v1238
  %v1240 = vlaneseq
  %v1241 = vshrl.u32 %v1240, 7
  %v1242 = vsub.s32 %v1239, %v1241
  %v1243 = vrot.slane %v237, %v1242
  %v1245 = vunpack.c.l.s4 269488144
  %v1246 = vunpack.c.0.s8 %v1245
  %v1247 = vlaneseq
  %v1248 = vshrl.u32 %v1247, 7
  %v1249 = vsub.s32 %v1246, %v1248
  %v1250 = vrot.slane %v240, %v1249
  %v1252 = vunpack.c.l.s4 842150450
  %v1253 = vunpack.c.0.s8 %v1252
  %v1254 = vlaneseq
  %v1255 = vshrl.u32 %v1254, 7
  %v1256 = vsub.s32 %v1253, %v1255
  %v1257 = vrot.slane %v240, %v1256
  %v1259 = vunpack.c.l.s4 1414812756
  %v1260 = vunpack.c.0.s8 %v1259
  %v1261 = vlaneseq
  %v1262 = vshrl.u32 %v1261, 7
  %v1263 = vsub.s32 %v1260, %v1262
  %v1264 = vrot.slane %v240, %v1263
  %v1266 = vunpack.c.l.s4 1987475062
  %v1267 = vunpack.c.0.s8 %v1266
  %v1268 = vlaneseq
  %v1269 = vshrl.u32 %v1268, 7
  %v1270 = vsub.s32 %v1267, %v1269
  %v1271 = vrot.slane %v240, %v1270
  %v1273 = vunpack.c.l.s4 269488144
  %v1274 = vunpack.c.0.s8 %v1273
  %v1275 = vlaneseq
  %v1276 = vshrl.u32 %v1275, 7
  %v1277 = vsub.s32 %v1274, %v1276
  %v1278 = vrot.slane %v243, %v1277
  %v1280 = vunpack.c.l.s4 842150450
  %v1281 = vunpack.c.0.s8 %v1280
  %v1282 = vlaneseq
  %v1283 = vshrl.u32 %v1282, 7
  %v1284 = vsub.s32 %v1281, %v1283
  %v1285 = vrot.slane %v243, %v1284
  %v1287 = vunpack.c.l.s4 1414812756
  %v1288 = vunpack.c.0.s8 %v1287
  %v1289 = vlaneseq
  %v1290 = vshrl.u32 %v1289, 7
  %v1291 = vsub.s32 %v1288, %v1290
  %v1292 = vrot.slane %v243, %v1291
  %v1294 = vunpack.c.l.s4 1987475062
  %v1295 = vunpack.c.0.s8 %v1294
  %v1296 = vlaneseq
  %v1297 = vshrl.u32 %v1296, 7
  %v1298 = vsub.s32 %v1295, %v1297
  %v1299 = vrot.slane %v243, %v1298
  %v1301 = vunpack.c.l.s4 269488144
  %v1302 = vunpack.c.0.s8 %v1301
  %v1303 = vlaneseq
  %v1304 = vshrl.u32 %v1303, 7
  %v1305 = vsub.s32 %v1302, %v1304
  %v1306 = vrot.slane %v246, %v1305
  %v1308 = vunpack.c.l.s4 842150450
  %v1309 = vunpack.c.0.s8 %v1308
  %v1310 = vlaneseq
  %v1311 = vshrl.u32 %v1310, 7
  %v1312 = vsub.s32 %v1309, %v1311
  %v1313 = vrot.slane %v246, %v1312
  %v1315 = vunpack.c.l.s4 1414812756
  %v1316 = vunpack.c.0.s8 %v1315
  %v1317 = vlaneseq
  %v1318 = vshrl.u32 %v1317, 7
  %v1319 = vsub.s32 %v1316, %v1318
  %v1320 = vrot.slane %v246, %v1319
  %v1322 = vunpack.c.l.s4 1987475062
  %v1323 = vunpack.c.0.s8 %v1322
  %v1324 = vlaneseq
  %v1325 = vshrl.u32 %v1324, 7
  %v1326 = vsub.s32 %v1323, %v1325
  %v1327 = vrot.slane %v246, %v1326
  %v1329 = vunpack.c.l.s4 269488144
  %v1330 = vunpack.c.0.s8 %v1329
  %v1331 = vlaneseq
  %v1332 = vshrl.u32 %v1331, 7
  %v1333 = vsub.s32 %v1330, %v1332
  %v1334 = vrot.slane %v249, %v1333
  %v1336 = vunpack.c.l.s4 842150450
  %v1337 = vunpack.c.0.s8 %v1336
  %v1338 = vlaneseq
  %v1339 = vshrl.u32 %v1338, 7
  %v1340 = vsub.s32 %v1337, %v1339
  %v1341 = vrot.slane %v249, %v1340
  %v1343 = vunpack.c.l.s4 1414812756
  %v1344 = vunpack.c.0.s8 %v1343
  %v1345 = vlaneseq
  %v1346 = vshrl.u32 %v1345, 7
  %v1347 = vsub.s32 %v1344, %v1346
  %v1348 = vrot.slane %v249, %v1347
  %v1350 = vunpack.c.l.s4 1987475062
  %v1351 = vunpack.c.0.s8 %v1350
  %v1352 = vlaneseq
  %v1353 = vshrl.u32 %v1352, 7
  %v1354 = vsub.s32 %v1351, %v1353
  %v1355 = vrot.slane %v249, %v1354
  %v1357 = vunpack.c.l.s4 269488144
  %v1358 = vunpack.c.0.s8 %v1357
  %v1359 = vlaneseq
  %v1360 = vshrl.u32 %v1359, 7
  %v1361 = vsub.s32 %v1358, %v1360
  %v1362 = vrot.slane %v252, %v1361
  %v1364 = vunpack.c.l.s4 842150450
  %v1365 = vunpack.c.0.s8 %v1364
  %v1366 = vlaneseq
  %v1367 = vshrl.u32 %v1366, 7
  %v1368 = vsub.s32 %v1365, %v1367
  %v1369 = vrot.slane %v252, %v1368
  %v1371 = vunpack.c.l.s4 1414812756
  %v1372 = vunpack.c.0.s8 %v1371
  %v1373 = vlaneseq
  %v1374 = vshrl.u32 %v1373, 7
  %v1375 = vsub.s32 %v1372, %v1374
  %v1376 = vrot.slane %v252, %v1375
  %v1378 = vunpack.c.l.s4 1987475062
  %v1379 = vunpack.c.0.s8 %v1378
  %v1380 = vlaneseq
  %v1381 = vshrl.u32 %v1380, 7
  %v1382 = vsub.s32 %v1379, %v1381
  %v1383 = vrot.slane %v252, %v1382
  %v1385 = vunpack.c.l.s4 269488144
  %v1386 = vunpack.c.0.s8 %v1385
  %v1387 = vlaneseq
  %v1388 = vshrl.u32 %v1387, 7
  %v1389 = vsub.s32 %v1386, %v1388
  %v1390 = vrot.slane %v255, %v1389
  %v1392 = vunpack.c.l.s4 842150450
  %v1393 = vunpack.c.0.s8 %v1392
  %v1394 = vlaneseq
  %v1395 = vshrl.u32 %v1394, 7
  %v1396 = vsub.s32 %v1393, %v1395
  %v1397 = vrot.slane %v255, %v1396
  %v1399 = vunpack.c.l.s4 1414812756
  %v1400 = vunpack.c.0.s8 %v1399
  %v1401 = vlaneseq
  %v1402 = vshrl.u32 %v1401, 7
  %v1403 = vsub.s32 %v1400, %v1402
  %v1404 = vrot.slane %v255, %v1403
  %v1406 = vunpack.c.l.s4 1987475062
  %v1407 = vunpack.c.0.s8 %v1406
  %v1408 = vlaneseq
  %v1409 = vshrl.u32 %v1408, 7
  %v1410 = vsub.s32 %v1407, %v1409
  %v1411 = vrot.slane %v255, %v1410
  %v1413 = vunpack.c.l.s4 269488144
  %v1414 = vunpack.c.0.s8 %v1413
  %v1415 = vlaneseq
  %v1416 = vshrl.u32 %v1415, 7
  %v1417 = vsub.s32 %v1414, %v1416
  %v1418 = vrot.slane %v258, %v1417
  %v1420 = vunpack.c.l.s4 842150450
  %v1421 = vunpack.c.0.s8 %v1420
  %v1422 = vlaneseq
  %v1423 = vshrl.u32 %v1422, 7
  %v1424 = vsub.s32 %v1421, %v1423
  %v1425 = vrot.slane %v258, %v1424
  %v1427 = vunpack.c.l.s4 1414812756
  %v1428 = vunpack.c.0.s8 %v1427
  %v1429 = vlaneseq
  %v1430 = vshrl.u32 %v1429, 7
  %v1431 = vsub.s32 %v1428, %v1430
  %v1432 = vrot.slane %v258, %v1431
  %v1434 = vunpack.c.l.s4 1987475062
  %v1435 = vunpack.c.0.s8 %v1434
  %v1436 = vlaneseq
  %v1437 = vshrl.u32 %v1436, 7
  %v1438 = vsub.s32 %v1435, %v1437
  %v1439 = vrot.slane %v258, %v1438
  %v1441 = vunpack.c.l.s4 269488144
  %v1442 = vunpack.c.0.s8 %v1441
  %v1443 = vlaneseq
  %v1444 = vshrl.u32 %v1443, 7
  %v1445 = vsub.s32 %v1442, %v1444
  %v1446 = vrot.slane %v261, %v1445
  %v1448 = vunpack.c.l.s4 842150450
  %v1449 = vunpack.c.0.s8 %v1448
  %v1450 = vlaneseq
  %v1451 = vshrl.u32 %v1450, 7
  %v1452 = vsub.s32 %v1449, %v1451
  %v1453 = vrot.slane %v261, %v1452
  %v1455 = vunpack.c.l.s4 1414812756
  %v1456 = vunpack.c.0.s8 %v1455
  %v1457 = vlaneseq
  %v1458 = vshrl.u32 %v1457, 7
  %v1459 = vsub.s32 %v1456, %v1458
  %v1460 = vrot.slane %v261, %v1459
  %v1462 = vunpack.c.l.s4 1987475062
  %v1463 = vunpack.c.0.s8 %v1462
  %v1464 = vlaneseq
  %v1465 = vshrl.u32 %v1464, 7
  %v1466 = vsub.s32 %v1463, %v1465
  %v1467 = vrot.slane %v261, %v1466
  %v1469 = vunpack.c.l.s4 269488144
  %v1470 = vunpack.c.0.s8 %v1469
  %v1471 = vlaneseq
  %v1472 = vshrl.u32 %v1471, 7
  %v1473 = vsub.s32 %v1470, %v1472
  %v1474 = vrot.slane %v264, %v1473
  %v1476 = vunpack.c.l.s4 842150450
  %v1477 = vunpack.c.0.s8 %v1476
  %v1478 = vlaneseq
  %v1479 = vshrl.u32 %v1478, 7
  %v1480 = vsub.s32 %v1477, %v1479
  %v1481 = vrot.slane %v264, %v1480
  %v1483 = vunpack.c.l.s4 1414812756
  %v1484 = vunpack.c.0.s8 %v1483
  %v1485 = vlaneseq
  %v1486 = vshrl.u32 %v1485, 7
  %v1487 = vsub.s32 %v1484, %v1486
  %v1488 = vrot.slane %v264, %v1487
  %v1490 = vunpack.c.l.s4 1987475062
  %v1491 = vunpack.c.0.s8 %v1490
  %v1492 = vlaneseq
  %v1493 = vshrl.u32 %v1492, 7
  %v1494 = vsub.s32 %v1491, %v1493
  %v1495 = vrot.slane %v264, %v1494
  %v1497 = vunpack.c.l.s4 269488144
  %v1498 = vunpack.c.0.s8 %v1497
  %v1499 = vlaneseq
  %v1500 = vshrl.u32 %v1499, 7
  %v1501 = vsub.s32 %v1498, %v1500
  %v1502 = vrot.slane %v267, %v1501
  %v1504 = vunpack.c.l.s4 842150450
  %v1505 = vunpack.c.0.s8 %v1504
  %v1506 = vlaneseq
  %v1507 = vshrl.u32 %v1506, 7
  %v1508 = vsub.s32 %v1505, %v1507
  %v1509 = vrot.slane %v267, %v1508
  %v1511 = vunpack.c.l.s4 1414812756
  %v1512 = vunpack.c.0.s8 %v1511
  %v1513 = vlaneseq
  %v1514 = vshrl.u32 %v1513, 7
  %v1515 = vsub.s32 %v1512, %v1514
  %v1516 = vrot.slane %v267, %v1515
  %v1518 = vunpack.c.l.s4 1987475062
  %v1519 = vunpack.c.0.s8 %v1518
  %v1520 = vlaneseq
  %v1521 = vshrl.u32 %v1520, 7
  %v1522 = vsub.s32 %v1519, %v1521
  %v1523 = vrot.slane %v267, %v1522
  %v1525 = vunpack.c.l.s4 269488144
  %v1526 = vunpack.c.0.s8 %v1525
  %v1527 = vlaneseq
  %v1528 = vshrl.u32 %v1527, 7
  %v1529 = vsub.s32 %v1526, %v1528
  %v1530 = vrot.slane %v270, %v1529
  %v1532 = vunpack.c.l.s4 842150450
  %v1533 = vunpack.c.0.s8 %v1532
  %v1534 = vlaneseq
  %v1535 = vshrl.u32 %v1534, 7
  %v1536 = vsub.s32 %v1533, %v1535
  %v1537 = vrot.slane %v270, %v1536
  %v1539 = vunpack.c.l.s4 1414812756
  %v1540 = vunpack.c.0.s8 %v1539
  %v1541 = vlaneseq
  %v1542 = vshrl.u32 %v1541, 7
  %v1543 = vsub.s32 %v1540, %v1542
  %v1544 = vrot.slane %v270, %v1543
  %v1546 = vunpack.c.l.s4 1987475062
  %v1547 = vunpack.c.0.s8 %v1546
  %v1548 = vlaneseq
  %v1549 = vshrl.u32 %v1548, 7
  %v1550 = vsub.s32 %v1547, %v1549
  %v1551 = vrot.slane %v270, %v1550
  %v1553 = vunpack.c.l.s4 269488144
  %v1554 = vunpack.c.0.s8 %v1553
  %v1555 = vlaneseq
  %v1556 = vshrl.u32 %v1555, 7
  %v1557 = vsub.s32 %v1554, %v1556
  %v1558 = vrot.slane %v273, %v1557
  %v1560 = vunpack.c.l.s4 842150450
  %v1561 = vunpack.c.0.s8 %v1560
  %v1562 = vlaneseq
  %v1563 = vshrl.u32 %v1562, 7
  %v1564 = vsub.s32 %v1561, %v1563
  %v1565 = vrot.slane %v273, %v1564
  %v1567 = vunpack.c.l.s4 1414812756
  %v1568 = vunpack.c.0.s8 %v1567
  %v1569 = vlaneseq
  %v1570 = vshrl.u32 %v1569, 7
  %v1571 = vsub.s32 %v1568, %v1570
  %v1572 = vrot.slane %v273, %v1571
  %v1574 = vunpack.c.l.s4 1987475062
  %v1575 = vunpack.c.0.s8 %v1574
  %v1576 = vlaneseq
  %v1577 = vshrl.u32 %v1576, 7
  %v1578 = vsub.s32 %v1575, %v1577
  %v1579 = vrot.slane %v273, %v1578
  %v1581 = vunpack.c.l.s4 269488144
  %v1582 = vunpack.c.0.s8 %v1581
  %v1583 = vlaneseq
  %v1584 = vshrl.u32 %v1583, 7
  %v1585 = vsub.s32 %v1582, %v1584
  %v1586 = vrot.slane %v276, %v1585
  %v1588 = vunpack.c.l.s4 842150450
  %v1589 = vunpack.c.0.s8 %v1588
  %v1590 = vlaneseq
  %v1591 = vshrl.u32 %v1590, 7
  %v1592 = vsub.s32 %v1589, %v1591
  %v1593 = vrot.slane %v276, %v1592
  %v1595 = vunpack.c.l.s4 1414812756
  %v1596 = vunpack.c.0.s8 %v1595
  %v1597 = vlaneseq
  %v1598 = vshrl.u32 %v1597, 7
  %v1599 = vsub.s32 %v1596, %v1598
  %v1600 = vrot.slane %v276, %v1599
  %v1602 = vunpack.c.l.s4 1987475062
  %v1603 = vunpack.c.0.s8 %v1602
  %v1604 = vlaneseq
  %v1605 = vshrl.u32 %v1604, 7
  %v1606 = vsub.s32 %v1603, %v1605
  %v1607 = vrot.slane %v276, %v1606
  %v1609 = vunpack.c.l.s4 269488144
  %v1610 = vunpack.c.0.s8 %v1609
  %v1611 = vlaneseq
  %v1612 = vshrl.u32 %v1611, 7
  %v1613 = vsub.s32 %v1610, %v1612
  %v1614 = vrot.slane %v279, %v1613
  %v1616 = vunpack.c.l.s4 842150450
  %v1617 = vunpack.c.0.s8 %v1616
  %v1618 = vlaneseq
  %v1619 = vshrl.u32 %v1618, 7
  %v1620 = vsub.s32 %v1617, %v1619
  %v1621 = vrot.slane %v279, %v1620
  %v1623 = vunpack.c.l.s4 1414812756
  %v1624 = vunpack.c.0.s8 %v1623
  %v1625 = vlaneseq
  %v1626 = vshrl.u32 %v1625, 7
  %v1627 = vsub.s32 %v1624, %v1626
  %v1628 = vrot.slane %v279, %v1627
  %v1630 = vunpack.c.l.s4 1987475062
  %v1631 = vunpack.c.0.s8 %v1630
  %v1632 = vlaneseq
  %v1633 = vshrl.u32 %v1632, 7
  %v1634 = vsub.s32 %v1631, %v1633
  %v1635 = vrot.slane %v279, %v1634
  %v1637 = vunpack.c.l.s4 269488144
  %v1638 = vunpack.c.0.s8 %v1637
  %v1639 = vlaneseq
  %v1640 = vshrl.u32 %v1639, 7
  %v1641 = vsub.s32 %v1638, %v1640
  %v1642 = vrot.slane %v282, %v1641
  %v1644 = vunpack.c.l.s4 842150450
  %v1645 = vunpack.c.0.s8 %v1644
  %v1646 = vlaneseq
  %v1647 = vshrl.u32 %v1646, 7
  %v1648 = vsub.s32 %v1645, %v1647
  %v1649 = vrot.slane %v282, %v1648
  %v1651 = vunpack.c.l.s4 1414812756
  %v1652 = vunpack.c.0.s8 %v1651
  %v1653 = vlaneseq
  %v1654 = vshrl.u32 %v1653, 7
  %v1655 = vsub.s32 %v1652, %v1654
  %v1656 = vrot.slane %v282, %v1655
  %v1658 = vunpack.c.l.s4 1987475062
  %v1659 = vunpack.c.0.s8 %v1658
  %v1660 = vlaneseq
  %v1661 = vshrl.u32 %v1660, 7
  %v1662 = vsub.s32 %v1659, %v1661
  %v1663 = vrot.slane %v282, %v1662
  %v1665 = vunpack.c.l.s4 269488144
  %v1666 = vunpack.c.0.s8 %v1665
  %v1667 = vlaneseq
  %v1668 = vshrl.u32 %v1667, 7
  %v1669 = vsub.s32 %v1666, %v1668
  %v1670 = vrot.slane %v285, %v1669
  %v1672 = vunpack.c.l.s4 842150450
  %v1673 = vunpack.c.0.s8 %v1672
  %v1674 = vlaneseq
  %v1675 = vshrl.u32 %v1674, 7
  %v1676 = vsub.s32 %v1673, %v1675
  %v1677 = vrot.slane %v285, %v1676
  %v1679 = vunpack.c.l.s4 1414812756
  %v1680 = vunpack.c.0.s8 %v1679
  %v1681 = vlaneseq
  %v1682 = vshrl.u32 %v1681, 7
  %v1683 = vsub.s32 %v1680, %v1682
  %v1684 = vrot.slane %v285, %v1683
  %v1686 = vunpack.c.l.s4 1987475062
  %v1687 = vunpack.c.0.s8 %v1686
  %v1688 = vlaneseq
  %v1689 = vshrl.u32 %v1688, 7
  %v1690 = vsub.s32 %v1687, %v1689
  %v1691 = vrot.slane %v285, %v1690
  %v1693 = vunpack.c.l.s4 269488144
  %v1694 = vunpack.c.0.s8 %v1693
  %v1695 = vlaneseq
  %v1696 = vshrl.u32 %v1695, 7
  %v1697 = vsub.s32 %v1694, %v1696
  %v1698 = vrot.slane %v288, %v1697
  %v1700 = vunpack.c.l.s4 842150450
  %v1701 = vunpack.c.0.s8 %v1700
  %v1702 = vlaneseq
  %v1703 = vshrl.u32 %v1702, 7
  %v1704 = vsub.s32 %v1701, %v1703
  %v1705 = vrot.slane %v288, %v1704
  %v1707 = vunpack.c.l.s4 1414812756
  %v1708 = vunpack.c.0.s8 %v1707
  %v1709 = vlaneseq
  %v1710 = vshrl.u32 %v1709, 7
  %v1711 = vsub.s32 %v1708, %v1710
  %v1712 = vrot.slane %v288, %v1711
  %v1714 = vunpack.c.l.s4 1987475062
  %v1715 = vunpack.c.0.s8 %v1714
  %v1716 = vlaneseq
  %v1717 = vshrl.u32 %v1716, 7
  %v1718 = vsub.s32 %v1715, %v1717
  %v1719 = vrot.slane %v288, %v1718
  %v1721 = vunpack.c.l.s4 269488144
  %v1722 = vunpack.c.0.s8 %v1721
  %v1723 = vlaneseq
  %v1724 = vshrl.u32 %v1723, 7
  %v1725 = vsub.s32 %v1722, %v1724
  %v1726 = vrot.slane %v291, %v1725
  %v1728 = vunpack.c.l.s4 842150450
  %v1729 = vunpack.c.0.s8 %v1728
  %v1730 = vlaneseq
  %v1731 = vshrl.u32 %v1730, 7
  %v1732 = vsub.s32 %v1729, %v1731
  %v1733 = vrot.slane %v291, %v1732
  %v1735 = vunpack.c.l.s4 1414812756
  %v1736 = vunpack.c.0.s8 %v1735
  %v1737 = vlaneseq
  %v1738 = vshrl.u32 %v1737, 7
  %v1739 = vsub.s32 %v1736, %v1738
  %v1740 = vrot.slane %v291, %v1739
  %v1742 = vunpack.c.l.s4 1987475062
  %v1743 = vunpack.c.0.s8 %v1742
  %v1744 = vlaneseq
  %v1745 = vshrl.u32 %v1744, 7
  %v1746 = vsub.s32 %v1743, %v1745
  %v1747 = vrot.slane %v291, %v1746
  %v1749 = vunpack.c.l.s4 269488144
  %v1750 = vunpack.c.0.s8 %v1749
  %v1751 = vlaneseq
  %v1752 = vshrl.u32 %v1751, 7
  %v1753 = vsub.s32 %v1750, %v1752
  %v1754 = vrot.slane %v294, %v1753
  %v1756 = vunpack.c.l.s4 842150450
  %v1757 = vunpack.c.0.s8 %v1756
  %v1758 = vlaneseq
  %v1759 = vshrl.u32 %v1758, 7
  %v1760 = vsub.s32 %v1757, %v1759
  %v1761 = vrot.slane %v294, %v1760
  %v1763 = vunpack.c.l.s4 1414812756
  %v1764 = vunpack.c.0.s8 %v1763
  %v1765 = vlaneseq
  %v1766 = vshrl.u32 %v1765, 7
  %v1767 = vsub.s32 %v1764, %v1766
  %v1768 = vrot.slane %v294, %v1767
  %v1770 = vunpack.c.l.s4 1987475062
  %v1771 = vunpack.c.0.s8 %v1770
  %v1772 = vlaneseq
  %v1773 = vshrl.u32 %v1772, 7
  %v1774 = vsub.s32 %v1771, %v1773
  %v1775 = vrot.slane %v294, %v1774
  %v1777 = vunpack.c.l.s4 269488144
  %v1778 = vunpack.c.0.s8 %v1777
  %v1779 = vlaneseq
  %v1780 = vshrl.u32 %v1779, 7
  %v1781 = vsub.s32 %v1778, %v1780
  %v1782 = vrot.slane %v297, %v1781
  %v1784 = vunpack.c.l.s4 842150450
  %v1785 = vunpack.c.0.s8 %v1784
  %v1786 = vlaneseq
  %v1787 = vshrl.u32 %v1786, 7
  %v1788 = vsub.s32 %v1785, %v1787
  %v1789 = vrot.slane %v297, %v1788
  %v1791 = vunpack.c.l.s4 1414812756
  %v1792 = vunpack.c.0.s8 %v1791
  %v1793 = vlaneseq
  %v1794 = vshrl.u32 %v1793, 7
  %v1795 = vsub.s32 %v1792, %v1794
  %v1796 = vrot.slane %v297, %v1795
  %v1798 = vunpack.c.l.s4 1987475062
  %v1799 = vunpack.c.0.s8 %v1798
  %v1800 = vlaneseq
  %v1801 = vshrl.u32 %v1800, 7
  %v1802 = vsub.s32 %v1799, %v1801
  %v1803 = vrot.slane %v297, %v1802
  %v1805 = vunpack.c.l.s4 269488144
  %v1806 = vunpack.c.0.s8 %v1805
  %v1807 = vlaneseq
  %v1808 = vshrl.u32 %v1807, 7
  %v1809 = vsub.s32 %v1806, %v1808
  %v1810 = vrot.slane %v300, %v1809
  %v1812 = vunpack.c.l.s4 842150450
  %v1813 = vunpack.c.0.s8 %v1812
  %v1814 = vlaneseq
  %v1815 = vshrl.u32 %v1814, 7
  %v1816 = vsub.s32 %v1813, %v1815
  %v1817 = vrot.slane %v300, %v1816
  %v1819 = vunpack.c.l.s4 1414812756
  %v1820 = vunpack.c.0.s8 %v1819
  %v1821 = vlaneseq
  %v1822 = vshrl.u32 %v1821, 7
  %v1823 = vsub.s32 %v1820, %v1822
  %v1824 = vrot.slane %v300, %v1823
  %v1826 = vunpack.c.l.s4 1987475062
  %v1827 = vunpack.c.0.s8 %v1826
  %v1828 = vlaneseq
  %v1829 = vshrl.u32 %v1828, 7
  %v1830 = vsub.s32 %v1827, %v1829
  %v1831 = vrot.slane %v300, %v1830
  %v1833 = vunpack.c.l.s4 269488144
  %v1834 = vunpack.c.0.s8 %v1833
  %v1835 = vlaneseq
  %v1836 = vshrl.u32 %v1835, 7
  %v1837 = vsub.s32 %v1834, %v1836
  %v1838 = vrot.slane %v303, %v1837
  %v1840 = vunpack.c.l.s4 842150450
  %v1841 = vunpack.c.0.s8 %v1840
  %v1842 = vlaneseq
  %v1843 = vshrl.u32 %v1842, 7
  %v1844 = vsub.s32 %v1841, %v1843
  %v1845 = vrot.slane %v303, %v1844
  %v1847 = vunpack.c.l.s4 1414812756
  %v1848 = vunpack.c.0.s8 %v1847
  %v1849 = vlaneseq
  %v1850 = vshrl.u32 %v1849, 7
  %v1851 = vsub.s32 %v1848, %v1850
  %v1852 = vrot.slane %v303, %v1851
  %v1854 = vunpack.c.l.s4 1987475062
  %v1855 = vunpack.c.0.s8 %v1854
  %v1856 = vlaneseq
  %v1857 = vshrl.u32 %v1856, 7
  %v1858 = vsub.s32 %v1855, %v1857
  %v1859 = vrot.slane %v303, %v1858
  %v1861 = vunpack.c.l.s4 269488144
  %v1862 = vunpack.c.0.s8 %v1861
  %v1863 = vlaneseq
  %v1864 = vshrl.u32 %v1863, 7
  %v1865 = vsub.s32 %v1862, %v1864
  %v1866 = vrot.slane %v306, %v1865
  %v1868 = vunpack.c.l.s4 842150450
  %v1869 = vunpack.c.0.s8 %v1868
  %v1870 = vlaneseq
  %v1871 = vshrl.u32 %v1870, 7
  %v1872 = vsub.s32 %v1869, %v1871
  %v1873 = vrot.slane %v306, %v1872
  %v1875 = vunpack.c.l.s4 1414812756
  %v1876 = vunpack.c.0.s8 %v1875
  %v1877 = vlaneseq
  %v1878 = vshrl.u32 %v1877, 7
  %v1879 = vsub.s32 %v1876, %v1878
  %v1880 = vrot.slane %v306, %v1879
  %v1882 = vunpack.c.l.s4 1987475062
  %v1883 = vunpack.c.0.s8 %v1882
  %v1884 = vlaneseq
  %v1885 = vshrl.u32 %v1884, 7
  %v1886 = vsub.s32 %v1883, %v1885
  %v1887 = vrot.slane %v306, %v1886
  %v1889 = vunpack.c.l.s4 269488144
  %v1890 = vunpack.c.0.s8 %v1889
  %v1891 = vlaneseq
  %v1892 = vshrl.u32 %v1891, 7
  %v1893 = vsub.s32 %v1890, %v1892
  %v1894 = vrot.slane %v309, %v1893
  %v1896 = vunpack.c.l.s4 842150450
  %v1897 = vunpack.c.0.s8 %v1896
  %v1898 = vlaneseq
  %v1899 = vshrl.u32 %v1898, 7
  %v1900 = vsub.s32 %v1897, %v1899
  %v1901 = vrot.slane %v309, %v1900
  %v1903 = vunpack.c.l.s4 1414812756
  %v1904 = vunpack.c.0.s8 %v1903
  %v1905 = vlaneseq
  %v1906 = vshrl.u32 %v1905, 7
  %v1907 = vsub.s32 %v1904, %v1906
  %v1908 = vrot.slane %v309, %v1907
  %v1910 = vunpack.c.l.s4 1987475062
  %v1911 = vunpack.c.0.s8 %v1910
  %v1912 = vlaneseq
  %v1913 = vshrl.u32 %v1912, 7
  %v1914 = vsub.s32 %v1911, %v1913
  %v1915 = vrot.slane %v309, %v1914
  %v1917 = vunpack.c.l.s4 269488144
  %v1918 = vunpack.c.0.s8 %v1917
  %v1919 = vlaneseq
  %v1920 = vshrl.u32 %v1919, 7
  %v1921 = vsub.s32 %v1918, %v1920
  %v1922 = vrot.slane %v312, %v1921
  %v1924 = vunpack.c.l.s4 842150450
  %v1925 = vunpack.c.0.s8 %v1924
  %v1926 = vlaneseq
  %v1927 = vshrl.u32 %v1926, 7
  %v1928 = vsub.s32 %v1925, %v1927
  %v1929 = vrot.slane %v312, %v1928
  %v1931 = vunpack.c.l.s4 1414812756
  %v1932 = vunpack.c.0.s8 %v1931
  %v1933 = vlaneseq
  %v1934 = vshrl.u32 %v1933, 7
  %v1935 = vsub.s32 %v1932, %v1934
  %v1936 = vrot.slane %v312, %v1935
  %v1938 = vunpack.c.l.s4 1987475062
  %v1939 = vunpack.c.0.s8 %v1938
  %v1940 = vlaneseq
  %v1941 = vshrl.u32 %v1940, 7
  %v1942 = vsub.s32 %v1939, %v1941
  %v1943 = vrot.slane %v312, %v1942
  %v1945 = vunpack.c.l.s4 269488144
  %v1946 = vunpack.c.0.s8 %v1945
  %v1947 = vlaneseq
  %v1948 = vshrl.u32 %v1947, 7
  %v1949 = vsub.s32 %v1946, %v1948
  %v1950 = vrot.slane %v315, %v1949
  %v1952 = vunpack.c.l.s4 842150450
  %v1953 = vunpack.c.0.s8 %v1952
  %v1954 = vlaneseq
  %v1955 = vshrl.u32 %v1954, 7
  %v1956 = vsub.s32 %v1953, %v1955
  %v1957 = vrot.slane %v315, %v1956
  %v1959 = vunpack.c.l.s4 1414812756
  %v1960 = vunpack.c.0.s8 %v1959
  %v1961 = vlaneseq
  %v1962 = vshrl.u32 %v1961, 7
  %v1963 = vsub.s32 %v1960, %v1962
  %v1964 = vrot.slane %v315, %v1963
  %v1966 = vunpack.c.l.s4 1987475062
  %v1967 = vunpack.c.0.s8 %v1966
  %v1968 = vlaneseq
  %v1969 = vshrl.u32 %v1968, 7
  %v1970 = vsub.s32 %v1967, %v1969
  %v1971 = vrot.slane %v315, %v1970
  %v1973 = vunpack.c.l.s4 269488144
  %v1974 = vunpack.c.0.s8 %v1973
  %v1975 = vlaneseq
  %v1976 = vshrl.u32 %v1975, 7
  %v1977 = vsub.s32 %v1974, %v1976
  %v1978 = vrot.slane %v318, %v1977
  %v1980 = vunpack.c.l.s4 842150450
  %v1981 = vunpack.c.0.s8 %v1980
  %v1982 = vlaneseq
  %v1983 = vshrl.u32 %v1982, 7
  %v1984 = vsub.s32 %v1981, %v1983
  %v1985 = vrot.slane %v318, %v1984
  %v1987 = vunpack.c.l.s4 1414812756
  %v1988 = vunpack.c.0.s8 %v1987
  %v1989 = vlaneseq
  %v1990 = vshrl.u32 %v1989, 7
  %v1991 = vsub.s32 %v1988, %v1990
  %v1992 = vrot.slane %v318, %v1991
  %v1994 = vunpack.c.l.s4 1987475062
  %v1995 = vunpack.c.0.s8 %v1994
  %v1996 = vlaneseq
  %v1997 = vshrl.u32 %v1996, 7
  %v1998 = vsub.s32 %v1995, %v1997
  %v1999 = vrot.slane %v318, %v1998
  %v2001 = vunpack.c.l.s4 269488144
  %v2002 = vunpack.c.0.s8 %v2001
  %v2003 = vlaneseq
  %v2004 = vshrl.u32 %v2003, 7
  %v2005 = vsub.s32 %v2002, %v2004
  %v2006 = vrot.slane %v321, %v2005
  %v2008 = vunpack.c.l.s4 842150450
  %v2009 = vunpack.c.0.s8 %v2008
  %v2010 = vlaneseq
  %v2011 = vshrl.u32 %v2010, 7
  %v2012 = vsub.s32 %v2009, %v2011
  %v2013 = vrot.slane %v321, %v2012
  %v2015 = vunpack.c.l.s4 1414812756
  %v2016 = vunpack.c.0.s8 %v2015
  %v2017 = vlaneseq
  %v2018 = vshrl.u32 %v2017, 7
  %v2019 = vsub.s32 %v2016, %v2018
  %v2020 = vrot.slane %v321, %v2019
  %v2022 = vunpack.c.l.s4 1987475062
  %v2023 = vunpack.c.0.s8 %v2022
  %v2024 = vlaneseq
  %v2025 = vshrl.u32 %v2024, 7
  %v2026 = vsub.s32 %v2023, %v2025
  %v2027 = vrot.slane %v321, %v2026
  %v2029 = vunpack.c.l.s4 269488144
  %v2030 = vunpack.c.0.s8 %v2029
  %v2031 = vlaneseq
  %v2032 = vshrl.u32 %v2031, 7
  %v2033 = vsub.s32 %v2030, %v2032
  %v2034 = vrot.slane %v324, %v2033
  %v2036 = vunpack.c.l.s4 842150450
  %v2037 = vunpack.c.0.s8 %v2036
  %v2038 = vlaneseq
  %v2039 = vshrl.u32 %v2038, 7
  %v2040 = vsub.s32 %v2037, %v2039
  %v2041 = vrot.slane %v324, %v2040
  %v2043 = vunpack.c.l.s4 1414812756
  %v2044 = vunpack.c.0.s8 %v2043
  %v2045 = vlaneseq
  %v2046 = vshrl.u32 %v2045, 7
  %v2047 = vsub.s32 %v2044, %v2046
  %v2048 = vrot.slane %v324, %v2047
  %v2050 = vunpack.c.l.s4 1987475062
  %v2051 = vunpack.c.0.s8 %v2050
  %v2052 = vlaneseq
  %v2053 = vshrl.u32 %v2052, 7
  %v2054 = vsub.s32 %v2051, %v2053
  %v2055 = vrot.slane %v324, %v2054
  %v2057 = vunpack.c.l.s4 269488144
  %v2058 = vunpack.c.0.s8 %v2057
  %v2059 = vlaneseq
  %v2060 = vshrl.u32 %v2059, 7
  %v2061 = vsub.s32 %v2058, %v2060
  %v2062 = vrot.slane %v327, %v2061
  %v2064 = vunpack.c.l.s4 842150450
  %v2065 = vunpack.c.0.s8 %v2064
  %v2066 = vlaneseq
  %v2067 = vshrl.u32 %v2066, 7
  %v2068 = vsub.s32 %v2065, %v2067
  %v2069 = vrot.slane %v327, %v2068
  %v2071 = vunpack.c.l.s4 1414812756
  %v2072 = vunpack.c.0.s8 %v2071
  %v2073 = vlaneseq
  %v2074 = vshrl.u32 %v2073, 7
  %v2075 = vsub.s32 %v2072, %v2074
  %v2076 = vrot.slane %v327, %v2075
  %v2078 = vunpack.c.l.s4 1987475062
  %v2079 = vunpack.c.0.s8 %v2078
  %v2080 = vlaneseq
  %v2081 = vshrl.u32 %v2080, 7
  %v2082 = vsub.s32 %v2079, %v2081
  %v2083 = vrot.slane %v327, %v2082
  %v2085 = vunpack.c.l.s4 269488144
  %v2086 = vunpack.c.0.s8 %v2085
  %v2087 = vlaneseq
  %v2088 = vshrl.u32 %v2087, 7
  %v2089 = vsub.s32 %v2086, %v2088
  %v2090 = vrot.slane %v330, %v2089
  %v2092 = vunpack.c.l.s4 842150450
  %v2093 = vunpack.c.0.s8 %v2092
  %v2094 = vlaneseq
  %v2095 = vshrl.u32 %v2094, 7
  %v2096 = vsub.s32 %v2093, %v2095
  %v2097 = vrot.slane %v330, %v2096
  %v2099 = vunpack.c.l.s4 1414812756
  %v2100 = vunpack.c.0.s8 %v2099
  %v2101 = vlaneseq
  %v2102 = vshrl.u32 %v2101, 7
  %v2103 = vsub.s32 %v2100, %v2102
  %v2104 = vrot.slane %v330, %v2103
  %v2106 = vunpack.c.l.s4 1987475062
  %v2107 = vunpack.c.0.s8 %v2106
  %v2108 = vlaneseq
  %v2109 = vshrl.u32 %v2108, 7
  %v2110 = vsub.s32 %v2107, %v2109
  %v2111 = vrot.slane %v330, %v2110
  %v2113 = vunpack.c.l.s4 269488144
  %v2114 = vunpack.c.0.s8 %v2113
  %v2115 = vlaneseq
  %v2116 = vshrl.u32 %v2115, 7
  %v2117 = vsub.s32 %v2114, %v2116
  %v2118 = vrot.slane %v333, %v2117
  %v2120 = vunpack.c.l.s4 842150450
  %v2121 = vunpack.c.0.s8 %v2120
  %v2122 = vlaneseq
  %v2123 = vshrl.u32 %v2122, 7
  %v2124 = vsub.s32 %v2121, %v2123
  %v2125 = vrot.slane %v333, %v2124
  %v2127 = vunpack.c.l.s4 1414812756
  %v2128 = vunpack.c.0.s8 %v2127
  %v2129 = vlaneseq
  %v2130 = vshrl.u32 %v2129, 7
  %v2131 = vsub.s32 %v2128, %v2130
  %v2132 = vrot.slane %v333, %v2131
  %v2134 = vunpack.c.l.s4 1987475062
  %v2135 = vunpack.c.0.s8 %v2134
  %v2136 = vlaneseq
  %v2137 = vshrl.u32 %v2136, 7
  %v2138 = vsub.s32 %v2135, %v2137
  %v2139 = vrot.slane %v333, %v2138
  %v2141 = vunpack.c.l.s4 269488144
  %v2142 = vunpack.c.0.s8 %v2141
  %v2143 = vlaneseq
  %v2144 = vshrl.u32 %v2143, 7
  %v2145 = vsub.s32 %v2142, %v2144
  %v2146 = vrot.slane %v336, %v2145
  %v2148 = vunpack.c.l.s4 842150450
  %v2149 = vunpack.c.0.s8 %v2148
  %v2150 = vlaneseq
  %v2151 = vshrl.u32 %v2150, 7
  %v2152 = vsub.s32 %v2149, %v2151
  %v2153 = vrot.slane %v336, %v2152
  %v2155 = vunpack.c.l.s4 1414812756
  %v2156 = vunpack.c.0.s8 %v2155
  %v2157 = vlaneseq
  %v2158 = vshrl.u32 %v2157, 7
  %v2159 = vsub.s32 %v2156, %v2158
  %v2160 = vrot.slane %v336, %v2159
  %v2162 = vunpack.c.l.s4 1987475062
  %v2163 = vunpack.c.0.s8 %v2162
  %v2164 = vlaneseq
  %v2165 = vshrl.u32 %v2164, 7
  %v2166 = vsub.s32 %v2163, %v2165
  %v2167 = vrot.slane %v336, %v2166
  %v2169 = vunpack.c.l.s4 269488144
  %v2170 = vunpack.c.0.s8 %v2169
  %v2171 = vlaneseq
  %v2172 = vshrl.u32 %v2171, 7
  %v2173 = vsub.s32 %v2170, %v2172
  %v2174 = vrot.slane %v339, %v2173
  %v2176 = vunpack.c.l.s4 842150450
  %v2177 = vunpack.c.0.s8 %v2176
  %v2178 = vlaneseq
  %v2179 = vshrl.u32 %v2178, 7
  %v2180 = vsub.s32 %v2177, %v2179
  %v2181 = vrot.slane %v339, %v2180
  %v2183 = vunpack.c.l.s4 1414812756
  %v2184 = vunpack.c.0.s8 %v2183
  %v2185 = vlaneseq
  %v2186 = vshrl.u32 %v2185, 7
  %v2187 = vsub.s32 %v2184, %v2186
  %v2188 = vrot.slane %v339, %v2187
  %v2190 = vunpack.c.l.s4 1987475062
  %v2191 = vunpack.c.0.s8 %v2190
  %v2192 = vlaneseq
  %v2193 = vshrl.u32 %v2192, 7
  %v2194 = vsub.s32 %v2191, %v2193
  %v2195 = vrot.slane %v339, %v2194
  %v2196 = vcombine.low %v410, %v417
  %v2197 = vcombine.low %v424, %v431
  %v2199 = vunpack.c.l.s4 1983009808
  %v2200 = vunpack.c.0.s8 %v2199
  %v2201 = vlaneseq
  %v2202 = vshrl.u32 %v2201, 7
  %v2203 = vsub.s32 %v2200, %v2202
  %v2204 = vrot.slane %v2196, %v2203
  %v2206 = vunpack.c.l.s4 1983009808
  %v2207 = vunpack.c.0.s8 %v2206
  %v2208 = vlaneseq
  %v2209 = vshrl.u32 %v2208, 7
  %v2210 = vsub.s32 %v2207, %v2209
  %v2211 = vrot.slane %v2197, %v2210
  %v2212 = vcombine.low %v2204, %v2211
  %v2213 = vcombine.low %v438, %v445
  %v2214 = vcombine.low %v452, %v459
  %v2216 = vunpack.c.l.s4 1983009808
  %v2217 = vunpack.c.0.s8 %v2216
  %v2218 = vlaneseq
  %v2219 = vshrl.u32 %v2218, 7
  %v2220 = vsub.s32 %v2217, %v2219
  %v2221 = vrot.slane %v2213, %v2220
  %v2223 = vunpack.c.l.s4 1983009808
  %v2224 = vunpack.c.0.s8 %v2223
  %v2225 = vlaneseq
  %v2226 = vshrl.u32 %v2225, 7
  %v2227 = vsub.s32 %v2224, %v2226
  %v2228 = vrot.slane %v2214, %v2227
  %v2229 = vcombine.low %v2221, %v2228
  %v2230 = vcombine.low %v466, %v473
  %v2231 = vcombine.low %v480, %v487
  %v2233 = vunpack.c.l.s4 1983009808
  %v2234 = vunpack.c.0.s8 %v2233
  %v2235 = vlaneseq
  %v2236 = vshrl.u32 %v2235, 7
  %v2237 = vsub.s32 %v2234, %v2236
  %v2238 = vrot.slane %v2230, %v2237
  %v2240 = vunpack.c.l.s4 1983009808
  %v2241 = vunpack.c.0.s8 %v2240
  %v2242 = vlaneseq
  %v2243 = vshrl.u32 %v2242, 7
  %v2244 = vsub.s32 %v2241, %v2243
  %v2245 = vrot.slane %v2231, %v2244
  %v2246 = vcombine.low %v2238, %v2245
  %v2247 = vcombine.low %v494, %v501
  %v2248 = vcombine.low %v508, %v515
  %v2250 = vunpack.c.l.s4 1983009808
  %v2251 = vunpack.c.0.s8 %v2250
  %v2252 = vlaneseq
  %v2253 = vshrl.u32 %v2252, 7
  %v2254 = vsub.s32 %v2251, %v2253
  %v2255 = vrot.slane %v2247, %v2254
  %v2257 = vunpack.c.l.s4 1983009808
  %v2258 = vunpack.c.0.s8 %v2257
  %v2259 = vlaneseq
  %v2260 = vshrl.u32 %v2259, 7
  %v2261 = vsub.s32 %v2258, %v2260
  %v2262 = vrot.slane %v2248, %v2261
  %v2263 = vcombine.low %v2255, %v2262
  %v2264 = vcombine.low %v522, %v529
  %v2265 = vcombine.low %v536, %v543
  %v2267 = vunpack.c.l.s4 1983009808
  %v2268 = vunpack.c.0.s8 %v2267
  %v2269 = vlaneseq
  %v2270 = vshrl.u32 %v2269, 7
  %v2271 = vsub.s32 %v2268, %v2270
  %v2272 = vrot.slane %v2264, %v2271
  %v2274 = vunpack.c.l.s4 1983009808
  %v2275 = vunpack.c.0.s8 %v2274
  %v2276 = vlaneseq
  %v2277 = vshrl.u32 %v2276, 7
  %v2278 = vsub.s32 %v2275, %v2277
  %v2279 = vrot.slane %v2265, %v2278
  %v2280 = vcombine.low %v2272, %v2279
  %v2281 = vcombine.low %v550, %v557
  %v2282 = vcombine.low %v564, %v571
  %v2284 = vunpack.c.l.s4 1983009808
  %v2285 = vunpack.c.0.s8 %v2284
  %v2286 = vlaneseq
  %v2287 = vshrl.u32 %v2286, 7
  %v2288 = vsub.s32 %v2285, %v2287
  %v2289 = vrot.slane %v2281, %v2288
  %v2291 = vunpack.c.l.s4 1983009808
  %v2292 = vunpack.c.0.s8 %v2291
  %v2293 = vlaneseq
  %v2294 = vshrl.u32 %v2293, 7
  %v2295 = vsub.s32 %v2292, %v2294
  %v2296 = vrot.slane %v2282, %v2295
  %v2297 = vcombine.low %v2289, %v2296
  %v2298 = vcombine.low %v578, %v585
  %v2299 = vcombine.low %v592, %v599
  %v2301 = vunpack.c.l.s4 1983009808
  %v2302 = vunpack.c.0.s8 %v2301
  %v2303 = vlaneseq
  %v2304 = vshrl.u32 %v2303, 7
  %v2305 = vsub.s32 %v2302, %v2304
  %v2306 = vrot.slane %v2298, %v2305
  %v2308 = vunpack.c.l.s4 1983009808
  %v2309 = vunpack.c.0.s8 %v2308
  %v2310 = vlaneseq
  %v2311 = vshrl.u32 %v2310, 7
  %v2312 = vsub.s32 %v2309, %v2311
  %v2313 = vrot.slane %v2299, %v2312
  %v2314 = vcombine.low %v2306, %v2313
  %v2315 = vcombine.low %v606, %v613
  %v2316 = vcombine.low %v620, %v627
  %v2318 = vunpack.c.l.s4 1983009808
  %v2319 = vunpack.c.0.s8 %v2318
  %v2320 = vlaneseq
  %v2321 = vshrl.u32 %v2320, 7
  %v2322 = vsub.s32 %v2319, %v2321
  %v2323 = vrot.slane %v2315, %v2322
  %v2325 = vunpack.c.l.s4 1983009808
  %v2326 = vunpack.c.0.s8 %v2325
  %v2327 = vlaneseq
  %v2328 = vshrl.u32 %v2327, 7
  %v2329 = vsub.s32 %v2326, %v2328
  %v2330 = vrot.slane %v2316, %v2329
  %v2331 = vcombine.low %v2323, %v2330
  %v2332 = vcombine.low %v634, %v641
  %v2333 = vcombine.low %v648, %v655
  %v2335 = vunpack.c.l.s4 1983009808
  %v2336 = vunpack.c.0.s8 %v2335
  %v2337 = vlaneseq
  %v2338 = vshrl.u32 %v2337, 7
  %v2339 = vsub.s32 %v2336, %v2338
  %v2340 = vrot.slane %v2332, %v2339
  %v2342 = vunpack.c.l.s4 1983009808
  %v2343 = vunpack.c.0.s8 %v2342
  %v2344 = vlaneseq
  %v2345 = vshrl.u32 %v2344, 7
  %v2346 = vsub.s32 %v2343, %v2345
  %v2347 = vrot.slane %v2333, %v2346
  %v2348 = vcombine.low %v2340, %v2347
  %v2349 = vcombine.low %v662, %v669
  %v2350 = vcombine.low %v676, %v683
  %v2352 = vunpack.c.l.s4 1983009808
  %v2353 = vunpack.c.0.s8 %v2352
  %v2354 = vlaneseq
  %v2355 = vshrl.u32 %v2354, 7
  %v2356 = vsub.s32 %v2353, %v2355
  %v2357 = vrot.slane %v2349, %v2356
  %v2359 = vunpack.c.l.s4 1983009808
  %v2360 = vunpack.c.0.s8 %v2359
  %v2361 = vlaneseq
  %v2362 = vshrl.u32 %v2361, 7
  %v2363 = vsub.s32 %v2360, %v2362
  %v2364 = vrot.slane %v2350, %v2363
  %v2365 = vcombine.low %v2357, %v2364
  %v2366 = vcombine.low %v690, %v697
  %v2367 = vcombine.low %v704, %v711
  %v2369 = vunpack.c.l.s4 1983009808
  %v2370 = vunpack.c.0.s8 %v2369
  %v2371 = vlaneseq
  %v2372 = vshrl.u32 %v2371, 7
  %v2373 = vsub.s32 %v2370, %v2372
  %v2374 = vrot.slane %v2366, %v2373
  %v2376 = vunpack.c.l.s4 1983009808
  %v2377 = vunpack.c.0.s8 %v2376
  %v2378 = vlaneseq
  %v2379 = vshrl.u32 %v2378, 7
  %v2380 = vsub.s32 %v2377, %v2379
  %v2381 = vrot.slane %v2367, %v2380
  %v2382 = vcombine.low %v2374, %v2381
  %v2383 = vcombine.low %v718, %v725
  %v2384 = vcombine.low %v732, %v739
  %v2386 = vunpack.c.l.s4 1983009808
  %v2387 = vunpack.c.0.s8 %v2386
  %v2388 = vlaneseq
  %v2389 = vshrl.u32 %v2388, 7
  %v2390 = vsub.s32 %v2387, %v2389
  %v2391 = vrot.slane %v2383, %v2390
  %v2393 = vunpack.c.l.s4 1983009808
  %v2394 = vunpack.c.0.s8 %v2393
  %v2395 = vlaneseq
  %v2396 = vshrl.u32 %v2395, 7
  %v2397 = vsub.s32 %v2394, %v2396
  %v2398 = vrot.slane %v2384, %v2397
  %v2399 = vcombine.low %v2391, %v2398
  %v2400 = vcombine.low %v746, %v753
  %v2401 = vcombine.low %v760, %v767
  %v2403 = vunpack.c.l.s4 1983009808
  %v2404 = vunpack.c.0.s8 %v2403
  %v2405 = vlaneseq
  %v2406 = vshrl.u32 %v2405, 7
  %v2407 = vsub.s32 %v2404, %v2406
  %v2408 = vrot.slane %v2400, %v2407
  %v2410 = vunpack.c.l.s4 1983009808
  %v2411 = vunpack.c.0.s8 %v2410
  %v2412 = vlaneseq
  %v2413 = vshrl.u32 %v2412, 7
  %v2414 = vsub.s32 %v2411, %v2413
  %v2415 = vrot.slane %v2401, %v2414
  %v2416 = vcombine.low %v2408, %v2415
  %v2417 = vcombine.low %v774, %v781
  %v2418 = vcombine.low %v788, %v795
  %v2420 = vunpack.c.l.s4 1983009808
  %v2421 = vunpack.c.0.s8 %v2420
  %v2422 = vlaneseq
  %v2423 = vshrl.u32 %v2422, 7
  %v2424 = vsub.s32 %v2421, %v2423
  %v2425 = vrot.slane %v2417, %v2424
  %v2427 = vunpack.c.l.s4 1983009808
  %v2428 = vunpack.c.0.s8 %v2427
  %v2429 = vlaneseq
  %v2430 = vshrl.u32 %v2429, 7
  %v2431 = vsub.s32 %v2428, %v2430
  %v2432 = vrot.slane %v2418, %v2431
  %v2433 = vcombine.low %v2425, %v2432
  %v2434 = vcombine.low %v802, %v809
  %v2435 = vcombine.low %v816, %v823
  %v2437 = vunpack.c.l.s4 1983009808
  %v2438 = vunpack.c.0.s8 %v2437
  %v2439 = vlaneseq
  %v2440 = vshrl.u32 %v2439, 7
  %v2441 = vsub.s32 %v2438, %v2440
  %v2442 = vrot.slane %v2434, %v2441
  %v2444 = vunpack.c.l.s4 1983009808
  %v2445 = vunpack.c.0.s8 %v2444
  %v2446 = vlaneseq
  %v2447 = vshrl.u32 %v2446, 7
  %v2448 = vsub.s32 %v2445, %v2447
  %v2449 = vrot.slane %v2435, %v2448
  %v2450 = vcombine.low %v2442, %v2449
  %v2451 = vcombine.low %v830, %v837
  %v2452 = vcombine.low %v844, %v851
  %v2454 = vunpack.c.l.s4 1983009808
  %v2455 = vunpack.c.0.s8 %v2454
  %v2456 = vlaneseq
  %v2457 = vshrl.u32 %v2456, 7
  %v2458 = vsub.s32 %v2455, %v2457
  %v2459 = vrot.slane %v2451, %v2458
  %v2461 = vunpack.c.l.s4 1983009808
  %v2462 = vunpack.c.0.s8 %v2461
  %v2463 = vlaneseq
  %v2464 = vshrl.u32 %v2463, 7
  %v2465 = vsub.s32 %v2462, %v2464
  %v2466 = vrot.slane %v2452, %v2465
  %v2467 = vcombine.low %v2459, %v2466
  %v2468 = vcombine.low %v858, %v865
  %v2469 = vcombine.low %v872, %v879
  %v2471 = vunpack.c.l.s4 1983009808
  %v2472 = vunpack.c.0.s8 %v2471
  %v2473 = vlaneseq
  %v2474 = vshrl.u32 %v2473, 7
  %v2475 = vsub.s32 %v2472, %v2474
  %v2476 = vrot.slane %v2468, %v2475
  %v2478 = vunpack.c.l.s4 1983009808
  %v2479 = vunpack.c.0.s8 %v2478
  %v2480 = vlaneseq
  %v2481 = vshrl.u32 %v2480, 7
  %v2482 = vsub.s32 %v2479, %v2481
  %v2483 = vrot.slane %v2469, %v2482
  %v2484 = vcombine.low %v2476, %v2483
  %v2485 = vcombine.low %v886, %v893
  %v2486 = vcombine.low %v900, %v907
  %v2488 = vunpack.c.l.s4 1983009808
  %v2489 = vunpack.c.0.s8 %v2488
  %v2490 = vlaneseq
  %v2491 = vshrl.u32 %v2490, 7
  %v2492 = vsub.s32 %v2489, %v2491
  %v2493 = vrot.slane %v2485, %v2492
  %v2495 = vunpack.c.l.s4 1983009808
  %v2496 = vunpack.c.0.s8 %v2495
  %v2497 = vlaneseq
  %v2498 = vshrl.u32 %v2497, 7
  %v2499 = vsub.s32 %v2496, %v2498
  %v2500 = vrot.slane %v2486, %v2499
  %v2501 = vcombine.low %v2493, %v2500
  %v2502 = vcombine.low %v914, %v921
  %v2503 = vcombine.low %v928, %v935
  %v2505 = vunpack.c.l.s4 1983009808
  %v2506 = vunpack.c.0.s8 %v2505
  %v2507 = vlaneseq
  %v2508 = vshrl.u32 %v2507, 7
  %v2509 = vsub.s32 %v2506, %v2508
  %v2510 = vrot.slane %v2502, %v2509
  %v2512 = vunpack.c.l.s4 1983009808
  %v2513 = vunpack.c.0.s8 %v2512
  %v2514 = vlaneseq
  %v2515 = vshrl.u32 %v2514, 7
  %v2516 = vsub.s32 %v2513, %v2515
  %v2517 = vrot.slane %v2503, %v2516
  %v2518 = vcombine.low %v2510, %v2517
  %v2519 = vcombine.low %v942, %v949
  %v2520 = vcombine.low %v956, %v963
  %v2522 = vunpack.c.l.s4 1983009808
  %v2523 = vunpack.c.0.s8 %v2522
  %v2524 = vlaneseq
  %v2525 = vshrl.u32 %v2524, 7
  %v2526 = vsub.s32 %v2523, %v2525
  %v2527 = vrot.slane %v2519, %v2526
  %v2529 = vunpack.c.l.s4 1983009808
  %v2530 = vunpack.c.0.s8 %v2529
  %v2531 = vlaneseq
  %v2532 = vshrl.u32 %v2531, 7
  %v2533 = vsub.s32 %v2530, %v2532
  %v2534 = vrot.slane %v2520, %v2533
  %v2535 = vcombine.low %v2527, %v2534
  %v2536 = vcombine.low %v970, %v977
  %v2537 = vcombine.low %v984, %v991
  %v2539 = vunpack.c.l.s4 1983009808
  %v2540 = vunpack.c.0.s8 %v2539
  %v2541 = vlaneseq
  %v2542 = vshrl.u32 %v2541, 7
  %v2543 = vsub.s32 %v2540, %v2542
  %v2544 = vrot.slane %v2536, %v2543
  %v2546 = vunpack.c.l.s4 1983009808
  %v2547 = vunpack.c.0.s8 %v2546
  %v2548 = vlaneseq
  %v2549 = vshrl.u32 %v2548, 7
  %v2550 = vsub.s32 %v2547, %v2549
  %v2551 = vrot.slane %v2537, %v2550
  %v2552 = vcombine.low %v2544, %v2551
  %v2553 = vcombine.low %v998, %v1005
  %v2554 = vcombine.low %v1012, %v1019
  %v2556 = vunpack.c.l.s4 1983009808
  %v2557 = vunpack.c.0.s8 %v2556
  %v2558 = vlaneseq
  %v2559 = vshrl.u32 %v2558, 7
  %v2560 = vsub.s32 %v2557, %v2559
  %v2561 = vrot.slane %v2553, %v2560
  %v2563 = vunpack.c.l.s4 1983009808
  %v2564 = vunpack.c.0.s8 %v2563
  %v2565 = vlaneseq
  %v2566 = vshrl.u32 %v2565, 7
  %v2567 = vsub.s32 %v2564, %v2566
  %v2568 = vrot.slane %v2554, %v2567
  %v2569 = vcombine.low %v2561, %v2568
  %v2570 = vcombine.low %v1026, %v1033
  %v2571 = vcombine.low %v1040, %v1047
  %v2573 = vunpack.c.l.s4 1983009808
  %v2574 = vunpack.c.0.s8 %v2573
  %v2575 = vlaneseq
  %v2576 = vshrl.u32 %v2575, 7
  %v2577 = vsub.s32 %v2574, %v2576
  %v2578 = vrot.slane %v2570, %v2577
  %v2580 = vunpack.c.l.s4 1983009808
  %v2581 = vunpack.c.0.s8 %v2580
  %v2582 = vlaneseq
  %v2583 = vshrl.u32 %v2582, 7
  %v2584 = vsub.s32 %v2581, %v2583
  %v2585 = vrot.slane %v2571, %v2584
  %v2586 = vcombine.low %v2578, %v2585
  %v2587 = vcombine.low %v1054, %v1061
  %v2588 = vcombine.low %v1068, %v1075
  %v2590 = vunpack.c.l.s4 1983009808
  %v2591 = vunpack.c.0.s8 %v2590
  %v2592 = vlaneseq
  %v2593 = vshrl.u32 %v2592, 7
  %v2594 = vsub.s32 %v2591, %v2593
  %v2595 = vrot.slane %v2587, %v2594
  %v2597 = vunpack.c.l.s4 1983009808
  %v2598 = vunpack.c.0.s8 %v2597
  %v2599 = vlaneseq
  %v2600 = vshrl.u32 %v2599, 7
  %v2601 = vsub.s32 %v2598, %v2600
  %v2602 = vrot.slane %v2588, %v2601
  %v2603 = vcombine.low %v2595, %v2602
  %v2604 = vcombine.low %v1082, %v1089
  %v2605 = vcombine.low %v1096, %v1103
  %v2607 = vunpack.c.l.s4 1983009808
  %v2608 = vunpack.c.0.s8 %v2607
  %v2609 = vlaneseq
  %v2610 = vshrl.u32 %v2609, 7
  %v2611 = vsub.s32 %v2608, %v2610
  %v2612 = vrot.slane %v2604, %v2611
  %v2614 = vunpack.c.l.s4 1983009808
  %v2615 = vunpack.c.0.s8 %v2614
  %v2616 = vlaneseq
  %v2617 = vshrl.u32 %v2616, 7
  %v2618 = vsub.s32 %v2615, %v2617
  %v2619 = vrot.slane %v2605, %v2618
  %v2620 = vcombine.low %v2612, %v2619
  %v2621 = vcombine.low %v1110, %v1117
  %v2622 = vcombine.low %v1124, %v1131
  %v2624 = vunpack.c.l.s4 1983009808
  %v2625 = vunpack.c.0.s8 %v2624
  %v2626 = vlaneseq
  %v2627 = vshrl.u32 %v2626, 7
  %v2628 = vsub.s32 %v2625, %v2627
  %v2629 = vrot.slane %v2621, %v2628
  %v2631 = vunpack.c.l.s4 1983009808
  %v2632 = vunpack.c.0.s8 %v2631
  %v2633 = vlaneseq
  %v2634 = vshrl.u32 %v2633, 7
  %v2635 = vsub.s32 %v2632, %v2634
  %v2636 = vrot.slane %v2622, %v2635
  %v2637 = vcombine.low %v2629, %v2636
  %v2638 = vcombine.low %v1138, %v1145
  %v2639 = vcombine.low %v1152, %v1159
  %v2641 = vunpack.c.l.s4 1983009808
  %v2642 = vunpack.c.0.s8 %v2641
  %v2643 = vlaneseq
  %v2644 = vshrl.u32 %v2643, 7
  %v2645 = vsub.s32 %v2642, %v2644
  %v2646 = vrot.slane %v2638, %v2645
  %v2648 = vunpack.c.l.s4 1983009808
  %v2649 = vunpack.c.0.s8 %v2648
  %v2650 = vlaneseq
  %v2651 = vshrl.u32 %v2650, 7
  %v2652 = vsub.s32 %v2649, %v2651
  %v2653 = vrot.slane %v2639, %v2652
  %v2654 = vcombine.low %v2646, %v2653
  %v2655 = vcombine.low %v1166, %v1173
  %v2656 = vcombine.low %v1180, %v1187
  %v2658 = vunpack.c.l.s4 1983009808
  %v2659 = vunpack.c.0.s8 %v2658
  %v2660 = vlaneseq
  %v2661 = vshrl.u32 %v2660, 7
  %v2662 = vsub.s32 %v2659, %v2661
  %v2663 = vrot.slane %v2655, %v2662
  %v2665 = vunpack.c.l.s4 1983009808
  %v2666 = vunpack.c.0.s8 %v2665
  %v2667 = vlaneseq
  %v2668 = vshrl.u32 %v2667, 7
  %v2669 = vsub.s32 %v2666, %v2668
  %v2670 = vrot.slane %v2656, %v2669
  %v2671 = vcombine.low %v2663, %v2670
  %v2672 = vcombine.low %v1194, %v1201
  %v2673 = vcombine.low %v1208, %v1215
  %v2675 = vunpack.c.l.s4 1983009808
  %v2676 = vunpack.c.0.s8 %v2675
  %v2677 = vlaneseq
  %v2678 = vshrl.u32 %v2677, 7
  %v2679 = vsub.s32 %v2676, %v2678
  %v2680 = vrot.slane %v2672, %v2679
  %v2682 = vunpack.c.l.s4 1983009808
  %v2683 = vunpack.c.0.s8 %v2682
  %v2684 = vlaneseq
  %v2685 = vshrl.u32 %v2684, 7
  %v2686 = vsub.s32 %v2683, %v2685
  %v2687 = vrot.slane %v2673, %v2686
  %v2688 = vcombine.low %v2680, %v2687
  %v2689 = vcombine.low %v1222, %v1229
  %v2690 = vcombine.low %v1236, %v1243
  %v2692 = vunpack.c.l.s4 1983009808
  %v2693 = vunpack.c.0.s8 %v2692
  %v2694 = vlaneseq
  %v2695 = vshrl.u32 %v2694, 7
  %v2696 = vsub.s32 %v2693, %v2695
  %v2697 = vrot.slane %v2689, %v2696
  %v2699 = vunpack.c.l.s4 1983009808
  %v2700 = vunpack.c.0.s8 %v2699
  %v2701 = vlaneseq
  %v2702 = vshrl.u32 %v2701, 7
  %v2703 = vsub.s32 %v2700, %v2702
  %v2704 = vrot.slane %v2690, %v2703
  %v2705 = vcombine.low %v2697, %v2704
  %v2706 = vcombine.low %v1250, %v1257
  %v2707 = vcombine.low %v1264, %v1271
  %v2709 = vunpack.c.l.s4 1983009808
  %v2710 = vunpack.c.0.s8 %v2709
  %v2711 = vlaneseq
  %v2712 = vshrl.u32 %v2711, 7
  %v2713 = vsub.s32 %v2710, %v2712
  %v2714 = vrot.slane %v2706, %v2713
  %v2716 = vunpack.c.l.s4 1983009808
  %v2717 = vunpack.c.0.s8 %v2716
  %v2718 = vlaneseq
  %v2719 = vshrl.u32 %v2718, 7
  %v2720 = vsub.s32 %v2717, %v2719
  %v2721 = vrot.slane %v2707, %v2720
  %v2722 = vcombine.low %v2714, %v2721
  %v2723 = vcombine.low %v1278, %v1285
  %v2724 = vcombine.low %v1292, %v1299
  %v2726 = vunpack.c.l.s4 1983009808
  %v2727 = vunpack.c.0.s8 %v2726
  %v2728 = vlaneseq
  %v2729 = vshrl.u32 %v2728, 7
  %v2730 = vsub.s32 %v2727, %v2729
  %v2731 = vrot.slane %v2723, %v2730
  %v2733 = vunpack.c.l.s4 1983009808
  %v2734 = vunpack.c.0.s8 %v2733
  %v2735 = vlaneseq
  %v2736 = vshrl.u32 %v2735, 7
  %v2737 = vsub.s32 %v2734, %v2736
  %v2738 = vrot.slane %v2724, %v2737
  %v2739 = vcombine.low %v2731, %v2738
  %v2740 = vcombine.low %v1306, %v1313
  %v2741 = vcombine.low %v1320, %v1327
  %v2743 = vunpack.c.l.s4 1983009808
  %v2744 = vunpack.c.0.s8 %v2743
  %v2745 = vlaneseq
  %v2746 = vshrl.u32 %v2745, 7
  %v2747 = vsub.s32 %v2744, %v2746
  %v2748 = vrot.slane %v2740, %v2747
  %v2750 = vunpack.c.l.s4 1983009808
  %v2751 = vunpack.c.0.s8 %v2750
  %v2752 = vlaneseq
  %v2753 = vshrl.u32 %v2752, 7
  %v2754 = vsub.s32 %v2751, %v2753
  %v2755 = vrot.slane %v2741, %v2754
  %v2756 = vcombine.low %v2748, %v2755
  %v2757 = vcombine.low %v1334, %v1341
  %v2758 = vcombine.low %v1348, %v1355
  %v2760 = vunpack.c.l.s4 1983009808
  %v2761 = vunpack.c.0.s8 %v2760
  %v2762 = vlaneseq
  %v2763 = vshrl.u32 %v2762, 7
  %v2764 = vsub.s32 %v2761, %v2763
  %v2765 = vrot.slane %v2757, %v2764
  %v2767 = vunpack.c.l.s4 1983009808
  %v2768 = vunpack.c.0.s8 %v2767
  %v2769 = vlaneseq
  %v2770 = vshrl.u32 %v2769, 7
  %v2771 = vsub.s32 %v2768, %v2770
  %v2772 = vrot.slane %v2758, %v2771
  %v2773 = vcombine.low %v2765, %v2772
  %v2774 = vcombine.low %v1362, %v1369
  %v2775 = vcombine.low %v1376, %v1383
  %v2777 = vunpack.c.l.s4 1983009808
  %v2778 = vunpack.c.0.s8 %v2777
  %v2779 = vlaneseq
  %v2780 = vshrl.u32 %v2779, 7
  %v2781 = vsub.s32 %v2778, %v2780
  %v2782 = vrot.slane %v2774, %v2781
  %v2784 = vunpack.c.l.s4 1983009808
  %v2785 = vunpack.c.0.s8 %v2784
  %v2786 = vlaneseq
  %v2787 = vshrl.u32 %v2786, 7
  %v2788 = vsub.s32 %v2785, %v2787
  %v2789 = vrot.slane %v2775, %v2788
  %v2790 = vcombine.low %v2782, %v2789
  %v2791 = vcombine.low %v1390, %v1397
  %v2792 = vcombine.low %v1404, %v1411
  %v2794 = vunpack.c.l.s4 1983009808
  %v2795 = vunpack.c.0.s8 %v2794
  %v2796 = vlaneseq
  %v2797 = vshrl.u32 %v2796, 7
  %v2798 = vsub.s32 %v2795, %v2797
  %v2799 = vrot.slane %v2791, %v2798
  %v2801 = vunpack.c.l.s4 1983009808
  %v2802 = vunpack.c.0.s8 %v2801
  %v2803 = vlaneseq
  %v2804 = vshrl.u32 %v2803, 7
  %v2805 = vsub.s32 %v2802, %v2804
  %v2806 = vrot.slane %v2792, %v2805
  %v2807 = vcombine.low %v2799, %v2806
  %v2808 = vcombine.low %v1418, %v1425
  %v2809 = vcombine.low %v1432, %v1439
  %v2811 = vunpack.c.l.s4 1983009808
  %v2812 = vunpack.c.0.s8 %v2811
  %v2813 = vlaneseq
  %v2814 = vshrl.u32 %v2813, 7
  %v2815 = vsub.s32 %v2812, %v2814
  %v2816 = vrot.slane %v2808, %v2815
  %v2818 = vunpack.c.l.s4 1983009808
  %v2819 = vunpack.c.0.s8 %v2818
  %v2820 = vlaneseq
  %v2821 = vshrl.u32 %v2820, 7
  %v2822 = vsub.s32 %v2819, %v2821
  %v2823 = vrot.slane %v2809, %v2822
  %v2824 = vcombine.low %v2816, %v2823
  %v2825 = vcombine.low %v1446, %v1453
  %v2826 = vcombine.low %v1460, %v1467
  %v2828 = vunpack.c.l.s4 1983009808
  %v2829 = vunpack.c.0.s8 %v2828
  %v2830 = vlaneseq
  %v2831 = vshrl.u32 %v2830, 7
  %v2832 = vsub.s32 %v2829, %v2831
  %v2833 = vrot.slane %v2825, %v2832
  %v2835 = vunpack.c.l.s4 1983009808
  %v2836 = vunpack.c.0.s8 %v2835
  %v2837 = vlaneseq
  %v2838 = vshrl.u32 %v2837, 7
  %v2839 = vsub.s32 %v2836, %v2838
  %v2840 = vrot.slane %v2826, %v2839
  %v2841 = vcombine.low %v2833, %v2840
  %v2842 = vcombine.low %v1474, %v1481
  %v2843 = vcombine.low %v1488, %v1495
  %v2845 = vunpack.c.l.s4 1983009808
  %v2846 = vunpack.c.0.s8 %v2845
  %v2847 = vlaneseq
  %v2848 = vshrl.u32 %v2847, 7
  %v2849 = vsub.s32 %v2846, %v2848
  %v2850 = vrot.slane %v2842, %v2849
  %v2852 = vunpack.c.l.s4 1983009808
  %v2853 = vunpack.c.0.s8 %v2852
  %v2854 = vlaneseq
  %v2855 = vshrl.u32 %v2854, 7
  %v2856 = vsub.s32 %v2853, %v2855
  %v2857 = vrot.slane %v2843, %v2856
  %v2858 = vcombine.low %v2850, %v2857
  %v2859 = vcombine.low %v1502, %v1509
  %v2860 = vcombine.low %v1516, %v1523
  %v2862 = vunpack.c.l.s4 1983009808
  %v2863 = vunpack.c.0.s8 %v2862
  %v2864 = vlaneseq
  %v2865 = vshrl.u32 %v2864, 7
  %v2866 = vsub.s32 %v2863, %v2865
  %v2867 = vrot.slane %v2859, %v2866
  %v2869 = vunpack.c.l.s4 1983009808
  %v2870 = vunpack.c.0.s8 %v2869
  %v2871 = vlaneseq
  %v2872 = vshrl.u32 %v2871, 7
  %v2873 = vsub.s32 %v2870, %v2872
  %v2874 = vrot.slane %v2860, %v2873
  %v2875 = vcombine.low %v2867, %v2874
  %v2876 = vcombine.low %v1530, %v1537
  %v2877 = vcombine.low %v1544, %v1551
  %v2879 = vunpack.c.l.s4 1983009808
  %v2880 = vunpack.c.0.s8 %v2879
  %v2881 = vlaneseq
  %v2882 = vshrl.u32 %v2881, 7
  %v2883 = vsub.s32 %v2880, %v2882
  %v2884 = vrot.slane %v2876, %v2883
  %v2886 = vunpack.c.l.s4 1983009808
  %v2887 = vunpack.c.0.s8 %v2886
  %v2888 = vlaneseq
  %v2889 = vshrl.u32 %v2888, 7
  %v2890 = vsub.s32 %v2887, %v2889
  %v2891 = vrot.slane %v2877, %v2890
  %v2892 = vcombine.low %v2884, %v2891
  %v2893 = vcombine.low %v1558, %v1565
  %v2894 = vcombine.low %v1572, %v1579
  %v2896 = vunpack.c.l.s4 1983009808
  %v2897 = vunpack.c.0.s8 %v2896
  %v2898 = vlaneseq
  %v2899 = vshrl.u32 %v2898, 7
  %v2900 = vsub.s32 %v2897, %v2899
  %v2901 = vrot.slane %v2893, %v2900
  %v2903 = vunpack.c.l.s4 1983009808
  %v2904 = vunpack.c.0.s8 %v2903
  %v2905 = vlaneseq
  %v2906 = vshrl.u32 %v2905, 7
  %v2907 = vsub.s32 %v2904, %v2906
  %v2908 = vrot.slane %v2894, %v2907
  %v2909 = vcombine.low %v2901, %v2908
  %v2910 = vcombine.low %v1586, %v1593
  %v2911 = vcombine.low %v1600, %v1607
  %v2913 = vunpack.c.l.s4 1983009808
  %v2914 = vunpack.c.0.s8 %v2913
  %v2915 = vlaneseq
  %v2916 = vshrl.u32 %v2915, 7
  %v2917 = vsub.s32 %v2914, %v2916
  %v2918 = vrot.slane %v2910, %v2917
  %v2920 = vunpack.c.l.s4 1983009808
  %v2921 = vunpack.c.0.s8 %v2920
  %v2922 = vlaneseq
  %v2923 = vshrl.u32 %v2922, 7
  %v2924 = vsub.s32 %v2921, %v2923
  %v2925 = vrot.slane %v2911, %v2924
  %v2926 = vcombine.low %v2918, %v2925
  %v2927 = vcombine.low %v1614, %v1621
  %v2928 = vcombine.low %v1628, %v1635
  %v2930 = vunpack.c.l.s4 1983009808
  %v2931 = vunpack.c.0.s8 %v2930
  %v2932 = vlaneseq
  %v2933 = vshrl.u32 %v2932, 7
  %v2934 = vsub.s32 %v2931, %v2933
  %v2935 = vrot.slane %v2927, %v2934
  %v2937 = vunpack.c.l.s4 1983009808
  %v2938 = vunpack.c.0.s8 %v2937
  %v2939 = vlaneseq
  %v2940 = vshrl.u32 %v2939, 7
  %v2941 = vsub.s32 %v2938, %v2940
  %v2942 = vrot.slane %v2928, %v2941
  %v2943 = vcombine.low %v2935, %v2942
  %v2944 = vcombine.low %v1642, %v1649
  %v2945 = vcombine.low %v1656, %v1663
  %v2947 = vunpack.c.l.s4 1983009808
  %v2948 = vunpack.c.0.s8 %v2947
  %v2949 = vlaneseq
  %v2950 = vshrl.u32 %v2949, 7
  %v2951 = vsub.s32 %v2948, %v2950
  %v2952 = vrot.slane %v2944, %v2951
  %v2954 = vunpack.c.l.s4 1983009808
  %v2955 = vunpack.c.0.s8 %v2954
  %v2956 = vlaneseq
  %v2957 = vshrl.u32 %v2956, 7
  %v2958 = vsub.s32 %v2955, %v2957
  %v2959 = vrot.slane %v2945, %v2958
  %v2960 = vcombine.low %v2952, %v2959
  %v2961 = vcombine.low %v1670, %v1677
  %v2962 = vcombine.low %v1684, %v1691
  %v2964 = vunpack.c.l.s4 1983009808
  %v2965 = vunpack.c.0.s8 %v2964
  %v2966 = vlaneseq
  %v2967 = vshrl.u32 %v2966, 7
  %v2968 = vsub.s32 %v2965, %v2967
  %v2969 = vrot.slane %v2961, %v2968
  %v2971 = vunpack.c.l.s4 1983009808
  %v2972 = vunpack.c.0.s8 %v2971
  %v2973 = vlaneseq
  %v2974 = vshrl.u32 %v2973, 7
  %v2975 = vsub.s32 %v2972, %v2974
  %v2976 = vrot.slane %v2962, %v2975
  %v2977 = vcombine.low %v2969, %v2976
  %v2978 = vcombine.low %v1698, %v1705
  %v2979 = vcombine.low %v1712, %v1719
  %v2981 = vunpack.c.l.s4 1983009808
  %v2982 = vunpack.c.0.s8 %v2981
  %v2983 = vlaneseq
  %v2984 = vshrl.u32 %v2983, 7
  %v2985 = vsub.s32 %v2982, %v2984
  %v2986 = vrot.slane %v2978, %v2985
  %v2988 = vunpack.c.l.s4 1983009808
  %v2989 = vunpack.c.0.s8 %v2988
  %v2990 = vlaneseq
  %v2991 = vshrl.u32 %v2990, 7
  %v2992 = vsub.s32 %v2989, %v2991
  %v2993 = vrot.slane %v2979, %v2992
  %v2994 = vcombine.low %v2986, %v2993
  %v2995 = vcombine.low %v1726, %v1733
  %v2996 = vcombine.low %v1740, %v1747
  %v2998 = vunpack.c.l.s4 1983009808
  %v2999 = vunpack.c.0.s8 %v2998
  %v3000 = vlaneseq
  %v3001 = vshrl.u32 %v3000, 7
  %v3002 = vsub.s32 %v2999, %v3001
  %v3003 = vrot.slane %v2995, %v3002
  %v3005 = vunpack.c.l.s4 1983009808
  %v3006 = vunpack.c.0.s8 %v3005
  %v3007 = vlaneseq
  %v3008 = vshrl.u32 %v3007, 7
  %v3009 = vsub.s32 %v3006, %v3008
  %v3010 = vrot.slane %v2996, %v3009
  %v3011 = vcombine.low %v3003, %v3010
  %v3012 = vcombine.low %v1754, %v1761
  %v3013 = vcombine.low %v1768, %v1775
  %v3015 = vunpack.c.l.s4 1983009808
  %v3016 = vunpack.c.0.s8 %v3015
  %v3017 = vlaneseq
  %v3018 = vshrl.u32 %v3017, 7
  %v3019 = vsub.s32 %v3016, %v3018
  %v3020 = vrot.slane %v3012, %v3019
  %v3022 = vunpack.c.l.s4 1983009808
  %v3023 = vunpack.c.0.s8 %v3022
  %v3024 = vlaneseq
  %v3025 = vshrl.u32 %v3024, 7
  %v3026 = vsub.s32 %v3023, %v3025
  %v3027 = vrot.slane %v3013, %v3026
  %v3028 = vcombine.low %v3020, %v3027
  %v3029 = vcombine.low %v1782, %v1789
  %v3030 = vcombine.low %v1796, %v1803
  %v3032 = vunpack.c.l.s4 1983009808
  %v3033 = vunpack.c.0.s8 %v3032
  %v3034 = vlaneseq
  %v3035 = vshrl.u32 %v3034, 7
  %v3036 = vsub.s32 %v3033, %v3035
  %v3037 = vrot.slane %v3029, %v3036
  %v3039 = vunpack.c.l.s4 1983009808
  %v3040 = vunpack.c.0.s8 %v3039
  %v3041 = vlaneseq
  %v3042 = vshrl.u32 %v3041, 7
  %v3043 = vsub.s32 %v3040, %v3042
  %v3044 = vrot.slane %v3030, %v3043
  %v3045 = vcombine.low %v3037, %v3044
  %v3046 = vcombine.low %v1810, %v1817
  %v3047 = vcombine.low %v1824, %v1831
  %v3049 = vunpack.c.l.s4 1983009808
  %v3050 = vunpack.c.0.s8 %v3049
  %v3051 = vlaneseq
  %v3052 = vshrl.u32 %v3051, 7
  %v3053 = vsub.s32 %v3050, %v3052
  %v3054 = vrot.slane %v3046, %v3053
  %v3056 = vunpack.c.l.s4 1983009808
  %v3057 = vunpack.c.0.s8 %v3056
  %v3058 = vlaneseq
  %v3059 = vshrl.u32 %v3058, 7
  %v3060 = vsub.s32 %v3057, %v3059
  %v3061 = vrot.slane %v3047, %v3060
  %v3062 = vcombine.low %v3054, %v3061
  %v3063 = vcombine.low %v1838, %v1845
  %v3064 = vcombine.low %v1852, %v1859
  %v3066 = vunpack.c.l.s4 1983009808
  %v3067 = vunpack.c.0.s8 %v3066
  %v3068 = vlaneseq
  %v3069 = vshrl.u32 %v3068, 7
  %v3070 = vsub.s32 %v3067, %v3069
  %v3071 = vrot.slane %v3063, %v3070
  %v3073 = vunpack.c.l.s4 1983009808
  %v3074 = vunpack.c.0.s8 %v3073
  %v3075 = vlaneseq
  %v3076 = vshrl.u32 %v3075, 7
  %v3077 = vsub.s32 %v3074, %v3076
  %v3078 = vrot.slane %v3064, %v3077
  %v3079 = vcombine.low %v3071, %v3078
  %v3080 = vcombine.low %v1866, %v1873
  %v3081 = vcombine.low %v1880, %v1887
  %v3083 = vunpack.c.l.s4 1983009808
  %v3084 = vunpack.c.0.s8 %v3083
  %v3085 = vlaneseq
  %v3086 = vshrl.u32 %v3085, 7
  %v3087 = vsub.s32 %v3084, %v3086
  %v3088 = vrot.slane %v3080, %v3087
  %v3090 = vunpack.c.l.s4 1983009808
  %v3091 = vunpack.c.0.s8 %v3090
  %v3092 = vlaneseq
  %v3093 = vshrl.u32 %v3092, 7
  %v3094 = vsub.s32 %v3091, %v3093
  %v3095 = vrot.slane %v3081, %v3094
  %v3096 = vcombine.low %v3088, %v3095
  %v3097 = vcombine.low %v1894, %v1901
  %v3098 = vcombine.low %v1908, %v1915
  %v3100 = vunpack.c.l.s4 1983009808
  %v3101 = vunpack.c.0.s8 %v3100
  %v3102 = vlaneseq
  %v3103 = vshrl.u32 %v3102, 7
  %v3104 = vsub.s32 %v3101, %v3103
  %v3105 = vrot.slane %v3097, %v3104
  %v3107 = vunpack.c.l.s4 1983009808
  %v3108 = vunpack.c.0.s8 %v3107
  %v3109 = vlaneseq
  %v3110 = vshrl.u32 %v3109, 7
  %v3111 = vsub.s32 %v3108, %v3110
  %v3112 = vrot.slane %v3098, %v3111
  %v3113 = vcombine.low %v3105, %v3112
  %v3114 = vcombine.low %v1922, %v1929
  %v3115 = vcombine.low %v1936, %v1943
  %v3117 = vunpack.c.l.s4 1983009808
  %v3118 = vunpack.c.0.s8 %v3117
  %v3119 = vlaneseq
  %v3120 = vshrl.u32 %v3119, 7
  %v3121 = vsub.s32 %v3118, %v3120
  %v3122 = vrot.slane %v3114, %v3121
  %v3124 = vunpack.c.l.s4 1983009808
  %v3125 = vunpack.c.0.s8 %v3124
  %v3126 = vlaneseq
  %v3127 = vshrl.u32 %v3126, 7
  %v3128 = vsub.s32 %v3125, %v3127
  %v3129 = vrot.slane %v3115, %v3128
  %v3130 = vcombine.low %v3122, %v3129
  %v3131 = vcombine.low %v1950, %v1957
  %v3132 = vcombine.low %v1964, %v1971
  %v3134 = vunpack.c.l.s4 1983009808
  %v3135 = vunpack.c.0.s8 %v3134
  %v3136 = vlaneseq
  %v3137 = vshrl.u32 %v3136, 7
  %v3138 = vsub.s32 %v3135, %v3137
  %v3139 = vrot.slane %v3131, %v3138
  %v3141 = vunpack.c.l.s4 1983009808
  %v3142 = vunpack.c.0.s8 %v3141
  %v3143 = vlaneseq
  %v3144 = vshrl.u32 %v3143, 7
  %v3145 = vsub.s32 %v3142, %v3144
  %v3146 = vrot.slane %v3132, %v3145
  %v3147 = vcombine.low %v3139, %v3146
  %v3148 = vcombine.low %v1978, %v1985
  %v3149 = vcombine.low %v1992, %v1999
  %v3151 = vunpack.c.l.s4 1983009808
  %v3152 = vunpack.c.0.s8 %v3151
  %v3153 = vlaneseq
  %v3154 = vshrl.u32 %v3153, 7
  %v3155 = vsub.s32 %v3152, %v3154
  %v3156 = vrot.slane %v3148, %v3155
  %v3158 = vunpack.c.l.s4 1983009808
  %v3159 = vunpack.c.0.s8 %v3158
  %v3160 = vlaneseq
  %v3161 = vshrl.u32 %v3160, 7
  %v3162 = vsub.s32 %v3159, %v3161
  %v3163 = vrot.slane %v3149, %v3162
  %v3164 = vcombine.low %v3156, %v3163
  %v3165 = vcombine.low %v2006, %v2013
  %v3166 = vcombine.low %v2020, %v2027
  %v3168 = vunpack.c.l.s4 1983009808
  %v3169 = vunpack.c.0.s8 %v3168
  %v3170 = vlaneseq
  %v3171 = vshrl.u32 %v3170, 7
  %v3172 = vsub.s32 %v3169, %v3171
  %v3173 = vrot.slane %v3165, %v3172
  %v3175 = vunpack.c.l.s4 1983009808
  %v3176 = vunpack.c.0.s8 %v3175
  %v3177 = vlaneseq
  %v3178 = vshrl.u32 %v3177, 7
  %v3179 = vsub.s32 %v3176, %v3178
  %v3180 = vrot.slane %v3166, %v3179
  %v3181 = vcombine.low %v3173, %v3180
  %v3182 = vcombine.low %v2034, %v2041
  %v3183 = vcombine.low %v2048, %v2055
  %v3185 = vunpack.c.l.s4 1983009808
  %v3186 = vunpack.c.0.s8 %v3185
  %v3187 = vlaneseq
  %v3188 = vshrl.u32 %v3187, 7
  %v3189 = vsub.s32 %v3186, %v3188
  %v3190 = vrot.slane %v3182, %v3189
  %v3192 = vunpack.c.l.s4 1983009808
  %v3193 = vunpack.c.0.s8 %v3192
  %v3194 = vlaneseq
  %v3195 = vshrl.u32 %v3194, 7
  %v3196 = vsub.s32 %v3193, %v3195
  %v3197 = vrot.slane %v3183, %v3196
  %v3198 = vcombine.low %v3190, %v3197
  %v3199 = vcombine.low %v2062, %v2069
  %v3200 = vcombine.low %v2076, %v2083
  %v3202 = vunpack.c.l.s4 1983009808
  %v3203 = vunpack.c.0.s8 %v3202
  %v3204 = vlaneseq
  %v3205 = vshrl.u32 %v3204, 7
  %v3206 = vsub.s32 %v3203, %v3205
  %v3207 = vrot.slane %v3199, %v3206
  %v3209 = vunpack.c.l.s4 1983009808
  %v3210 = vunpack.c.0.s8 %v3209
  %v3211 = vlaneseq
  %v3212 = vshrl.u32 %v3211, 7
  %v3213 = vsub.s32 %v3210, %v3212
  %v3214 = vrot.slane %v3200, %v3213
  %v3215 = vcombine.low %v3207, %v3214
  %v3216 = vcombine.low %v2090, %v2097
  %v3217 = vcombine.low %v2104, %v2111
  %v3219 = vunpack.c.l.s4 1983009808
  %v3220 = vunpack.c.0.s8 %v3219
  %v3221 = vlaneseq
  %v3222 = vshrl.u32 %v3221, 7
  %v3223 = vsub.s32 %v3220, %v3222
  %v3224 = vrot.slane %v3216, %v3223
  %v3226 = vunpack.c.l.s4 1983009808
  %v3227 = vunpack.c.0.s8 %v3226
  %v3228 = vlaneseq
  %v3229 = vshrl.u32 %v3228, 7
  %v3230 = vsub.s32 %v3227, %v3229
  %v3231 = vrot.slane %v3217, %v3230
  %v3232 = vcombine.low %v3224, %v3231
  %v3233 = vcombine.low %v2118, %v2125
  %v3234 = vcombine.low %v2132, %v2139
  %v3236 = vunpack.c.l.s4 1983009808
  %v3237 = vunpack.c.0.s8 %v3236
  %v3238 = vlaneseq
  %v3239 = vshrl.u32 %v3238, 7
  %v3240 = vsub.s32 %v3237, %v3239
  %v3241 = vrot.slane %v3233, %v3240
  %v3243 = vunpack.c.l.s4 1983009808
  %v3244 = vunpack.c.0.s8 %v3243
  %v3245 = vlaneseq
  %v3246 = vshrl.u32 %v3245, 7
  %v3247 = vsub.s32 %v3244, %v3246
  %v3248 = vrot.slane %v3234, %v3247
  %v3249 = vcombine.low %v3241, %v3248
  %v3250 = vcombine.low %v2146, %v2153
  %v3251 = vcombine.low %v2160, %v2167
  %v3253 = vunpack.c.l.s4 1983009808
  %v3254 = vunpack.c.0.s8 %v3253
  %v3255 = vlaneseq
  %v3256 = vshrl.u32 %v3255, 7
  %v3257 = vsub.s32 %v3254, %v3256
  %v3258 = vrot.slane %v3250, %v3257
  %v3260 = vunpack.c.l.s4 1983009808
  %v3261 = vunpack.c.0.s8 %v3260
  %v3262 = vlaneseq
  %v3263 = vshrl.u32 %v3262, 7
  %v3264 = vsub.s32 %v3261, %v3263
  %v3265 = vrot.slane %v3251, %v3264
  %v3266 = vcombine.low %v3258, %v3265
  %v3267 = vcombine.low %v2174, %v2181
  %v3268 = vcombine.low %v2188, %v2195
  %v3270 = vunpack.c.l.s4 1983009808
  %v3271 = vunpack.c.0.s8 %v3270
  %v3272 = vlaneseq
  %v3273 = vshrl.u32 %v3272, 7
  %v3274 = vsub.s32 %v3271, %v3273
  %v3275 = vrot.slane %v3267, %v3274
  %v3277 = vunpack.c.l.s4 1983009808
  %v3278 = vunpack.c.0.s8 %v3277
  %v3279 = vlaneseq
  %v3280 = vshrl.u32 %v3279, 7
  %v3281 = vsub.s32 %v3278, %v3280
  %v3282 = vrot.slane %v3268, %v3281
  %v3283 = vcombine.low %v3275, %v3282
  %3284 = vset.pattern.permute.xlu0 0
  %3285 = vperm.xlu0 %3284, %v2212
  %v3286 = vpop.permute.xlu0 %3285
  %3287 = vset.pattern.permute.xlu0 0
  %3288 = vperm.xlu0 %3287, %v2229
  %v3289 = vpop.permute.xlu0 %3288
  %3290 = vset.pattern.permute.xlu0 0
  %3291 = vperm.xlu0 %3290, %v2246
  %v3292 = vpop.permute.xlu0 %3291
  %3293 = vset.pattern.permute.xlu0 0
  %3294 = vperm.xlu0 %3293, %v2263
  %v3295 = vpop.permute.xlu0 %3294
  %3296 = vset.pattern.permute.xlu0 0
  %3297 = vperm.xlu0 %3296, %v2280
  %v3298 = vpop.permute.xlu0 %3297
  %3299 = vset.pattern.permute.xlu0 0
  %3300 = vperm.xlu0 %3299, %v2297
  %v3301 = vpop.permute.xlu0 %3300
  %3302 = vset.pattern.permute.xlu0 0
  %3303 = vperm.xlu0 %3302, %v2314
  %v3304 = vpop.permute.xlu0 %3303
  %3305 = vset.pattern.permute.xlu0 0
  %3306 = vperm.xlu0 %3305, %v2331
  %v3307 = vpop.permute.xlu0 %3306
  %3308 = vset.pattern.permute.xlu0 0
  %3309 = vperm.xlu0 %3308, %v2348
  %v3310 = vpop.permute.xlu0 %3309
  %3311 = vset.pattern.permute.xlu0 0
  %3312 = vperm.xlu0 %3311, %v2365
  %v3313 = vpop.permute.xlu0 %3312
  %3314 = vset.pattern.permute.xlu0 0
  %3315 = vperm.xlu0 %3314, %v2382
  %v3316 = vpop.permute.xlu0 %3315
  %3317 = vset.pattern.permute.xlu0 0
  %3318 = vperm.xlu0 %3317, %v2399
  %v3319 = vpop.permute.xlu0 %3318
  %3320 = vset.pattern.permute.xlu0 0
  %3321 = vperm.xlu0 %3320, %v2416
  %v3322 = vpop.permute.xlu0 %3321
  %3323 = vset.pattern.permute.xlu0 0
  %3324 = vperm.xlu0 %3323, %v2433
  %v3325 = vpop.permute.xlu0 %3324
  %3326 = vset.pattern.permute.xlu0 0
  %3327 = vperm.xlu0 %3326, %v2450
  %v3328 = vpop.permute.xlu0 %3327
  %3329 = vset.pattern.permute.xlu0 0
  %3330 = vperm.xlu0 %3329, %v2467
  %v3331 = vpop.permute.xlu0 %3330
  %3332 = vset.pattern.permute.xlu0 0
  %3333 = vperm.xlu0 %3332, %v2484
  %v3334 = vpop.permute.xlu0 %3333
  %3335 = vset.pattern.permute.xlu0 0
  %3336 = vperm.xlu0 %3335, %v2501
  %v3337 = vpop.permute.xlu0 %3336
  %3338 = vset.pattern.permute.xlu0 0
  %3339 = vperm.xlu0 %3338, %v2518
  %v3340 = vpop.permute.xlu0 %3339
  %3341 = vset.pattern.permute.xlu0 0
  %3342 = vperm.xlu0 %3341, %v2535
  %v3343 = vpop.permute.xlu0 %3342
  %3344 = vset.pattern.permute.xlu0 0
  %3345 = vperm.xlu0 %3344, %v2552
  %v3346 = vpop.permute.xlu0 %3345
  %3347 = vset.pattern.permute.xlu0 0
  %3348 = vperm.xlu0 %3347, %v2569
  %v3349 = vpop.permute.xlu0 %3348
  %3350 = vset.pattern.permute.xlu0 0
  %3351 = vperm.xlu0 %3350, %v2586
  %v3352 = vpop.permute.xlu0 %3351
  %3353 = vset.pattern.permute.xlu0 0
  %3354 = vperm.xlu0 %3353, %v2603
  %v3355 = vpop.permute.xlu0 %3354
  %3356 = vset.pattern.permute.xlu0 0
  %3357 = vperm.xlu0 %3356, %v2620
  %v3358 = vpop.permute.xlu0 %3357
  %3359 = vset.pattern.permute.xlu0 0
  %3360 = vperm.xlu0 %3359, %v2637
  %v3361 = vpop.permute.xlu0 %3360
  %3362 = vset.pattern.permute.xlu0 0
  %3363 = vperm.xlu0 %3362, %v2654
  %v3364 = vpop.permute.xlu0 %3363
  %3365 = vset.pattern.permute.xlu0 0
  %3366 = vperm.xlu0 %3365, %v2671
  %v3367 = vpop.permute.xlu0 %3366
  %3368 = vset.pattern.permute.xlu0 0
  %3369 = vperm.xlu0 %3368, %v2688
  %v3370 = vpop.permute.xlu0 %3369
  %3371 = vset.pattern.permute.xlu0 0
  %3372 = vperm.xlu0 %3371, %v2705
  %v3373 = vpop.permute.xlu0 %3372
  %3374 = vset.pattern.permute.xlu0 0
  %3375 = vperm.xlu0 %3374, %v2722
  %v3376 = vpop.permute.xlu0 %3375
  %3377 = vset.pattern.permute.xlu0 0
  %3378 = vperm.xlu0 %3377, %v2739
  %v3379 = vpop.permute.xlu0 %3378
  %3380 = vset.pattern.permute.xlu0 0
  %3381 = vperm.xlu0 %3380, %v2756
  %v3382 = vpop.permute.xlu0 %3381
  %3383 = vset.pattern.permute.xlu0 0
  %3384 = vperm.xlu0 %3383, %v2773
  %v3385 = vpop.permute.xlu0 %3384
  %3386 = vset.pattern.permute.xlu0 0
  %3387 = vperm.xlu0 %3386, %v2790
  %v3388 = vpop.permute.xlu0 %3387
  %3389 = vset.pattern.permute.xlu0 0
  %3390 = vperm.xlu0 %3389, %v2807
  %v3391 = vpop.permute.xlu0 %3390
  %3392 = vset.pattern.permute.xlu0 0
  %3393 = vperm.xlu0 %3392, %v2824
  %v3394 = vpop.permute.xlu0 %3393
  %3395 = vset.pattern.permute.xlu0 0
  %3396 = vperm.xlu0 %3395, %v2841
  %v3397 = vpop.permute.xlu0 %3396
  %3398 = vset.pattern.permute.xlu0 0
  %3399 = vperm.xlu0 %3398, %v2858
  %v3400 = vpop.permute.xlu0 %3399
  %3401 = vset.pattern.permute.xlu0 0
  %3402 = vperm.xlu0 %3401, %v2875
  %v3403 = vpop.permute.xlu0 %3402
  %3404 = vset.pattern.permute.xlu0 0
  %3405 = vperm.xlu0 %3404, %v2892
  %v3406 = vpop.permute.xlu0 %3405
  %3407 = vset.pattern.permute.xlu0 0
  %3408 = vperm.xlu0 %3407, %v2909
  %v3409 = vpop.permute.xlu0 %3408
  %3410 = vset.pattern.permute.xlu0 0
  %3411 = vperm.xlu0 %3410, %v2926
  %v3412 = vpop.permute.xlu0 %3411
  %3413 = vset.pattern.permute.xlu0 0
  %3414 = vperm.xlu0 %3413, %v2943
  %v3415 = vpop.permute.xlu0 %3414
  %3416 = vset.pattern.permute.xlu0 0
  %3417 = vperm.xlu0 %3416, %v2960
  %v3418 = vpop.permute.xlu0 %3417
  %3419 = vset.pattern.permute.xlu0 0
  %3420 = vperm.xlu0 %3419, %v2977
  %v3421 = vpop.permute.xlu0 %3420
  %3422 = vset.pattern.permute.xlu0 0
  %3423 = vperm.xlu0 %3422, %v2994
  %v3424 = vpop.permute.xlu0 %3423
  %3425 = vset.pattern.permute.xlu0 0
  %3426 = vperm.xlu0 %3425, %v3011
  %v3427 = vpop.permute.xlu0 %3426
  %3428 = vset.pattern.permute.xlu0 0
  %3429 = vperm.xlu0 %3428, %v3028
  %v3430 = vpop.permute.xlu0 %3429
  %3431 = vset.pattern.permute.xlu0 0
  %3432 = vperm.xlu0 %3431, %v3045
  %v3433 = vpop.permute.xlu0 %3432
  %3434 = vset.pattern.permute.xlu0 0
  %3435 = vperm.xlu0 %3434, %v3062
  %v3436 = vpop.permute.xlu0 %3435
  %3437 = vset.pattern.permute.xlu0 0
  %3438 = vperm.xlu0 %3437, %v3079
  %v3439 = vpop.permute.xlu0 %3438
  %3440 = vset.pattern.permute.xlu0 0
  %3441 = vperm.xlu0 %3440, %v3096
  %v3442 = vpop.permute.xlu0 %3441
  %3443 = vset.pattern.permute.xlu0 0
  %3444 = vperm.xlu0 %3443, %v3113
  %v3445 = vpop.permute.xlu0 %3444
  %3446 = vset.pattern.permute.xlu0 0
  %3447 = vperm.xlu0 %3446, %v3130
  %v3448 = vpop.permute.xlu0 %3447
  %3449 = vset.pattern.permute.xlu0 0
  %3450 = vperm.xlu0 %3449, %v3147
  %v3451 = vpop.permute.xlu0 %3450
  %3452 = vset.pattern.permute.xlu0 0
  %3453 = vperm.xlu0 %3452, %v3164
  %v3454 = vpop.permute.xlu0 %3453
  %3455 = vset.pattern.permute.xlu0 0
  %3456 = vperm.xlu0 %3455, %v3181
  %v3457 = vpop.permute.xlu0 %3456
  %3458 = vset.pattern.permute.xlu0 0
  %3459 = vperm.xlu0 %3458, %v3198
  %v3460 = vpop.permute.xlu0 %3459
  %3461 = vset.pattern.permute.xlu0 0
  %3462 = vperm.xlu0 %3461, %v3215
  %v3463 = vpop.permute.xlu0 %3462
  %3464 = vset.pattern.permute.xlu0 0
  %3465 = vperm.xlu0 %3464, %v3232
  %v3466 = vpop.permute.xlu0 %3465
  %3467 = vset.pattern.permute.xlu0 0
  %3468 = vperm.xlu0 %3467, %v3249
  %v3469 = vpop.permute.xlu0 %3468
  %3470 = vset.pattern.permute.xlu0 0
  %3471 = vperm.xlu0 %3470, %v3266
  %v3472 = vpop.permute.xlu0 %3471
  %3473 = vset.pattern.permute.xlu0 0
  %3474 = vperm.xlu0 %3473, %v3283
  %v3475 = vpop.permute.xlu0 %3474
  %v3476 = vlaneseq
  %v3477 = vand.u32 %v3476, 127
  %v3478 = vlaneseq
  %v3479 = vshrl.u32 %v3478, 7
  %v3480 = vsub.s32 %v3477, %v3479
  %v3481 = vrot.slane %v3286, %v3480
  %v3482 = vadd.s32 %v3477, 4294967288
  %v3483 = vlaneseq
  %v3484 = vshrl.u32 %v3483, 7
  %v3485 = vsub.s32 %v3482, %v3484
  %v3486 = vrot.slane %v3289, %v3485
  %vm3487 = vcmask 130112
  %v3488 = vsel %vm3487, %v3486, %v3481
  %v3489 = vadd.s32 %v3477, 4294967280
  %v3490 = vlaneseq
  %v3491 = vshrl.u32 %v3490, 7
  %v3492 = vsub.s32 %v3489, %v3491
  %v3493 = vrot.slane %v3292, %v3492
  %vm3494 = vcmask 195712
  %v3495 = vsel %vm3494, %v3493, %v3488
  %v3496 = vadd.s32 %v3477, 4294967272
  %v3497 = vlaneseq
  %v3498 = vshrl.u32 %v3497, 7
  %v3499 = vsub.s32 %v3496, %v3498
  %v3500 = vrot.slane %v3295, %v3499
  %vm3501 = vcmask 261312
  %v3502 = vsel %vm3501, %v3500, %v3495
  %v3503 = vadd.s32 %v3477, 4294967264
  %v3504 = vlaneseq
  %v3505 = vshrl.u32 %v3504, 7
  %v3506 = vsub.s32 %v3503, %v3505
  %v3507 = vrot.slane %v3298, %v3506
  %vm3508 = vcmask 326912
  %v3509 = vsel %vm3508, %v3507, %v3502
  %v3510 = vadd.s32 %v3477, 4294967256
  %v3511 = vlaneseq
  %v3512 = vshrl.u32 %v3511, 7
  %v3513 = vsub.s32 %v3510, %v3512
  %v3514 = vrot.slane %v3301, %v3513
  %vm3515 = vcmask 392512
  %v3516 = vsel %vm3515, %v3514, %v3509
  %v3517 = vadd.s32 %v3477, 4294967248
  %v3518 = vlaneseq
  %v3519 = vshrl.u32 %v3518, 7
  %v3520 = vsub.s32 %v3517, %v3519
  %v3521 = vrot.slane %v3304, %v3520
  %vm3522 = vcmask 458112
  %v3523 = vsel %vm3522, %v3521, %v3516
  %v3524 = vadd.s32 %v3477, 4294967240
  %v3525 = vlaneseq
  %v3526 = vshrl.u32 %v3525, 7
  %v3527 = vsub.s32 %v3524, %v3526
  %v3528 = vrot.slane %v3307, %v3527
  %vm3529 = vcmask 523712
  %v3530 = vsel %vm3529, %v3528, %v3523
  %v3531 = vadd.s32 %v3477, 4294967232
  %v3532 = vlaneseq
  %v3533 = vshrl.u32 %v3532, 7
  %v3534 = vsub.s32 %v3531, %v3533
  %v3535 = vrot.slane %v3310, %v3534
  %vm3536 = vcmask 589312
  %v3537 = vsel %vm3536, %v3535, %v3530
  %v3538 = vadd.s32 %v3477, 4294967224
  %v3539 = vlaneseq
  %v3540 = vshrl.u32 %v3539, 7
  %v3541 = vsub.s32 %v3538, %v3540
  %v3542 = vrot.slane %v3313, %v3541
  %vm3543 = vcmask 654912
  %v3544 = vsel %vm3543, %v3542, %v3537
  %v3545 = vadd.s32 %v3477, 4294967216
  %v3546 = vlaneseq
  %v3547 = vshrl.u32 %v3546, 7
  %v3548 = vsub.s32 %v3545, %v3547
  %v3549 = vrot.slane %v3316, %v3548
  %vm3550 = vcmask 720512
  %v3551 = vsel %vm3550, %v3549, %v3544
  %v3552 = vadd.s32 %v3477, 4294967208
  %v3553 = vlaneseq
  %v3554 = vshrl.u32 %v3553, 7
  %v3555 = vsub.s32 %v3552, %v3554
  %v3556 = vrot.slane %v3319, %v3555
  %vm3557 = vcmask 786112
  %v3558 = vsel %vm3557, %v3556, %v3551
  %v3559 = vadd.s32 %v3477, 4294967200
  %v3560 = vlaneseq
  %v3561 = vshrl.u32 %v3560, 7
  %v3562 = vsub.s32 %v3559, %v3561
  %v3563 = vrot.slane %v3322, %v3562
  %vm3564 = vcmask 851712
  %v3565 = vsel %vm3564, %v3563, %v3558
  %v3566 = vadd.s32 %v3477, 4294967192
  %v3567 = vlaneseq
  %v3568 = vshrl.u32 %v3567, 7
  %v3569 = vsub.s32 %v3566, %v3568
  %v3570 = vrot.slane %v3325, %v3569
  %vm3571 = vcmask 917312
  %v3572 = vsel %vm3571, %v3570, %v3565
  %v3573 = vadd.s32 %v3477, 4294967184
  %v3574 = vlaneseq
  %v3575 = vshrl.u32 %v3574, 7
  %v3576 = vsub.s32 %v3573, %v3575
  %v3577 = vrot.slane %v3328, %v3576
  %vm3578 = vcmask 982912
  %v3579 = vsel %vm3578, %v3577, %v3572
  %v3580 = vadd.s32 %v3477, 4294967176
  %v3581 = vlaneseq
  %v3582 = vshrl.u32 %v3581, 7
  %v3583 = vsub.s32 %v3580, %v3582
  %v3584 = vrot.slane %v3331, %v3583
  %vm3585 = vcmask 1048512
  %v3586 = vsel %vm3585, %v3584, %v3579
  %v3587 = vlaneseq
  %v3588 = vshrl.u32 %v3587, 7
  %v3589 = vsub.s32 %v3477, %v3588
  %v3590 = vrot.slane %v3334, %v3589
  %v3591 = vlaneseq
  %v3592 = vshrl.u32 %v3591, 7
  %v3593 = vsub.s32 %v3482, %v3592
  %v3594 = vrot.slane %v3337, %v3593
  %v3595 = vsel %vm3487, %v3594, %v3590
  %v3596 = vlaneseq
  %v3597 = vshrl.u32 %v3596, 7
  %v3598 = vsub.s32 %v3489, %v3597
  %v3599 = vrot.slane %v3340, %v3598
  %v3600 = vsel %vm3494, %v3599, %v3595
  %v3601 = vlaneseq
  %v3602 = vshrl.u32 %v3601, 7
  %v3603 = vsub.s32 %v3496, %v3602
  %v3604 = vrot.slane %v3343, %v3603
  %v3605 = vsel %vm3501, %v3604, %v3600
  %v3606 = vlaneseq
  %v3607 = vshrl.u32 %v3606, 7
  %v3608 = vsub.s32 %v3503, %v3607
  %v3609 = vrot.slane %v3346, %v3608
  %v3610 = vsel %vm3508, %v3609, %v3605
  %v3611 = vlaneseq
  %v3612 = vshrl.u32 %v3611, 7
  %v3613 = vsub.s32 %v3510, %v3612
  %v3614 = vrot.slane %v3349, %v3613
  %v3615 = vsel %vm3515, %v3614, %v3610
  %v3616 = vlaneseq
  %v3617 = vshrl.u32 %v3616, 7
  %v3618 = vsub.s32 %v3517, %v3617
  %v3619 = vrot.slane %v3352, %v3618
  %v3620 = vsel %vm3522, %v3619, %v3615
  %v3621 = vlaneseq
  %v3622 = vshrl.u32 %v3621, 7
  %v3623 = vsub.s32 %v3524, %v3622
  %v3624 = vrot.slane %v3355, %v3623
  %v3625 = vsel %vm3529, %v3624, %v3620
  %v3626 = vlaneseq
  %v3627 = vshrl.u32 %v3626, 7
  %v3628 = vsub.s32 %v3531, %v3627
  %v3629 = vrot.slane %v3358, %v3628
  %v3630 = vsel %vm3536, %v3629, %v3625
  %v3631 = vlaneseq
  %v3632 = vshrl.u32 %v3631, 7
  %v3633 = vsub.s32 %v3538, %v3632
  %v3634 = vrot.slane %v3361, %v3633
  %v3635 = vsel %vm3543, %v3634, %v3630
  %v3636 = vlaneseq
  %v3637 = vshrl.u32 %v3636, 7
  %v3638 = vsub.s32 %v3545, %v3637
  %v3639 = vrot.slane %v3364, %v3638
  %v3640 = vsel %vm3550, %v3639, %v3635
  %v3641 = vlaneseq
  %v3642 = vshrl.u32 %v3641, 7
  %v3643 = vsub.s32 %v3552, %v3642
  %v3644 = vrot.slane %v3367, %v3643
  %v3645 = vsel %vm3557, %v3644, %v3640
  %v3646 = vlaneseq
  %v3647 = vshrl.u32 %v3646, 7
  %v3648 = vsub.s32 %v3559, %v3647
  %v3649 = vrot.slane %v3370, %v3648
  %v3650 = vsel %vm3564, %v3649, %v3645
  %v3651 = vlaneseq
  %v3652 = vshrl.u32 %v3651, 7
  %v3653 = vsub.s32 %v3566, %v3652
  %v3654 = vrot.slane %v3373, %v3653
  %v3655 = vsel %vm3571, %v3654, %v3650
  %v3656 = vlaneseq
  %v3657 = vshrl.u32 %v3656, 7
  %v3658 = vsub.s32 %v3573, %v3657
  %v3659 = vrot.slane %v3376, %v3658
  %v3660 = vsel %vm3578, %v3659, %v3655
  %v3661 = vlaneseq
  %v3662 = vshrl.u32 %v3661, 7
  %v3663 = vsub.s32 %v3580, %v3662
  %v3664 = vrot.slane %v3379, %v3663
  %v3665 = vsel %vm3585, %v3664, %v3660
  %v3666 = vlaneseq
  %v3667 = vshrl.u32 %v3666, 7
  %v3668 = vsub.s32 %v3477, %v3667
  %v3669 = vrot.slane %v3382, %v3668
  %v3670 = vlaneseq
  %v3671 = vshrl.u32 %v3670, 7
  %v3672 = vsub.s32 %v3482, %v3671
  %v3673 = vrot.slane %v3385, %v3672
  %v3674 = vsel %vm3487, %v3673, %v3669
  %v3675 = vlaneseq
  %v3676 = vshrl.u32 %v3675, 7
  %v3677 = vsub.s32 %v3489, %v3676
  %v3678 = vrot.slane %v3388, %v3677
  %v3679 = vsel %vm3494, %v3678, %v3674
  %v3680 = vlaneseq
  %v3681 = vshrl.u32 %v3680, 7
  %v3682 = vsub.s32 %v3496, %v3681
  %v3683 = vrot.slane %v3391, %v3682
  %v3684 = vsel %vm3501, %v3683, %v3679
  %v3685 = vlaneseq
  %v3686 = vshrl.u32 %v3685, 7
  %v3687 = vsub.s32 %v3503, %v3686
  %v3688 = vrot.slane %v3394, %v3687
  %v3689 = vsel %vm3508, %v3688, %v3684
  %v3690 = vlaneseq
  %v3691 = vshrl.u32 %v3690, 7
  %v3692 = vsub.s32 %v3510, %v3691
  %v3693 = vrot.slane %v3397, %v3692
  %v3694 = vsel %vm3515, %v3693, %v3689
  %v3695 = vlaneseq
  %v3696 = vshrl.u32 %v3695, 7
  %v3697 = vsub.s32 %v3517, %v3696
  %v3698 = vrot.slane %v3400, %v3697
  %v3699 = vsel %vm3522, %v3698, %v3694
  %v3700 = vlaneseq
  %v3701 = vshrl.u32 %v3700, 7
  %v3702 = vsub.s32 %v3524, %v3701
  %v3703 = vrot.slane %v3403, %v3702
  %v3704 = vsel %vm3529, %v3703, %v3699
  %v3705 = vlaneseq
  %v3706 = vshrl.u32 %v3705, 7
  %v3707 = vsub.s32 %v3531, %v3706
  %v3708 = vrot.slane %v3406, %v3707
  %v3709 = vsel %vm3536, %v3708, %v3704
  %v3710 = vlaneseq
  %v3711 = vshrl.u32 %v3710, 7
  %v3712 = vsub.s32 %v3538, %v3711
  %v3713 = vrot.slane %v3409, %v3712
  %v3714 = vsel %vm3543, %v3713, %v3709
  %v3715 = vlaneseq
  %v3716 = vshrl.u32 %v3715, 7
  %v3717 = vsub.s32 %v3545, %v3716
  %v3718 = vrot.slane %v3412, %v3717
  %v3719 = vsel %vm3550, %v3718, %v3714
  %v3720 = vlaneseq
  %v3721 = vshrl.u32 %v3720, 7
  %v3722 = vsub.s32 %v3552, %v3721
  %v3723 = vrot.slane %v3415, %v3722
  %v3724 = vsel %vm3557, %v3723, %v3719
  %v3725 = vlaneseq
  %v3726 = vshrl.u32 %v3725, 7
  %v3727 = vsub.s32 %v3559, %v3726
  %v3728 = vrot.slane %v3418, %v3727
  %v3729 = vsel %vm3564, %v3728, %v3724
  %v3730 = vlaneseq
  %v3731 = vshrl.u32 %v3730, 7
  %v3732 = vsub.s32 %v3566, %v3731
  %v3733 = vrot.slane %v3421, %v3732
  %v3734 = vsel %vm3571, %v3733, %v3729
  %v3735 = vlaneseq
  %v3736 = vshrl.u32 %v3735, 7
  %v3737 = vsub.s32 %v3573, %v3736
  %v3738 = vrot.slane %v3424, %v3737
  %v3739 = vsel %vm3578, %v3738, %v3734
  %v3740 = vlaneseq
  %v3741 = vshrl.u32 %v3740, 7
  %v3742 = vsub.s32 %v3580, %v3741
  %v3743 = vrot.slane %v3427, %v3742
  %v3744 = vsel %vm3585, %v3743, %v3739
  %v3745 = vlaneseq
  %v3746 = vshrl.u32 %v3745, 7
  %v3747 = vsub.s32 %v3477, %v3746
  %v3748 = vrot.slane %v3430, %v3747
  %v3749 = vlaneseq
  %v3750 = vshrl.u32 %v3749, 7
  %v3751 = vsub.s32 %v3482, %v3750
  %v3752 = vrot.slane %v3433, %v3751
  %v3753 = vsel %vm3487, %v3752, %v3748
  %v3754 = vlaneseq
  %v3755 = vshrl.u32 %v3754, 7
  %v3756 = vsub.s32 %v3489, %v3755
  %v3757 = vrot.slane %v3436, %v3756
  %v3758 = vsel %vm3494, %v3757, %v3753
  %v3759 = vlaneseq
  %v3760 = vshrl.u32 %v3759, 7
  %v3761 = vsub.s32 %v3496, %v3760
  %v3762 = vrot.slane %v3439, %v3761
  %v3763 = vsel %vm3501, %v3762, %v3758
  %v3764 = vlaneseq
  %v3765 = vshrl.u32 %v3764, 7
  %v3766 = vsub.s32 %v3503, %v3765
  %v3767 = vrot.slane %v3442, %v3766
  %v3768 = vsel %vm3508, %v3767, %v3763
  %v3769 = vlaneseq
  %v3770 = vshrl.u32 %v3769, 7
  %v3771 = vsub.s32 %v3510, %v3770
  %v3772 = vrot.slane %v3445, %v3771
  %v3773 = vsel %vm3515, %v3772, %v3768
  %v3774 = vlaneseq
  %v3775 = vshrl.u32 %v3774, 7
  %v3776 = vsub.s32 %v3517, %v3775
  %v3777 = vrot.slane %v3448, %v3776
  %v3778 = vsel %vm3522, %v3777, %v3773
  %v3779 = vlaneseq
  %v3780 = vshrl.u32 %v3779, 7
  %v3781 = vsub.s32 %v3524, %v3780
  %v3782 = vrot.slane %v3451, %v3781
  %v3783 = vsel %vm3529, %v3782, %v3778
  %v3784 = vlaneseq
  %v3785 = vshrl.u32 %v3784, 7
  %v3786 = vsub.s32 %v3531, %v3785
  %v3787 = vrot.slane %v3454, %v3786
  %v3788 = vsel %vm3536, %v3787, %v3783
  %v3789 = vlaneseq
  %v3790 = vshrl.u32 %v3789, 7
  %v3791 = vsub.s32 %v3538, %v3790
  %v3792 = vrot.slane %v3457, %v3791
  %v3793 = vsel %vm3543, %v3792, %v3788
  %v3794 = vlaneseq
  %v3795 = vshrl.u32 %v3794, 7
  %v3796 = vsub.s32 %v3545, %v3795
  %v3797 = vrot.slane %v3460, %v3796
  %v3798 = vsel %vm3550, %v3797, %v3793
  %v3799 = vlaneseq
  %v3800 = vshrl.u32 %v3799, 7
  %v3801 = vsub.s32 %v3552, %v3800
  %v3802 = vrot.slane %v3463, %v3801
  %v3803 = vsel %vm3557, %v3802, %v3798
  %v3804 = vlaneseq
  %v3805 = vshrl.u32 %v3804, 7
  %v3806 = vsub.s32 %v3559, %v3805
  %v3807 = vrot.slane %v3466, %v3806
  %v3808 = vsel %vm3564, %v3807, %v3803
  %v3809 = vlaneseq
  %v3810 = vshrl.u32 %v3809, 7
  %v3811 = vsub.s32 %v3566, %v3810
  %v3812 = vrot.slane %v3469, %v3811
  %v3813 = vsel %vm3571, %v3812, %v3808
  %v3814 = vlaneseq
  %v3815 = vshrl.u32 %v3814, 7
  %v3816 = vsub.s32 %v3573, %v3815
  %v3817 = vrot.slane %v3472, %v3816
  %v3818 = vsel %vm3578, %v3817, %v3813
  %v3819 = vlaneseq
  %v3820 = vshrl.u32 %v3819, 7
  %v3821 = vsub.s32 %v3580, %v3820
  %v3822 = vrot.slane %v3475, %v3821
  %v3823 = vsel %vm3585, %v3822, %v3818
  %vm3824 = vcmask 1041409
  %v3825 = vsel %vm3824, %v3744, %v3586
  %v3826 = vsel %vm3824, %v3823, %v3665
  %v3827 = vcombine.low %v3825, %v3826
  %v3829 = vunpack.c.l.s4 1983009808
  %v3830 = vunpack.c.0.s8 %v3829
  %v3831 = vlaneseq
  %v3832 = vshrl.u32 %v3831, 7
  %v3833 = vsub.s32 %v3830, %v3832
  %v3834 = vrot.slane %v3827, %v3833
  %v3836 = vadd.f32 %v19, %v3834
  %3837 = vst [vmem:[#allocation2] sm:$0xf] %v3836
  // Predicated region
  $region18: #{offset_head_forward.2} parent=0 // pred_check
    %p3838 = pneg %p14
  $region19: #{offset_head_forward.2} parent=0 // pred_check_branch
    %3840 = sbr.rel (%p3838) target = $region21
  $region20: #{offset_head_forward.2} parent=0 // pred_region
    %v3841 = vld [vmem:[#allocation2] sm:$0xf]
    %v3842 = vmul.f32 %v3841, 0.00390625
    %v3843 = vld [vmem:[%s1] sm:$0xff]
    %v3844 = vld [vmem:[%s1 + $0x8] sm:$0xff]
    %v3845 = vld [vmem:[%s1 + $0x10] sm:$0xff]
    %v3846 = vld [vmem:[%s1 + $0x18] sm:$0xff]
    %v3847 = vld [vmem:[%s1 + $0x20] sm:$0xff]
    %v3848 = vld [vmem:[%s1 + $0x28] sm:$0xff]
    %v3849 = vld [vmem:[%s1 + $0x30] sm:$0xff]
    %v3850 = vld [vmem:[%s1 + $0x38] sm:$0xff]
    %v3851 = vld [vmem:[%s1 + $0x40] sm:$0xff]
    %v3852 = vld [vmem:[%s1 + $0x48] sm:$0xff]
    %v3853 = vld [vmem:[%s1 + $0x50] sm:$0xff]
    %v3854 = vld [vmem:[%s1 + $0x58] sm:$0xff]
    %v3855 = vld [vmem:[%s1 + $0x60] sm:$0xff]
    %v3856 = vld [vmem:[%s1 + $0x68] sm:$0xff]
    %v3857 = vld [vmem:[%s1 + $0x70] sm:$0xff]
    %v3858 = vld [vmem:[%s1 + $0x78] sm:$0xff]
    %v3859 = vld [vmem:[%s1 + $0x80] sm:$0xff]
    %v3860 = vld [vmem:[%s1 + $0x88] sm:$0xff]
    %v3861 = vld [vmem:[%s1 + $0x90] sm:$0xff]
    %v3862 = vld [vmem:[%s1 + $0x98] sm:$0xff]
    %v3863 = vld [vmem:[%s1 + $0xa0] sm:$0xff]
    %v3864 = vld [vmem:[%s1 + $0xa8] sm:$0xff]
    %v3865 = vld [vmem:[%s1 + $0xb0] sm:$0xff]
    %v3866 = vld [vmem:[%s1 + $0xb8] sm:$0xff]
    %v3867 = vld [vmem:[%s1 + $0xc0] sm:$0xff]
    %v3868 = vld [vmem:[%s1 + $0xc8] sm:$0xff]
    %v3869 = vld [vmem:[%s1 + $0xd0] sm:$0xff]
    %v3870 = vld [vmem:[%s1 + $0xd8] sm:$0xff]
    %v3871 = vld [vmem:[%s1 + $0xe0] sm:$0xff]
    %v3872 = vld [vmem:[%s1 + $0xe8] sm:$0xff]
    %v3873 = vld [vmem:[%s1 + $0xf0] sm:$0xff]
    %v3874 = vld [vmem:[%s1 + $0xf8] sm:$0xff]
    %v3875 = vld [vmem:[%s2] sm:$0x1]
    %v3877 = vlaneseq
    %v3878 = vshrl.u32 %v3877, 7
    %v3879 = vsub.s32 0, %v3878
    %v3880 = vrot.slane %v3875, %v3879
    %v3884 = vunpack.c.l.s4 1983009808
    %v3885 = vunpack.c.0.s8 %v3884
    %v3886 = vlaneseq
    %v3887 = vshrl.u32 %v3886, 7
    %v3888 = vsub.s32 %v3885, %v3887
    %v3889 = vrot.slane %v3842, %v3888
    %v3890 = vcombine.high %v3889, %v3889
    %3893 = vmatprep.subr.mxu0 0.0
    %3894 = vmatpush1.msra.mxu0 %v3843
    %3895 = vmatprep.subr.mxu0 0.0
    %3896 = vmatpush1.msra.mxu0 %v3844
    %3897 = vmatprep.subr.mxu0 0.0
    %3898 = vmatpush1.msra.mxu0 %v3845
    %3899 = vmatprep.subr.mxu0 0.0
    %3900 = vmatpush1.msra.mxu0 %v3846
    %3901 = vmatprep.subr.mxu0 0.0
    %3902 = vmatpush1.msra.mxu0 %v3847
    %3903 = vmatprep.subr.mxu0 0.0
    %3904 = vmatpush1.msra.mxu0 %v3848
    %3905 = vmatprep.subr.mxu0 0.0
    %3906 = vmatpush1.msra.mxu0 %v3849
    %3907 = vmatprep.subr.mxu0 0.0
    %3908 = vmatpush1.msra.mxu0 %v3850
    %3909 = vmatprep.subr.mxu0 0.0
    %3910 = vmatpush1.msra.mxu0 %v3851
    %3911 = vmatprep.subr.mxu0 0.0
    %3912 = vmatpush1.msra.mxu0 %v3852
    %3913 = vmatprep.subr.mxu0 0.0
    %3914 = vmatpush1.msra.mxu0 %v3853
    %3915 = vmatprep.subr.mxu0 0.0
    %3916 = vmatpush1.msra.mxu0 %v3854
    %3917 = vmatprep.subr.mxu0 0.0
    %3918 = vmatpush1.msra.mxu0 %v3855
    %3919 = vmatprep.subr.mxu0 0.0
    %3920 = vmatpush1.msra.mxu0 %v3856
    %3921 = vmatprep.subr.mxu0 0.0
    %3922 = vmatpush1.msra.mxu0 %v3857
    %3923 = vmatprep.subr.mxu0 0.0
    %3924 = vmatpush1.msra.mxu0 %v3858
    %3925 = vmatprep.subr.mxu0 0.0
    %3926 = vmatpush1.msra.mxu0 %v3859
    %3927 = vmatprep.subr.mxu0 0.0
    %3928 = vmatpush1.msra.mxu0 %v3860
    %3929 = vmatprep.subr.mxu0 0.0
    %3930 = vmatpush1.msra.mxu0 %v3861
    %3931 = vmatprep.subr.mxu0 0.0
    %3932 = vmatpush1.msra.mxu0 %v3862
    %3933 = vmatprep.subr.mxu0 0.0
    %3934 = vmatpush1.msra.mxu0 %v3863
    %3935 = vmatprep.subr.mxu0 0.0
    %3936 = vmatpush1.msra.mxu0 %v3864
    %3937 = vmatprep.subr.mxu0 0.0
    %3938 = vmatpush1.msra.mxu0 %v3865
    %3939 = vmatprep.subr.mxu0 0.0
    %3940 = vmatpush1.msra.mxu0 %v3866
    %3941 = vmatprep.subr.mxu0 0.0
    %3942 = vmatpush1.msra.mxu0 %v3867
    %3943 = vmatprep.subr.mxu0 0.0
    %3944 = vmatpush1.msra.mxu0 %v3868
    %3945 = vmatprep.subr.mxu0 0.0
    %3946 = vmatpush1.msra.mxu0 %v3869
    %3947 = vmatprep.subr.mxu0 0.0
    %3948 = vmatpush1.msra.mxu0 %v3870
    %3949 = vmatprep.subr.mxu0 0.0
    %3950 = vmatpush1.msra.mxu0 %v3871
    %3951 = vmatprep.subr.mxu0 0.0
    %3952 = vmatpush1.msra.mxu0 %v3872
    %3953 = vmatprep.subr.mxu0 0.0
    %3954 = vmatpush1.msra.mxu0 %v3873
    %3955 = vmatprep.subr.mxu0 0.0
    %3956 = vmatpush1.msra.mxu0 %v3874
    %3957 = vmatprep.mubr.f32.mxu0 %v3890
    %3958 = vmatmul.mubr.f32.gmra.mrb[0].mxu0 %v3889
    %v3959 = vpop.f32.mrb[0].mxu0
    %v3960 = vadd.f32 %v3880, %v3959
    %v3961 = vpop.f32.mrb[0].mxu0
    %3962 = vdwg.mxu0
    %v3963 = vmul.f32 %v3960, 0.005
    %v3964 = vmax.f32 %v3963, -1.0
    %v3965 = vmin.f32 %v3964, 1.0
    %v3966 = vsub.f32 0.0, %v3965
    %v3967 = vmax.f32 %v3966, 0.0
    %v3968 = vand.u32 2147483647, %v3965
    %v3969 = vsub.f32 1.0, %v3968
    %v3970 = vmax.f32 %v3965, 0.0
    %3972 = vrot.lane.b32.xlu0 %v3969, 2
    %v3973 = vpop.permute.xlu0 %3972
    %3976 = vrot.lane.b32.xlu0 %v3970, 4
    %v3977 = vpop.permute.xlu0 %3976
    %vm3979 = vcmask 15360
    %v3980 = vsel %vm3979, %v3967, %v3973
    %vm3981 = vcmask 31744
    %v3982 = vsel %vm3981, %v3980, %v3977
    %vm3983 = vcmask 48128
    %v3984 = vsel %vm3983, %v3982, 0.0
    %vm3985 = vcmask 58368
    %3986 = vst.msk [vmem:[%s3] sm:$0x3] %vm3985, %v3984
  $region21: #{offset_head_forward.2} parent=0 // pred_fallthru
    _
  // Predicated region
  $region22: #{offset_head_forward.2} parent=0 // pred_check
    _
  $region23: #{offset_head_forward.2} parent=0 // pred_check_branch
    %3988 = sbr.rel (0) target = $region25
  $region24: #{offset_head_forward.2} parent=0 // pred_region
    _
  $region25: #{offset_head_forward.2} parent=0 // pred_fallthru
    _
  // Predicated region
  $region26: #{offset_head_forward.2} parent=0 // pred_check
    _
  $region27: #{offset_head_forward.2} parent=0 // pred_check_branch
    %3990 = sbr.rel (0) target = $region29
  $region28: #{offset_head_forward.2} parent=0 // pred_region
    _
  $region29: #{offset_head_forward.2} parent=0 // pred_fallthru
    _

// kernel: offset_head_forward.3
$region0: #{offset_head_forward.3}
  #allocation0 [shape = 'u32[]', space=smem, size = 0x4, offset = 0x4, fixed_abs, tag = 'smem constant byte address 0x4 - core index']
  #allocation1 [shape = 'u32[144,128]{1,0:T(1,128)}', space=vmem, size = 0x12000, scoped, tag = 'internal scratch']
  %s0 = inlined_call_operand.vmem [shape: f32[2,8], index: 0, kind: input, shape index: {}]
  %s1 = inlined_call_operand.vmem [shape: f32[8,256], index: 1, kind: input, shape index: {}]
  %s2 = inlined_call_operand.vmem [shape: f32[2,256,256], index: 2, kind: input, shape index: {}]
  %s3 = inlined_call_operand.vmem [shape: f32[2,256,256], index: 3, kind: output, shape index: {}]
  %s4 = sld [smem:[#allocation0]]
  $region49: #{offset_head_forward.3} parent=0
    _
  %s6 = ssub.s32 1, %s4
  %s7 = scalar_select 0, %s6, %s4
  $region1: #{offset_head_forward.3} parent=0
    #allocation2 [shape = 'u8[1024]{0}', space=smem, size = 0x400, scoped, tag = 'input window, operand 0, single buffered']
    #allocation3 [shape = 's32[2]{0}', space=sflag, size = 0x8, scoped, tag = 'scoped memory for offset_head_forward.3']
    %8 = vsyncpa [#allocation3], 0
    loop: start=0, step=1, limit=4
    $region2: #{offset_head_forward.3} parent=1 // loop_pre_header
      _
    $region3: #{offset_head_forward.3} parent=1 // loop_header
      %s10 = sphi 0, %s14
      %p11 = scmp.ge.s32.totalorder %s10, 4
      %s17 = sphi 0, %s29
      %s18 = sphi 0, %s25
      %s19 = sphi 0, %s17
      %s20 = sphi 0, %s18
      %s21 = sphi 0, %s19
      %s22 = sphi 0, %s20
      %s30 = sphi 0, %s30
      %s32 = sphi 0, %s30
      %s33 = sphi 0, %s32
      %s47 = sphi 0, %s33
      %s51 = sphi 0, %s51
      %s53 = sphi 0, %s51
      %s54 = sphi 0, %s53
      %s68 = sphi 0, %s54
      %s76 = sphi 0, %s78
      %s79 = sphi 0, %s76
      %s80 = sphi 0, %s79
      %s96 = sphi 0, %s80
      %s104 = sphi 0, %s106
      %s107 = sphi 0, %s104
      %s108 = sphi 0, %s107
      %s124 = sphi 0, %s108
    $region4: #{offset_head_forward.3} parent=1 // loop_header_branch
      %13 = sbr.rel (%p11) target = $region8
    $region5: #{offset_head_forward.3} parent=1 // loop_body
      %s15 = ssub.s32 %s10, 1
      %s16 = ssub.s32 %s10, 2
      %s23 = sadd.s32 1, %s18
      %p24 = scmp.ge.s32.totalorder %s23, 1
      %s25 = scalar_select %p24, 0, %s23
      %s26 = sadd.s32 1, %s17
      %s27 = scalar_select %p24, %s26, %s17
      %p28 = scmp.ge.s32.totalorder %s27, 2
      %s29 = scalar_select %p28, 0, %s27
      %s31 = sadd.s32 %s30, 1
      %p34 = scmp.eq.s32.totalorder %s10, 1
      %p35 = scmp.ne.s32.totalorder %s30, %s32
      %p36 = scmp.eq.s32.totalorder %s10, 0
      %p37 = por %p35, %p36
      %p38 = scmp.ne.s32.totalorder %s30, %s32
      %p39 = scmp.eq.s32.totalorder %s15, 1
      %p40 = por %p38, %p39
      %p41 = scmp.ne.s32.totalorder %s32, %s33
      %p42 = scmp.eq.s32.totalorder %s15, 0
      %p43 = por %p41, %p42
      %p44 = scmp.ne.s32.totalorder %s32, %s33
      %p45 = scmp.eq.s32.totalorder %s16, 1
      %p46 = por %p44, %p45
      %p48 = scmp.ne.s32.totalorder %s33, %s47
      %p49 = scmp.eq.s32.totalorder %s16, 0
      %p50 = por %p48, %p49
      %s52 = sadd.s32 %s51, 1
      %p55 = scmp.eq.s32.totalorder %s10, 1
      %p56 = scmp.ne.s32.totalorder %s51, %s53
      %p57 = scmp.eq.s32.totalorder %s10, 0
      %p58 = por %p56, %p57
      %p59 = scmp.ne.s32.totalorder %s51, %s53
      %p60 = scmp.eq.s32.totalorder %s15, 1
      %p61 = por %p59, %p60
      %p62 = scmp.ne.s32.totalorder %s53, %s54
      %p63 = scmp.eq.s32.totalorder %s15, 0
      %p64 = por %p62, %p63
      %p65 = scmp.ne.s32.totalorder %s53, %s54
      %p66 = scmp.eq.s32.totalorder %s16, 1
      %p67 = por %p65, %p66
      %p69 = scmp.ne.s32.totalorder %s54, %s68
      %p70 = scmp.eq.s32.totalorder %s16, 0
      %p71 = por %p69, %p70
      %s72 = ssub.s32 %s17, %s29
      %s73 = ssub.s32 %s18, %s25
      %s74 = sor.u32 %s72, %s73
      %p75 = scmp.eq.s32.totalorder %s74, 0
      %s77 = sadd.s32 %s76, 1
      %s78 = scalar_select %p75, %s76, %s77
      %p81 = pneg %p75
      %p82 = scmp.eq.s32.totalorder %s10, 1
      %p83 = por %p81, %p82
      %p84 = scmp.ne.s32.totalorder %s76, %s79
      %p85 = scmp.eq.s32.totalorder %s10, 0
      %p86 = por %p84, %p85
      %p87 = scmp.ne.s32.totalorder %s76, %s79
      %p88 = scmp.eq.s32.totalorder %s15, 1
      %p89 = por %p87, %p88
      %p90 = scmp.ne.s32.totalorder %s79, %s80
      %p91 = scmp.eq.s32.totalorder %s15, 0
      %p92 = por %p90, %p91
      %p93 = scmp.ne.s32.totalorder %s79, %s80
      %p94 = scmp.eq.s32.totalorder %s16, 1
      %p95 = por %p93, %p94
      %p97 = scmp.ne.s32.totalorder %s80, %s96
      %p98 = scmp.eq.s32.totalorder %s16, 0
      %p99 = por %p97, %p98
      %s100 = ssub.s32 %s17, %s29
      %s101 = ssub.s32 %s18, %s25
      %s102 = sor.u32 %s100, %s101
      %p103 = scmp.eq.s32.totalorder %s102, 0
      %s105 = sadd.s32 %s104, 1
      %s106 = scalar_select %p103, %s104, %s105
      %p109 = pneg %p103
      %p110 = scmp.eq.s32.totalorder %s10, 1
      %p111 = por %p109, %p110
      %p112 = scmp.ne.s32.totalorder %s104, %s107
      %p113 = scmp.eq.s32.totalorder %s10, 0
      %p114 = por %p112, %p113
      %p115 = scmp.ne.s32.totalorder %s104, %s107
      %p116 = scmp.eq.s32.totalorder %s15, 1
      %p117 = por %p115, %p116
      %p118 = scmp.ne.s32.totalorder %s107, %s108
      %p119 = scmp.eq.s32.totalorder %s15, 0
      %p120 = por %p118, %p119
      %p121 = scmp.ne.s32.totalorder %s107, %s108
      %p122 = scmp.eq.s32.totalorder %s16, 1
      %p123 = por %p121, %p122
      %p125 = scmp.ne.s32.totalorder %s108, %s124
      %p126 = scmp.eq.s32.totalorder %s16, 0
      %p127 = por %p125, %p126
      %p128 = scmp.le.s32.totalorder 1, %s10
      %p129 = scmp.lt.s32.totalorder %s10, 3
      %p130 = pnand %p128, %p129
      %p131 = pneg %p130
      // Predicated region
      $region9: #{offset_head_forward.3} parent=5 // pred_check
        _
      $region10: #{offset_head_forward.3} parent=5 // pred_check_branch
        %133 = sbr.rel (%p130) target = $region12
      $region11: #{offset_head_forward.3} parent=5 // pred_region
        %s134 = ssub.s32 %s10, 1
        // Predicated region
        $region13: #{offset_head_forward.3} parent=11 // pred_check
          %p135 = pneg %p43
        $region14: #{offset_head_forward.3} parent=11 // pred_check_branch
          %137 = sbr.rel (%p135) target = $region16
        $region15: #{offset_head_forward.3} parent=11 // pred_region
          %s139 = ssub.s32 32, 32
          %140 = vsyncadd [#allocation3], %s139
          %s142 = sshll.u32 %s0, 4
          %s143 = int_to_ptr.vmem [resolvable:$true] %s142
          %145 = dma.vmem_to_smem %s143, 32, [#allocation2], [#allocation3]
        $region16: #{offset_head_forward.3} parent=11 // pred_fallthru
          _
        // Predicated region
        $region17: #{offset_head_forward.3} parent=11 // pred_check
          %p146 = pneg %p64
        $region18: #{offset_head_forward.3} parent=11 // pred_check_branch
          %148 = sbr.rel (%p146) target = $region20
        $region19: #{offset_head_forward.3} parent=11 // pred_region
          _
        $region20: #{offset_head_forward.3} parent=11 // pred_fallthru
          _
      $region12: #{offset_head_forward.3} parent=5 // pred_fallthru
        _
      %p149 = scmp.lt.s32.totalorder %s10, 2
      // Predicated region
      $region21: #{offset_head_forward.3} parent=5 // pred_check
        %p150 = pneg %p149
      $region22: #{offset_head_forward.3} parent=5 // pred_check_branch
        %152 = sbr.rel (%p150) target = $region24
      $region23: #{offset_head_forward.3} parent=5 // pred_region
        // Predicated region
        $region25: #{offset_head_forward.3} parent=23 // pred_check
          %p153 = pneg %p86
        $region26: #{offset_head_forward.3} parent=23 // pred_check_branch
          %155 = sbr.rel (%p153) target = $region28
        $region27: #{offset_head_forward.3} parent=23 // pred_region
          %s156 = smul.u32 32, %s18
          %p157 = scmp.lt.s32.totalorder %s17, 1
          %s158 = scalar_select %p157, %s17, 1
          %p159 = scmp.lt.s32.totalorder %s156, 31
          %s160 = scalar_select %p159, %s156, 31
          %s161 = smul.addr %s160, 2
          %s162 = smul.addr %s158, 64
          %s163 = sadd.s32 %s161, %s162
          %s164 = smul.addr %s163, 8
          %s165 = scalar_lea.vmem %s2, %s164
          %s166 = smul.u32 32, %s18
        $region28: #{offset_head_forward.3} parent=23 // pred_fallthru
          _
      $region24: #{offset_head_forward.3} parent=5 // pred_fallthru
        _
      %p167 = scmp.le.s32.totalorder 1, %s10
      %p168 = scmp.lt.s32.totalorder %s10, 3
      %p169 = pnand %p167, %p168
      %p170 = pneg %p169
      // Predicated region
      $region29: #{offset_head_forward.3} parent=5 // pred_check
        _
      $region30: #{offset_head_forward.3} parent=5 // pred_check_branch
        %172 = sbr.rel (%p169) target = $region32
      $region31: #{offset_head_forward.3} parent=5 // pred_region
        %s173 = ssub.s32 %s10, 1
        // Predicated region
        $region33: #{offset_head_forward.3} parent=31 // pred_check
          %p174 = pneg %p43
        $region34: #{offset_head_forward.3} parent=31 // pred_check_branch
          %176 = sbr.rel (%p174) target = $region36
        $region35: #{offset_head_forward.3} parent=31 // pred_region
          %177 = dma.done [#allocation3], 32
        $region36: #{offset_head_forward.3} parent=31 // pred_fallthru
          _
        %178 = sfence
        %p179 = pneg %p43
        %p180 = pneg %p40
        %p181 = pneg %p64
        %p182 = pneg %p61
        %s183 = smul.u32 32, %s20
        %p184 = scmp.lt.s32.totalorder %s19, 1
        %s185 = scalar_select %p184, %s19, 1
        %p186 = scmp.lt.s32.totalorder %s183, 31
        %s187 = scalar_select %p186, %s183, 31
        %s188 = smul.addr %s187, 2
        %s189 = smul.addr %s185, 64
        %s190 = sadd.s32 %s188, %s189
        %s191 = smul.addr %s190, 8
        %s192 = scalar_lea.vmem %s2, %s191
        %p193 = pneg %p92
        %p194 = pneg %p89
        %p195 = pneg %p120
        %p196 = pneg %p117
        %s197 = smul.u32 32, %s20
        %p198 = scmp.lt.s32.totalorder %s19, 1
        %s199 = scalar_select %p198, %s19, 1
        %p200 = scmp.lt.s32.totalorder %s197, 31
        %s201 = scalar_select %p200, %s197, 31
        %s202 = smul.addr %s201, 2
        %s203 = smul.addr %s199, 64
        %s204 = sadd.s32 %s202, %s203
        %s205 = smul.addr %s204, 8
        %s206 = scalar_lea.vmem %s3, %s205
        %s207 = smul.u32 32, %s20
        %p208 = scmp.lt.s32.totalorder %s19, 1
        %s209 = scalar_select %p208, %s19, 1
        %p210 = scmp.lt.s32.totalorder %s207, 31
        %s211 = scalar_select %p210, %s207, 31
        %s212 = smul.addr %s211, 2
        %s213 = smul.addr %s209, 64
        %s214 = sadd.s32 %s212, %s213
        %s215 = smul.addr %s214, 8
        %s216 = scalar_lea.vmem %s2, %s215
        %s217 = smul.u32 32, %s20
        %s218 = smul.u32 32, %s20
        %p219 = scmp.lt.s32.totalorder %s19, 1
        %s220 = scalar_select %p219, %s19, 1
        %p221 = scmp.lt.s32.totalorder %s218, 31
        %s222 = scalar_select %p221, %s218, 31
        %s223 = smul.addr %s222, 2
        %s224 = smul.addr %s220, 64
        %s225 = sadd.s32 %s223, %s224
        %s226 = smul.addr %s225, 8
        %s227 = scalar_lea.vmem %s3, %s226
        %s228 = smul.u32 32, %s20
        %s229 = smul.u32 %s19, 128
        %s230 = sld [smem:[#allocation2 + %s229]]
        %s231 = sadd.s32 %s229, 1
        %s232 = sld [smem:[#allocation2 + %s231]]
        %s233 = sadd.s32 %s229, 2
        %s234 = sld [smem:[#allocation2 + %s233]]
        %s235 = sadd.s32 %s229, 3
        %s236 = sld [smem:[#allocation2 + %s235]]
        %s237 = sadd.s32 %s229, 4
        %s238 = sld [smem:[#allocation2 + %s237]]
        %s239 = sadd.s32 %s229, 5
        %s240 = sld [smem:[#allocation2 + %s239]]
        %v241 = vld [vmem:[%s216] sm:$0xff]
        %v242 = vld [vmem:[%s216 + $0x8] sm:$0xff]
        %v243 = vld [vmem:[%s216 + $0x10] sm:$0xff]
        %v244 = vld [vmem:[%s216 + $0x18] sm:$0xff]
        %v245 = vld [vmem:[%s216 + $0x20] sm:$0xff]
        %v246 = vld [vmem:[%s216 + $0x28] sm:$0xff]
        %v247 = vld [vmem:[%s216 + $0x30] sm:$0xff]
        %v248 = vld [vmem:[%s216 + $0x38] sm:$0xff]
        %v249 = vld [vmem:[%s216 + $0x40] sm:$0xff]
        %v250 = vld [vmem:[%s216 + $0x48] sm:$0xff]
        %v251 = vld [vmem:[%s216 + $0x50] sm:$0xff]
        %v252 = vld [vmem:[%s216 + $0x58] sm:$0xff]
        %v253 = vld [vmem:[%s216 + $0x60] sm:$0xff]
        %v254 = vld [vmem:[%s216 + $0x68] sm:$0xff]
        %v255 = vld [vmem:[%s216 + $0x70] sm:$0xff]
        %v256 = vld [vmem:[%s216 + $0x78] sm:$0xff]
        %v257 = vld [vmem:[%s216 + $0x80] sm:$0xff]
        %v258 = vld [vmem:[%s216 + $0x88] sm:$0xff]
        %v259 = vld [vmem:[%s216 + $0x90] sm:$0xff]
        %v260 = vld [vmem:[%s216 + $0x98] sm:$0xff]
        %v261 = vld [vmem:[%s216 + $0xa0] sm:$0xff]
        %v262 = vld [vmem:[%s216 + $0xa8] sm:$0xff]
        %v263 = vld [vmem:[%s216 + $0xb0] sm:$0xff]
        %v264 = vld [vmem:[%s216 + $0xb8] sm:$0xff]
        %v265 = vld [vmem:[%s216 + $0xc0] sm:$0xff]
        %v266 = vld [vmem:[%s216 + $0xc8] sm:$0xff]
        %v267 = vld [vmem:[%s216 + $0xd0] sm:$0xff]
        %v268 = vld [vmem:[%s216 + $0xd8] sm:$0xff]
        %v269 = vld [vmem:[%s216 + $0xe0] sm:$0xff]
        %v270 = vld [vmem:[%s216 + $0xe8] sm:$0xff]
        %v271 = vld [vmem:[%s216 + $0xf0] sm:$0xff]
        %v272 = vld [vmem:[%s216 + $0xf8] sm:$0xff]
        %v273 = vld [vmem:[%s216 + $0x100] sm:$0xff]
        %v274 = vld [vmem:[%s216 + $0x108] sm:$0xff]
        %v275 = vld [vmem:[%s216 + $0x110] sm:$0xff]
        %v276 = vld [vmem:[%s216 + $0x118] sm:$0xff]
        %v277 = vld [vmem:[%s216 + $0x120] sm:$0xff]
        %v278 = vld [vmem:[%s216 + $0x128] sm:$0xff]
        %v279 = vld [vmem:[%s216 + $0x130] sm:$0xff]
        %v280 = vld [vmem:[%s216 + $0x138] sm:$0xff]
        %v281 = vld [vmem:[%s216 + $0x140] sm:$0xff]
        %v282 = vld [vmem:[%s216 + $0x148] sm:$0xff]
        %v283 = vld [vmem:[%s216 + $0x150] sm:$0xff]
        %v284 = vld [vmem:[%s216 + $0x158] sm:$0xff]
        %v285 = vld [vmem:[%s216 + $0x160] sm:$0xff]
        %v286 = vld [vmem:[%s216 + $0x168] sm:$0xff]
        %v287 = vld [vmem:[%s216 + $0x170] sm:$0xff]
        %v288 = vld [vmem:[%s216 + $0x178] sm:$0xff]
        %v289 = vld [vmem:[%s216 + $0x180] sm:$0xff]
        %v290 = vld [vmem:[%s216 + $0x188] sm:$0xff]
        %v291 = vld [vmem:[%s216 + $0x190] sm:$0xff]
        %v292 = vld [vmem:[%s216 + $0x198] sm:$0xff]
        %v293 = vld [vmem:[%s216 + $0x1a0] sm:$0xff]
        %v294 = vld [vmem:[%s216 + $0x1a8] sm:$0xff]
        %v295 = vld [vmem:[%s216 + $0x1b0] sm:$0xff]
        %v296 = vld [vmem:[%s216 + $0x1b8] sm:$0xff]
        %v297 = vld [vmem:[%s216 + $0x1c0] sm:$0xff]
        %v298 = vld [vmem:[%s216 + $0x1c8] sm:$0xff]
        %v299 = vld [vmem:[%s216 + $0x1d0] sm:$0xff]
        %v300 = vld [vmem:[%s216 + $0x1d8] sm:$0xff]
        %v301 = vld [vmem:[%s216 + $0x1e0] sm:$0xff]
        %v302 = vld [vmem:[%s216 + $0x1e8] sm:$0xff]
        %v303 = vld [vmem:[%s216 + $0x1f0] sm:$0xff]
        %v304 = vld [vmem:[%s216 + $0x1f8] sm:$0xff]
        %v305 = vld [vmem:[%s1] ss:$8 sm:$0x3]
        %s306 = scalar_lea.vmem %s1, 1
        %v307 = vld [vmem:[%s306] ss:$8 sm:$0x3]
        %s308 = scalar_lea.vmem %s1, 2
        %v309 = vld [vmem:[%s308] ss:$8 sm:$0x3]
        %s310 = scalar_lea.vmem %s1, 3
        %v311 = vld [vmem:[%s310] ss:$8 sm:$0x3]
        %312 = vrot.lane.b32.xlu0 %v241, 1
        %v313 = vpop.permute.xlu0 %312
        %314 = vrot.lane.b32.xlu0 %v243, 1
        %v315 = vpop.permute.xlu0 %314
        %316 = vrot.lane.b32.xlu0 %v245, 1
        %v317 = vpop.permute.xlu0 %316
        %318 = vrot.lane.b32.xlu0 %v247, 1
        %v319 = vpop.permute.xlu0 %318
        %320 = vrot.lane.b32.xlu0 %v249, 1
        %v321 = vpop.permute.xlu0 %320
        %322 = vrot.lane.b32.xlu0 %v251, 1
        %v323 = vpop.permute.xlu0 %322
        %324 = vrot.lane.b32.xlu0 %v253, 1
        %v325 = vpop.permute.xlu0 %324
        %326 = vrot.lane.b32.xlu0 %v255, 1
        %v327 = vpop.permute.xlu0 %326
        %328 = vrot.lane.b32.xlu0 %v257, 1
        %v329 = vpop.permute.xlu0 %328
        %330 = vrot.lane.b32.xlu0 %v259, 1
        %v331 = vpop.permute.xlu0 %330
        %332 = vrot.lane.b32.xlu0 %v261, 1
        %v333 = vpop.permute.xlu0 %332
        %334 = vrot.lane.b32.xlu0 %v263, 1
        %v335 = vpop.permute.xlu0 %334
        %336 = vrot.lane.b32.xlu0 %v265, 1
        %v337 = vpop.permute.xlu0 %336
        %338 = vrot.lane.b32.xlu0 %v267, 1
        %v339 = vpop.permute.xlu0 %338
        %340 = vrot.lane.b32.xlu0 %v269, 1
        %v341 = vpop.permute.xlu0 %340
        %342 = vrot.lane.b32.xlu0 %v271, 1
        %v343 = vpop.permute.xlu0 %342
        %344 = vrot.lane.b32.xlu0 %v273, 1
        %v345 = vpop.permute.xlu0 %344
        %346 = vrot.lane.b32.xlu0 %v275, 1
        %v347 = vpop.permute.xlu0 %346
        %348 = vrot.lane.b32.xlu0 %v277, 1
        %v349 = vpop.permute.xlu0 %348
        %350 = vrot.lane.b32.xlu0 %v279, 1
        %v351 = vpop.permute.xlu0 %350
        %352 = vrot.lane.b32.xlu0 %v281, 1
        %v353 = vpop.permute.xlu0 %352
        %354 = vrot.lane.b32.xlu0 %v283, 1
        %v355 = vpop.permute.xlu0 %354
        %356 = vrot.lane.b32.xlu0 %v285, 1
        %v357 = vpop.permute.xlu0 %356
        %358 = vrot.lane.b32.xlu0 %v287, 1
        %v359 = vpop.permute.xlu0 %358
        %360 = vrot.lane.b32.xlu0 %v289, 1
        %v361 = vpop.permute.xlu0 %360
        %362 = vrot.lane.b32.xlu0 %v291, 1
        %v363 = vpop.permute.xlu0 %362
        %364 = vrot.lane.b32.xlu0 %v293, 1
        %v365 = vpop.permute.xlu0 %364
        %366 = vrot.lane.b32.xlu0 %v295, 1
        %v367 = vpop.permute.xlu0 %366
        %368 = vrot.lane.b32.xlu0 %v297, 1
        %v369 = vpop.permute.xlu0 %368
        %370 = vrot.lane.b32.xlu0 %v299, 1
        %v371 = vpop.permute.xlu0 %370
        %372 = vrot.lane.b32.xlu0 %v301, 1
        %v373 = vpop.permute.xlu0 %372
        %374 = vrot.lane.b32.xlu0 %v303, 1
        %v375 = vpop.permute.xlu0 %374
        %376 = vrot.lane.b32.xlu0 %v242, 1
        %v377 = vpop.permute.xlu0 %376
        %378 = vrot.lane.b32.xlu0 %v244, 1
        %v379 = vpop.permute.xlu0 %378
        %380 = vrot.lane.b32.xlu0 %v246, 1
        %v381 = vpop.permute.xlu0 %380
        %382 = vrot.lane.b32.xlu0 %v248, 1
        %v383 = vpop.permute.xlu0 %382
        %384 = vrot.lane.b32.xlu0 %v250, 1
        %v385 = vpop.permute.xlu0 %384
        %386 = vrot.lane.b32.xlu0 %v252, 1
        %v387 = vpop.permute.xlu0 %386
        %388 = vrot.lane.b32.xlu0 %v254, 1
        %v389 = vpop.permute.xlu0 %388
        %390 = vrot.lane.b32.xlu0 %v256, 1
        %v391 = vpop.permute.xlu0 %390
        %392 = vrot.lane.b32.xlu0 %v258, 1
        %v393 = vpop.permute.xlu0 %392
        %394 = vrot.lane.b32.xlu0 %v260, 1
        %v395 = vpop.permute.xlu0 %394
        %396 = vrot.lane.b32.xlu0 %v262, 1
        %v397 = vpop.permute.xlu0 %396
        %398 = vrot.lane.b32.xlu0 %v264, 1
        %v399 = vpop.permute.xlu0 %398
        %400 = vrot.lane.b32.xlu0 %v266, 1
        %v401 = vpop.permute.xlu0 %400
        %402 = vrot.lane.b32.xlu0 %v268, 1
        %v403 = vpop.permute.xlu0 %402
        %404 = vrot.lane.b32.xlu0 %v270, 1
        %v405 = vpop.permute.xlu0 %404
        %406 = vrot.lane.b32.xlu0 %v272, 1
        %v407 = vpop.permute.xlu0 %406
        %408 = vrot.lane.b32.xlu0 %v274, 1
        %v409 = vpop.permute.xlu0 %408
        %410 = vrot.lane.b32.xlu0 %v276, 1
        %v411 = vpop.permute.xlu0 %410
        %412 = vrot.lane.b32.xlu0 %v278, 1
        %v413 = vpop.permute.xlu0 %412
        %414 = vrot.lane.b32.xlu0 %v280, 1
        %v415 = vpop.permute.xlu0 %414
        %416 = vrot.lane.b32.xlu0 %v282, 1
        %v417 = vpop.permute.xlu0 %416
        %418 = vrot.lane.b32.xlu0 %v284, 1
        %v419 = vpop.permute.xlu0 %418
        %420 = vrot.lane.b32.xlu0 %v286, 1
        %v421 = vpop.permute.xlu0 %420
        %422 = vrot.lane.b32.xlu0 %v288, 1
        %v423 = vpop.permute.xlu0 %422
        %424 = vrot.lane.b32.xlu0 %v290, 1
        %v425 = vpop.permute.xlu0 %424
        %426 = vrot.lane.b32.xlu0 %v292, 1
        %v427 = vpop.permute.xlu0 %426
        %428 = vrot.lane.b32.xlu0 %v294, 1
        %v429 = vpop.permute.xlu0 %428
        %430 = vrot.lane.b32.xlu0 %v296, 1
        %v431 = vpop.permute.xlu0 %430
        %432 = vrot.lane.b32.xlu0 %v298, 1
        %v433 = vpop.permute.xlu0 %432
        %434 = vrot.lane.b32.xlu0 %v300, 1
        %v435 = vpop.permute.xlu0 %434
        %436 = vrot.lane.b32.xlu0 %v302, 1
        %v437 = vpop.permute.xlu0 %436
        %438 = vrot.lane.b32.xlu0 %v304, 1
        %v439 = vpop.permute.xlu0 %438
        %v440 = vlaneseq
        %v441 = vand.u32 %v440, 127
        %vm442 = vcmp.lt.s32.totalorder %v441, 1
        %v443 = vsel %vm442, %v313, %v377
        %v444 = vsel %vm442, %v315, %v379
        %v445 = vsel %vm442, %v317, %v381
        %v446 = vsel %vm442, %v319, %v383
        %v447 = vsel %vm442, %v321, %v385
        %v448 = vsel %vm442, %v323, %v387
        %v449 = vsel %vm442, %v325, %v389
        %v450 = vsel %vm442, %v327, %v391
        %v451 = vsel %vm442, %v329, %v393
        %v452 = vsel %vm442, %v331, %v395
        %v453 = vsel %vm442, %v333, %v397
        %v454 = vsel %vm442, %v335, %v399
        %v455 = vsel %vm442, %v337, %v401
        %v456 = vsel %vm442, %v339, %v403
        %v457 = vsel %vm442, %v341, %v405
        %v458 = vsel %vm442, %v343, %v407
        %v459 = vsel %vm442, %v345, %v409
        %v460 = vsel %vm442, %v347, %v411
        %v461 = vsel %vm442, %v349, %v413
        %v462 = vsel %vm442, %v351, %v415
        %v463 = vsel %vm442, %v353, %v417
        %v464 = vsel %vm442, %v355, %v419
        %v465 = vsel %vm442, %v357, %v421
        %v466 = vsel %vm442, %v359, %v423
        %v467 = vsel %vm442, %v361, %v425
        %v468 = vsel %vm442, %v363, %v427
        %v469 = vsel %vm442, %v365, %v429
        %v470 = vsel %vm442, %v367, %v431
        %v471 = vsel %vm442, %v369, %v433
        %v472 = vsel %vm442, %v371, %v435
        %v473 = vsel %vm442, %v373, %v437
        %v474 = vsel %vm442, %v375, %v439
        %v475 = vsel %vm442, %v377, %v313
        %v476 = vsel %vm442, %v379, %v315
        %v477 = vsel %vm442, %v381, %v317
        %v478 = vsel %vm442, %v383, %v319
        %v479 = vsel %vm442, %v385, %v321
        %v480 = vsel %vm442, %v387, %v323
        %v481 = vsel %vm442, %v389, %v325
        %v482 = vsel %vm442, %v391, %v327
        %v483 = vsel %vm442, %v393, %v329
        %v484 = vsel %vm442, %v395, %v331
        %v485 = vsel %vm442, %v397, %v333
        %v486 = vsel %vm442, %v399, %v335
        %v487 = vsel %vm442, %v401, %v337
        %v488 = vsel %vm442, %v403, %v339
        %v489 = vsel %vm442, %v405, %v341
        %v490 = vsel %vm442, %v407, %v343
        %v491 = vsel %vm442, %v409, %v345
        %v492 = vsel %vm442, %v411, %v347
        %v493 = vsel %vm442, %v413, %v349
        %v494 = vsel %vm442, %v415, %v351
        %v495 = vsel %vm442, %v417, %v353
        %v496 = vsel %vm442, %v419, %v355
        %v497 = vsel %vm442, %v421, %v357
        %v498 = vsel %vm442, %v423, %v359
        %v499 = vsel %vm442, %v425, %v361
        %v500 = vsel %vm442, %v427, %v363
        %v501 = vsel %vm442, %v429, %v365
        %v502 = vsel %vm442, %v431, %v367
        %v503 = vsel %vm442, %v433, %v369
        %v504 = vsel %vm442, %v435, %v371
        %v505 = vsel %vm442, %v437, %v373
        %v506 = vsel %vm442, %v439, %v375
        %v508 = vlaneseq
        %v509 = vshrl.u32 %v508, 7
        %v510 = vsub.s32 0, %v509
        %v511 = vrot.slane %v305, %v510
        %v512 = vlaneseq
        %v513 = vshrl.u32 %v512, 7
        %v514 = vsub.s32 1, %v513
        %v515 = vrot.slane %v305, %v514
        %v518 = vmul.f32 %v511, %v475
        %v519 = vmul.f32 %v515, %v443
        %v520 = vmul.f32 %v511, %v476
        %v521 = vmul.f32 %v515, %v444
        %v522 = vmul.f32 %v511, %v477
        %v523 = vmul.f32 %v515, %v445
        %v524 = vmul.f32 %v511, %v478
        %v525 = vmul.f32 %v515, %v446
        %v526 = vmul.f32 %v511, %v479
        %v527 = vmul.f32 %v515, %v447
        %v528 = vmul.f32 %v511, %v480
        %v529 = vmul.f32 %v515, %v448
        %v530 = vmul.f32 %v511, %v481
        %v531 = vmul.f32 %v515, %v449
        %v532 = vmul.f32 %v511, %v482
        %v533 = vmul.f32 %v515, %v450
        %v534 = vmul.f32 %v511, %v483
        %v535 = vmul.f32 %v515, %v451
        %v536 = vmul.f32 %v511, %v484
        %v537 = vmul.f32 %v515, %v452
        %v538 = vmul.f32 %v511, %v485
        %v539 = vmul.f32 %v515, %v453
        %v540 = vmul.f32 %v511, %v486
        %v541 = vmul.f32 %v515, %v454
        %v542 = vmul.f32 %v511, %v487
        %v543 = vmul.f32 %v515, %v455
        %v544 = vmul.f32 %v511, %v488
        %v545 = vmul.f32 %v515, %v456
        %v546 = vmul.f32 %v511, %v489
        %v547 = vmul.f32 %v515, %v457
        %v548 = vmul.f32 %v511, %v490
        %v549 = vmul.f32 %v515, %v458
        %v550 = vmul.f32 %v511, %v491
        %v551 = vmul.f32 %v515, %v459
        %v552 = vmul.f32 %v511, %v492
        %v553 = vmul.f32 %v515, %v460
        %v554 = vmul.f32 %v511, %v493
        %v555 = vmul.f32 %v515, %v461
        %v556 = vmul.f32 %v511, %v494
        %v557 = vmul.f32 %v515, %v462
        %v558 = vmul.f32 %v511, %v495
        %v559 = vmul.f32 %v515, %v463
        %v560 = vmul.f32 %v511, %v496
        %v561 = vmul.f32 %v515, %v464
        %v562 = vmul.f32 %v511, %v497
        %v563 = vmul.f32 %v515, %v465
        %v564 = vmul.f32 %v511, %v498
        %v565 = vmul.f32 %v515, %v466
        %v566 = vmul.f32 %v511, %v499
        %v567 = vmul.f32 %v515, %v467
        %v568 = vmul.f32 %v511, %v500
        %v569 = vmul.f32 %v515, %v468
        %v570 = vmul.f32 %v511, %v501
        %v571 = vmul.f32 %v515, %v469
        %v572 = vmul.f32 %v511, %v502
        %v573 = vmul.f32 %v515, %v470
        %v574 = vmul.f32 %v511, %v503
        %v575 = vmul.f32 %v515, %v471
        %v576 = vmul.f32 %v511, %v504
        %v577 = vmul.f32 %v515, %v472
        %v578 = vmul.f32 %v511, %v505
        %v579 = vmul.f32 %v515, %v473
        %v580 = vmul.f32 %v511, %v506
        %v581 = vmul.f32 %v515, %v474
        %582 = vrot.lane.b32.xlu0 %v241, 127
        %v583 = vpop.permute.xlu0 %582
        %584 = vrot.lane.b32.xlu0 %v243, 127
        %v585 = vpop.permute.xlu0 %584
        %586 = vrot.lane.b32.xlu0 %v245, 127
        %v587 = vpop.permute.xlu0 %586
        %588 = vrot.lane.b32.xlu0 %v247, 127
        %v589 = vpop.permute.xlu0 %588
        %590 = vrot.lane.b32.xlu0 %v249, 127
        %v591 = vpop.permute.xlu0 %590
        %592 = vrot.lane.b32.xlu0 %v251, 127
        %v593 = vpop.permute.xlu0 %592
        %594 = vrot.lane.b32.xlu0 %v253, 127
        %v595 = vpop.permute.xlu0 %594
        %596 = vrot.lane.b32.xlu0 %v255, 127
        %v597 = vpop.permute.xlu0 %596
        %598 = vrot.lane.b32.xlu0 %v257, 127
        %v599 = vpop.permute.xlu0 %598
        %600 = vrot.lane.b32.xlu0 %v259, 127
        %v601 = vpop.permute.xlu0 %600
        %602 = vrot.lane.b32.xlu0 %v261, 127
        %v603 = vpop.permute.xlu0 %602
        %604 = vrot.lane.b32.xlu0 %v263, 127
        %v605 = vpop.permute.xlu0 %604
        %606 = vrot.lane.b32.xlu0 %v265, 127
        %v607 = vpop.permute.xlu0 %606
        %608 = vrot.lane.b32.xlu0 %v267, 127
        %v609 = vpop.permute.xlu0 %608
        %610 = vrot.lane.b32.xlu0 %v269, 127
        %v611 = vpop.permute.xlu0 %610
        %612 = vrot.lane.b32.xlu0 %v271, 127
        %v613 = vpop.permute.xlu0 %612
        %614 = vrot.lane.b32.xlu0 %v273, 127
        %v615 = vpop.permute.xlu0 %614
        %616 = vrot.lane.b32.xlu0 %v275, 127
        %v617 = vpop.permute.xlu0 %616
        %618 = vrot.lane.b32.xlu0 %v277, 127
        %v619 = vpop.permute.xlu0 %618
        %620 = vrot.lane.b32.xlu0 %v279, 127
        %v621 = vpop.permute.xlu0 %620
        %622 = vrot.lane.b32.xlu0 %v281, 127
        %v623 = vpop.permute.xlu0 %622
        %624 = vrot.lane.b32.xlu0 %v283, 127
        %v625 = vpop.permute.xlu0 %624
        %626 = vrot.lane.b32.xlu0 %v285, 127
        %v627 = vpop.permute.xlu0 %626
        %628 = vrot.lane.b32.xlu0 %v287, 127
        %v629 = vpop.permute.xlu0 %628
        %630 = vrot.lane.b32.xlu0 %v289, 127
        %v631 = vpop.permute.xlu0 %630
        %632 = vrot.lane.b32.xlu0 %v291, 127
        %v633 = vpop.permute.xlu0 %632
        %634 = vrot.lane.b32.xlu0 %v293, 127
        %v635 = vpop.permute.xlu0 %634
        %636 = vrot.lane.b32.xlu0 %v295, 127
        %v637 = vpop.permute.xlu0 %636
        %638 = vrot.lane.b32.xlu0 %v297, 127
        %v639 = vpop.permute.xlu0 %638
        %640 = vrot.lane.b32.xlu0 %v299, 127
        %v641 = vpop.permute.xlu0 %640
        %642 = vrot.lane.b32.xlu0 %v301, 127
        %v643 = vpop.permute.xlu0 %642
        %644 = vrot.lane.b32.xlu0 %v303, 127
        %v645 = vpop.permute.xlu0 %644
        %646 = vrot.lane.b32.xlu0 %v242, 127
        %v647 = vpop.permute.xlu0 %646
        %648 = vrot.lane.b32.xlu0 %v244, 127
        %v649 = vpop.permute.xlu0 %648
        %650 = vrot.lane.b32.xlu0 %v246, 127
        %v651 = vpop.permute.xlu0 %650
        %652 = vrot.lane.b32.xlu0 %v248, 127
        %v653 = vpop.permute.xlu0 %652
        %654 = vrot.lane.b32.xlu0 %v250, 127
        %v655 = vpop.permute.xlu0 %654
        %656 = vrot.lane.b32.xlu0 %v252, 127
        %v657 = vpop.permute.xlu0 %656
        %658 = vrot.lane.b32.xlu0 %v254, 127
        %v659 = vpop.permute.xlu0 %658
        %660 = vrot.lane.b32.xlu0 %v256, 127
        %v661 = vpop.permute.xlu0 %660
        %662 = vrot.lane.b32.xlu0 %v258, 127
        %v663 = vpop.permute.xlu0 %662
        %664 = vrot.lane.b32.xlu0 %v260, 127
        %v665 = vpop.permute.xlu0 %664
        %666 = vrot.lane.b32.xlu0 %v262, 127
        %v667 = vpop.permute.xlu0 %666
        %668 = vrot.lane.b32.xlu0 %v264, 127
        %v669 = vpop.permute.xlu0 %668
        %670 = vrot.lane.b32.xlu0 %v266, 127
        %v671 = vpop.permute.xlu0 %670
        %672 = vrot.lane.b32.xlu0 %v268, 127
        %v673 = vpop.permute.xlu0 %672
        %674 = vrot.lane.b32.xlu0 %v270, 127
        %v675 = vpop.permute.xlu0 %674
        %676 = vrot.lane.b32.xlu0 %v272, 127
        %v677 = vpop.permute.xlu0 %676
        %678 = vrot.lane.b32.xlu0 %v274, 127
        %v679 = vpop.permute.xlu0 %678
        %680 = vrot.lane.b32.xlu0 %v276, 127
        %v681 = vpop.permute.xlu0 %680
        %682 = vrot.lane.b32.xlu0 %v278, 127
        %v683 = vpop.permute.xlu0 %682
        %684 = vrot.lane.b32.xlu0 %v280, 127
        %v685 = vpop.permute.xlu0 %684
        %686 = vrot.lane.b32.xlu0 %v282, 127
        %v687 = vpop.permute.xlu0 %686
        %688 = vrot.lane.b32.xlu0 %v284, 127
        %v689 = vpop.permute.xlu0 %688
        %690 = vrot.lane.b32.xlu0 %v286, 127
        %v691 = vpop.permute.xlu0 %690
        %692 = vrot.lane.b32.xlu0 %v288, 127
        %v693 = vpop.permute.xlu0 %692
        %694 = vrot.lane.b32.xlu0 %v290, 127
        %v695 = vpop.permute.xlu0 %694
        %696 = vrot.lane.b32.xlu0 %v292, 127
        %v697 = vpop.permute.xlu0 %696
        %698 = vrot.lane.b32.xlu0 %v294, 127
        %v699 = vpop.permute.xlu0 %698
        %700 = vrot.lane.b32.xlu0 %v296, 127
        %v701 = vpop.permute.xlu0 %700
        %702 = vrot.lane.b32.xlu0 %v298, 127
        %v703 = vpop.permute.xlu0 %702
        %704 = vrot.lane.b32.xlu0 %v300, 127
        %v705 = vpop.permute.xlu0 %704
        %706 = vrot.lane.b32.xlu0 %v302, 127
        %v707 = vpop.permute.xlu0 %706
        %708 = vrot.lane.b32.xlu0 %v304, 127
        %v709 = vpop.permute.xlu0 %708
        %vm710 = vcmp.lt.s32.totalorder %v441, 127
        %v711 = vsel %vm710, %v583, %v647
        %v712 = vsel %vm710, %v585, %v649
        %v713 = vsel %vm710, %v587, %v651
        %v714 = vsel %vm710, %v589, %v653
        %v715 = vsel %vm710, %v591, %v655
        %v716 = vsel %vm710, %v593, %v657
        %v717 = vsel %vm710, %v595, %v659
        %v718 = vsel %vm710, %v597, %v661
        %v719 = vsel %vm710, %v599, %v663
        %v720 = vsel %vm710, %v601, %v665
        %v721 = vsel %vm710, %v603, %v667
        %v722 = vsel %vm710, %v605, %v669
        %v723 = vsel %vm710, %v607, %v671
        %v724 = vsel %vm710, %v609, %v673
        %v725 = vsel %vm710, %v611, %v675
        %v726 = vsel %vm710, %v613, %v677
        %v727 = vsel %vm710, %v615, %v679
        %v728 = vsel %vm710, %v617, %v681
        %v729 = vsel %vm710, %v619, %v683
        %v730 = vsel %vm710, %v621, %v685
        %v731 = vsel %vm710, %v623, %v687
        %v732 = vsel %vm710, %v625, %v689
        %v733 = vsel %vm710, %v627, %v691
        %v734 = vsel %vm710, %v629, %v693
        %v735 = vsel %vm710, %v631, %v695
        %v736 = vsel %vm710, %v633, %v697
        %v737 = vsel %vm710, %v635, %v699
        %v738 = vsel %vm710, %v637, %v701
        %v739 = vsel %vm710, %v639, %v703
        %v740 = vsel %vm710, %v641, %v705
        %v741 = vsel %vm710, %v643, %v707
        %v742 = vsel %vm710, %v645, %v709
        %v743 = vsel %vm710, %v647, %v583
        %v744 = vsel %vm710, %v649, %v585
        %v745 = vsel %vm710, %v651, %v587
        %v746 = vsel %vm710, %v653, %v589
        %v747 = vsel %vm710, %v655, %v591
        %v748 = vsel %vm710, %v657, %v593
        %v749 = vsel %vm710, %v659, %v595
        %v750 = vsel %vm710, %v661, %v597
        %v751 = vsel %vm710, %v663, %v599
        %v752 = vsel %vm710, %v665, %v601
        %v753 = vsel %vm710, %v667, %v603
        %v754 = vsel %vm710, %v669, %v605
        %v755 = vsel %vm710, %v671, %v607
        %v756 = vsel %vm710, %v673, %v609
        %v757 = vsel %vm710, %v675, %v611
        %v758 = vsel %vm710, %v677, %v613
        %v759 = vsel %vm710, %v679, %v615
        %v760 = vsel %vm710, %v681, %v617
        %v761 = vsel %vm710, %v683, %v619
        %v762 = vsel %vm710, %v685, %v621
        %v763 = vsel %vm710, %v687, %v623
        %v764 = vsel %vm710, %v689, %v625
        %v765 = vsel %vm710, %v691, %v627
        %v766 = vsel %vm710, %v693, %v629
        %v767 = vsel %vm710, %v695, %v631
        %v768 = vsel %vm710, %v697, %v633
        %v769 = vsel %vm710, %v699, %v635
        %v770 = vsel %vm710, %v701, %v637
        %v771 = vsel %vm710, %v703, %v639
        %v772 = vsel %vm710, %v705, %v641
        %v773 = vsel %vm710, %v707, %v643
        %v774 = vsel %vm710, %v709, %v645
        %v776 = vlaneseq
        %v777 = vshrl.u32 %v776, 7
        %v778 = vsub.s32 0, %v777
        %v779 = vrot.slane %v307, %v778
        %v780 = vlaneseq
        %v781 = vshrl.u32 %v780, 7
        %v782 = vsub.s32 1, %v781
        %v783 = vrot.slane %v307, %v782
        %v786 = vmul.f32 %v779, %v711
        %v787 = vmul.f32 %v783, %v743
        %v788 = vmul.f32 %v779, %v712
        %v789 = vmul.f32 %v783, %v744
        %v790 = vmul.f32 %v779, %v713
        %v791 = vmul.f32 %v783, %v745
        %v792 = vmul.f32 %v779, %v714
        %v793 = vmul.f32 %v783, %v746
        %v794 = vmul.f32 %v779, %v715
        %v795 = vmul.f32 %v783, %v747
        %v796 = vmul.f32 %v779, %v716
        %v797 = vmul.f32 %v783, %v748
        %v798 = vmul.f32 %v779, %v717
        %v799 = vmul.f32 %v783, %v749
        %v800 = vmul.f32 %v779, %v718
        %v801 = vmul.f32 %v783, %v750
        %v802 = vmul.f32 %v779, %v719
        %v803 = vmul.f32 %v783, %v751
        %v804 = vmul.f32 %v779, %v720
        %v805 = vmul.f32 %v783, %v752
        %v806 = vmul.f32 %v779, %v721
        %v807 = vmul.f32 %v783, %v753
        %v808 = vmul.f32 %v779, %v722
        %v809 = vmul.f32 %v783, %v754
        %v810 = vmul.f32 %v779, %v723
        %v811 = vmul.f32 %v783, %v755
        %v812 = vmul.f32 %v779, %v724
        %v813 = vmul.f32 %v783, %v756
        %v814 = vmul.f32 %v779, %v725
        %v815 = vmul.f32 %v783, %v757
        %v816 = vmul.f32 %v779, %v726
        %v817 = vmul.f32 %v783, %v758
        %v818 = vmul.f32 %v779, %v727
        %v819 = vmul.f32 %v783, %v759
        %v820 = vmul.f32 %v779, %v728
        %v821 = vmul.f32 %v783, %v760
        %v822 = vmul.f32 %v779, %v729
        %v823 = vmul.f32 %v783, %v761
        %v824 = vmul.f32 %v779, %v730
        %v825 = vmul.f32 %v783, %v762
        %v826 = vmul.f32 %v779, %v731
        %v827 = vmul.f32 %v783, %v763
        %v828 = vmul.f32 %v779, %v732
        %v829 = vmul.f32 %v783, %v764
        %v830 = vmul.f32 %v779, %v733
        %v831 = vmul.f32 %v783, %v765
        %v832 = vmul.f32 %v779, %v734
        %v833 = vmul.f32 %v783, %v766
        %v834 = vmul.f32 %v779, %v735
        %v835 = vmul.f32 %v783, %v767
        %v836 = vmul.f32 %v779, %v736
        %v837 = vmul.f32 %v783, %v768
        %v838 = vmul.f32 %v779, %v737
        %v839 = vmul.f32 %v783, %v769
        %v840 = vmul.f32 %v779, %v738
        %v841 = vmul.f32 %v783, %v770
        %v842 = vmul.f32 %v779, %v739
        %v843 = vmul.f32 %v783, %v771
        %v844 = vmul.f32 %v779, %v740
        %v845 = vmul.f32 %v783, %v772
        %v846 = vmul.f32 %v779, %v741
        %v847 = vmul.f32 %v783, %v773
        %v848 = vmul.f32 %v779, %v742
        %v849 = vmul.f32 %v783, %v774
        %v850 = vstv %s232
        %v851 = vmul.f32 %v850, %v518
        %v852 = vmul.f32 %v850, %v519
        %v853 = vmul.f32 %v850, %v520
        %v854 = vmul.f32 %v850, %v521
        %v855 = vmul.f32 %v850, %v522
        %v856 = vmul.f32 %v850, %v523
        %v857 = vmul.f32 %v850, %v524
        %v858 = vmul.f32 %v850, %v525
        %v859 = vmul.f32 %v850, %v526
        %v860 = vmul.f32 %v850, %v527
        %v861 = vmul.f32 %v850, %v528
        %v862 = vmul.f32 %v850, %v529
        %v863 = vmul.f32 %v850, %v530
        %v864 = vmul.f32 %v850, %v531
        %v865 = vmul.f32 %v850, %v532
        %v866 = vmul.f32 %v850, %v533
        %v867 = vmul.f32 %v850, %v534
        %v868 = vmul.f32 %v850, %v535
        %v869 = vmul.f32 %v850, %v536
        %v870 = vmul.f32 %v850, %v537
        %v871 = vmul.f32 %v850, %v538
        %v872 = vmul.f32 %v850, %v539
        %v873 = vmul.f32 %v850, %v540
        %v874 = vmul.f32 %v850, %v541
        %v875 = vmul.f32 %v850, %v542
        %v876 = vmul.f32 %v850, %v543
        %v877 = vmul.f32 %v850, %v544
        %v878 = vmul.f32 %v850, %v545
        %v879 = vmul.f32 %v850, %v546
        %v880 = vmul.f32 %v850, %v547
        %v881 = vmul.f32 %v850, %v548
        %v882 = vmul.f32 %v850, %v549
        %v883 = vmul.f32 %v850, %v550
        %v884 = vmul.f32 %v850, %v551
        %v885 = vmul.f32 %v850, %v552
        %v886 = vmul.f32 %v850, %v553
        %v887 = vmul.f32 %v850, %v554
        %v888 = vmul.f32 %v850, %v555
        %v889 = vmul.f32 %v850, %v556
        %v890 = vmul.f32 %v850, %v557
        %v891 = vmul.f32 %v850, %v558
        %v892 = vmul.f32 %v850, %v559
        %v893 = vmul.f32 %v850, %v560
        %v894 = vmul.f32 %v850, %v561
        %v895 = vmul.f32 %v850, %v562
        %v896 = vmul.f32 %v850, %v563
        %v897 = vmul.f32 %v850, %v564
        %v898 = vmul.f32 %v850, %v565
        %v899 = vmul.f32 %v850, %v566
        %v900 = vmul.f32 %v850, %v567
        %v901 = vmul.f32 %v850, %v568
        %v902 = vmul.f32 %v850, %v569
        %v903 = vmul.f32 %v850, %v570
        %v904 = vmul.f32 %v850, %v571
        %v905 = vmul.f32 %v850, %v572
        %v906 = vmul.f32 %v850, %v573
        %v907 = vmul.f32 %v850, %v574
        %v908 = vmul.f32 %v850, %v575
        %v909 = vmul.f32 %v850, %v576
        %v910 = vmul.f32 %v850, %v577
        %v911 = vmul.f32 %v850, %v578
        %v912 = vmul.f32 %v850, %v579
        %v913 = vmul.f32 %v850, %v580
        %v914 = vmul.f32 %v850, %v581
        %v915 = vstv %s236
        %v916 = vmul.f32 %v915, %v241
        %v917 = vmul.f32 %v915, %v242
        %v918 = vmul.f32 %v915, %v243
        %v919 = vmul.f32 %v915, %v244
        %v920 = vmul.f32 %v915, %v245
        %v921 = vmul.f32 %v915, %v246
        %v922 = vmul.f32 %v915, %v247
        %v923 = vmul.f32 %v915, %v248
        %v924 = vmul.f32 %v915, %v249
        %v925 = vmul.f32 %v915, %v250
        %v926 = vmul.f32 %v915, %v251
        %v927 = vmul.f32 %v915, %v252
        %v928 = vmul.f32 %v915, %v253
        %v929 = vmul.f32 %v915, %v254
        %v930 = vmul.f32 %v915, %v255
        %v931 = vmul.f32 %v915, %v256
        %v932 = vmul.f32 %v915, %v257
        %v933 = vmul.f32 %v915, %v258
        %v934 = vmul.f32 %v915, %v259
        %v935 = vmul.f32 %v915, %v260
        %v936 = vmul.f32 %v915, %v261
        %v937 = vmul.f32 %v915, %v262
        %v938 = vmul.f32 %v915, %v263
        %v939 = vmul.f32 %v915, %v264
        %v940 = vmul.f32 %v915, %v265
        %v941 = vmul.f32 %v915, %v266
        %v942 = vmul.f32 %v915, %v267
        %v943 = vmul.f32 %v915, %v268
        %v944 = vmul.f32 %v915, %v269
        %v945 = vmul.f32 %v915, %v270
        %v946 = vmul.f32 %v915, %v271
        %v947 = vmul.f32 %v915, %v272
        %v948 = vmul.f32 %v915, %v273
        %v949 = vmul.f32 %v915, %v274
        %v950 = vmul.f32 %v915, %v275
        %v951 = vmul.f32 %v915, %v276
        %v952 = vmul.f32 %v915, %v277
        %v953 = vmul.f32 %v915, %v278
        %v954 = vmul.f32 %v915, %v279
        %v955 = vmul.f32 %v915, %v280
        %v956 = vmul.f32 %v915, %v281
        %v957 = vmul.f32 %v915, %v282
        %v958 = vmul.f32 %v915, %v283
        %v959 = vmul.f32 %v915, %v284
        %v960 = vmul.f32 %v915, %v285
        %v961 = vmul.f32 %v915, %v286
        %v962 = vmul.f32 %v915, %v287
        %v963 = vmul.f32 %v915, %v288
        %v964 = vmul.f32 %v915, %v289
        %v965 = vmul.f32 %v915, %v290
        %v966 = vmul.f32 %v915, %v291
        %v967 = vmul.f32 %v915, %v292
        %v968 = vmul.f32 %v915, %v293
        %v969 = vmul.f32 %v915, %v294
        %v970 = vmul.f32 %v915, %v295
        %v971 = vmul.f32 %v915, %v296
        %v972 = vmul.f32 %v915, %v297
        %v973 = vmul.f32 %v915, %v298
        %v974 = vmul.f32 %v915, %v299
        %v975 = vmul.f32 %v915, %v300
        %v976 = vmul.f32 %v915, %v301
        %v977 = vmul.f32 %v915, %v302
        %v978 = vmul.f32 %v915, %v303
        %v979 = vmul.f32 %v915, %v304
        %v980 = vadd.f32 %v851, %v916
        %v981 = vadd.f32 %v852, %v917
        %v982 = vadd.f32 %v853, %v918
        %v983 = vadd.f32 %v854, %v919
        %v984 = vadd.f32 %v855, %v920
        %v985 = vadd.f32 %v856, %v921
        %v986 = vadd.f32 %v857, %v922
        %v987 = vadd.f32 %v858, %v923
        %v988 = vadd.f32 %v859, %v924
        %v989 = vadd.f32 %v860, %v925
        %v990 = vadd.f32 %v861, %v926
        %v991 = vadd.f32 %v862, %v927
        %v992 = vadd.f32 %v863, %v928
        %v993 = vadd.f32 %v864, %v929
        %v994 = vadd.f32 %v865, %v930
        %v995 = vadd.f32 %v866, %v931
        %v996 = vadd.f32 %v867, %v932
        %v997 = vadd.f32 %v868, %v933
        %v998 = vadd.f32 %v869, %v934
        %v999 = vadd.f32 %v870, %v935
        %v1000 = vadd.f32 %v871, %v936
        %v1001 = vadd.f32 %v872, %v937
        %v1002 = vadd.f32 %v873, %v938
        %v1003 = vadd.f32 %v874, %v939
        %v1004 = vadd.f32 %v875, %v940
        %v1005 = vadd.f32 %v876, %v941
        %v1006 = vadd.f32 %v877, %v942
        %v1007 = vadd.f32 %v878, %v943
        %v1008 = vadd.f32 %v879, %v944
        %v1009 = vadd.f32 %v880, %v945
        %v1010 = vadd.f32 %v881, %v946
        %v1011 = vadd.f32 %v882, %v947
        %v1012 = vadd.f32 %v883, %v948
        %v1013 = vadd.f32 %v884, %v949
        %v1014 = vadd.f32 %v885, %v950
        %v1015 = vadd.f32 %v886, %v951
        %v1016 = vadd.f32 %v887, %v952
        %v1017 = vadd.f32 %v888, %v953
        %v1018 = vadd.f32 %v889, %v954
        %v1019 = vadd.f32 %v890, %v955
        %v1020 = vadd.f32 %v891, %v956
        %v1021 = vadd.f32 %v892, %v957
        %v1022 = vadd.f32 %v893, %v958
        %v1023 = vadd.f32 %v894, %v959
        %v1024 = vadd.f32 %v895, %v960
        %v1025 = vadd.f32 %v896, %v961
        %v1026 = vadd.f32 %v897, %v962
        %v1027 = vadd.f32 %v898, %v963
        %v1028 = vadd.f32 %v899, %v964
        %v1029 = vadd.f32 %v900, %v965
        %v1030 = vadd.f32 %v901, %v966
        %v1031 = vadd.f32 %v902, %v967
        %v1032 = vadd.f32 %v903, %v968
        %v1033 = vadd.f32 %v904, %v969
        %v1034 = vadd.f32 %v905, %v970
        %v1035 = vadd.f32 %v906, %v971
        %v1036 = vadd.f32 %v907, %v972
        %v1037 = vadd.f32 %v908, %v973
        %v1038 = vadd.f32 %v909, %v974
        %v1039 = vadd.f32 %v910, %v975
        %v1040 = vadd.f32 %v911, %v976
        %v1041 = vadd.f32 %v912, %v977
        %v1042 = vadd.f32 %v913, %v978
        %v1043 = vadd.f32 %v914, %v979
        %v1044 = vstv %s240
        %v1045 = vmul.f32 %v1044, %v786
        %v1046 = vmul.f32 %v1044, %v787
        %v1047 = vmul.f32 %v1044, %v788
        %v1048 = vmul.f32 %v1044, %v789
        %v1049 = vmul.f32 %v1044, %v790
        %v1050 = vmul.f32 %v1044, %v791
        %v1051 = vmul.f32 %v1044, %v792
        %v1052 = vmul.f32 %v1044, %v793
        %v1053 = vmul.f32 %v1044, %v794
        %v1054 = vmul.f32 %v1044, %v795
        %v1055 = vmul.f32 %v1044, %v796
        %v1056 = vmul.f32 %v1044, %v797
        %v1057 = vmul.f32 %v1044, %v798
        %v1058 = vmul.f32 %v1044, %v799
        %v1059 = vmul.f32 %v1044, %v800
        %v1060 = vmul.f32 %v1044, %v801
        %v1061 = vmul.f32 %v1044, %v802
        %v1062 = vmul.f32 %v1044, %v803
        %v1063 = vmul.f32 %v1044, %v804
        %v1064 = vmul.f32 %v1044, %v805
        %v1065 = vmul.f32 %v1044, %v806
        %v1066 = vmul.f32 %v1044, %v807
        %v1067 = vmul.f32 %v1044, %v808
        %v1068 = vmul.f32 %v1044, %v809
        %v1069 = vmul.f32 %v1044, %v810
        %v1070 = vmul.f32 %v1044, %v811
        %v1071 = vmul.f32 %v1044, %v812
        %v1072 = vmul.f32 %v1044, %v813
        %v1073 = vmul.f32 %v1044, %v814
        %v1074 = vmul.f32 %v1044, %v815
        %v1075 = vmul.f32 %v1044, %v816
        %v1076 = vmul.f32 %v1044, %v817
        %v1077 = vmul.f32 %v1044, %v818
        %v1078 = vmul.f32 %v1044, %v819
        %v1079 = vmul.f32 %v1044, %v820
        %v1080 = vmul.f32 %v1044, %v821
        %v1081 = vmul.f32 %v1044, %v822
        %v1082 = vmul.f32 %v1044, %v823
        %v1083 = vmul.f32 %v1044, %v824
        %v1084 = vmul.f32 %v1044, %v825
        %v1085 = vmul.f32 %v1044, %v826
        %v1086 = vmul.f32 %v1044, %v827
        %v1087 = vmul.f32 %v1044, %v828
        %v1088 = vmul.f32 %v1044, %v829
        %v1089 = vmul.f32 %v1044, %v830
        %v1090 = vmul.f32 %v1044, %v831
        %v1091 = vmul.f32 %v1044, %v832
        %v1092 = vmul.f32 %v1044, %v833
        %v1093 = vmul.f32 %v1044, %v834
        %v1094 = vmul.f32 %v1044, %v835
        %v1095 = vmul.f32 %v1044, %v836
        %v1096 = vmul.f32 %v1044, %v837
        %v1097 = vmul.f32 %v1044, %v838
        %v1098 = vmul.f32 %v1044, %v839
        %v1099 = vmul.f32 %v1044, %v840
        %v1100 = vmul.f32 %v1044, %v841
        %v1101 = vmul.f32 %v1044, %v842
        %v1102 = vmul.f32 %v1044, %v843
        %v1103 = vmul.f32 %v1044, %v844
        %v1104 = vmul.f32 %v1044, %v845
        %v1105 = vmul.f32 %v1044, %v846
        %v1106 = vmul.f32 %v1044, %v847
        %v1107 = vmul.f32 %v1044, %v848
        %v1108 = vmul.f32 %v1044, %v849
        %v1109 = vadd.f32 %v980, %v1045
        %v1110 = vadd.f32 %v981, %v1046
        %v1111 = vadd.f32 %v982, %v1047
        %v1112 = vadd.f32 %v983, %v1048
        %v1113 = vadd.f32 %v984, %v1049
        %v1114 = vadd.f32 %v985, %v1050
        %v1115 = vadd.f32 %v986, %v1051
        %v1116 = vadd.f32 %v987, %v1052
        %v1117 = vadd.f32 %v988, %v1053
        %v1118 = vadd.f32 %v989, %v1054
        %v1119 = vadd.f32 %v990, %v1055
        %v1120 = vadd.f32 %v991, %v1056
        %v1121 = vadd.f32 %v992, %v1057
        %v1122 = vadd.f32 %v993, %v1058
        %v1123 = vadd.f32 %v994, %v1059
        %v1124 = vadd.f32 %v995, %v1060
        %v1125 = vadd.f32 %v996, %v1061
        %v1126 = vadd.f32 %v997, %v1062
        %v1127 = vadd.f32 %v998, %v1063
        %v1128 = vadd.f32 %v999, %v1064
        %v1129 = vadd.f32 %v1000, %v1065
        %v1130 = vadd.f32 %v1001, %v1066
        %v1131 = vadd.f32 %v1002, %v1067
        %v1132 = vadd.f32 %v1003, %v1068
        %v1133 = vadd.f32 %v1004, %v1069
        %v1134 = vadd.f32 %v1005, %v1070
        %v1135 = vadd.f32 %v1006, %v1071
        %v1136 = vadd.f32 %v1007, %v1072
        %v1137 = vadd.f32 %v1008, %v1073
        %v1138 = vadd.f32 %v1009, %v1074
        %v1139 = vadd.f32 %v1010, %v1075
        %v1140 = vadd.f32 %v1011, %v1076
        %v1141 = vadd.f32 %v1012, %v1077
        %v1142 = vadd.f32 %v1013, %v1078
        %v1143 = vadd.f32 %v1014, %v1079
        %v1144 = vadd.f32 %v1015, %v1080
        %v1145 = vadd.f32 %v1016, %v1081
        %v1146 = vadd.f32 %v1017, %v1082
        %v1147 = vadd.f32 %v1018, %v1083
        %v1148 = vadd.f32 %v1019, %v1084
        %v1149 = vadd.f32 %v1020, %v1085
        %v1150 = vadd.f32 %v1021, %v1086
        %v1151 = vadd.f32 %v1022, %v1087
        %v1152 = vadd.f32 %v1023, %v1088
        %v1153 = vadd.f32 %v1024, %v1089
        %v1154 = vadd.f32 %v1025, %v1090
        %v1155 = vadd.f32 %v1026, %v1091
        %v1156 = vadd.f32 %v1027, %v1092
        %v1157 = vadd.f32 %v1028, %v1093
        %v1158 = vadd.f32 %v1029, %v1094
        %v1159 = vadd.f32 %v1030, %v1095
        %v1160 = vadd.f32 %v1031, %v1096
        %v1161 = vadd.f32 %v1032, %v1097
        %v1162 = vadd.f32 %v1033, %v1098
        %v1163 = vadd.f32 %v1034, %v1099
        %v1164 = vadd.f32 %v1035, %v1100
        %v1165 = vadd.f32 %v1036, %v1101
        %v1166 = vadd.f32 %v1037, %v1102
        %v1167 = vadd.f32 %v1038, %v1103
        %v1168 = vadd.f32 %v1039, %v1104
        %v1169 = vadd.f32 %v1040, %v1105
        %v1170 = vadd.f32 %v1041, %v1106
        %v1171 = vadd.f32 %v1042, %v1107
        %v1172 = vadd.f32 %v1043, %v1108
        %1173 = vrot.lane.b32.xlu0 %v1109, 16
        %v1174 = vpop.permute.xlu0 %1173
        %1175 = vrot.lane.b32.xlu0 %v1111, 16
        %v1176 = vpop.permute.xlu0 %1175
        %1177 = vrot.lane.b32.xlu0 %v1113, 16
        %v1178 = vpop.permute.xlu0 %1177
        %1179 = vrot.lane.b32.xlu0 %v1115, 16
        %v1180 = vpop.permute.xlu0 %1179
        %1181 = vrot.lane.b32.xlu0 %v1117, 16
        %v1182 = vpop.permute.xlu0 %1181
        %1183 = vrot.lane.b32.xlu0 %v1119, 16
        %v1184 = vpop.permute.xlu0 %1183
        %1185 = vrot.lane.b32.xlu0 %v1121, 16
        %v1186 = vpop.permute.xlu0 %1185
        %1187 = vrot.lane.b32.xlu0 %v1123, 16
        %v1188 = vpop.permute.xlu0 %1187
        %1189 = vrot.lane.b32.xlu0 %v1125, 16
        %v1190 = vpop.permute.xlu0 %1189
        %1191 = vrot.lane.b32.xlu0 %v1127, 16
        %v1192 = vpop.permute.xlu0 %1191
        %1193 = vrot.lane.b32.xlu0 %v1129, 16
        %v1194 = vpop.permute.xlu0 %1193
        %1195 = vrot.lane.b32.xlu0 %v1131, 16
        %v1196 = vpop.permute.xlu0 %1195
        %1197 = vrot.lane.b32.xlu0 %v1133, 16
        %v1198 = vpop.permute.xlu0 %1197
        %1199 = vrot.lane.b32.xlu0 %v1135, 16
        %v1200 = vpop.permute.xlu0 %1199
        %1201 = vrot.lane.b32.xlu0 %v1137, 16
        %v1202 = vpop.permute.xlu0 %1201
        %1203 = vrot.lane.b32.xlu0 %v1139, 16
        %v1204 = vpop.permute.xlu0 %1203
        %1205 = vrot.lane.b32.xlu0 %v1141, 16
        %v1206 = vpop.permute.xlu0 %1205
        %1207 = vrot.lane.b32.xlu0 %v1143, 16
        %v1208 = vpop.permute.xlu0 %1207
        %1209 = vrot.lane.b32.xlu0 %v1145, 16
        %v1210 = vpop.permute.xlu0 %1209
        %1211 = vrot.lane.b32.xlu0 %v1147, 16
        %v1212 = vpop.permute.xlu0 %1211
        %1213 = vrot.lane.b32.xlu0 %v1149, 16
        %v1214 = vpop.permute.xlu0 %1213
        %1215 = vrot.lane.b32.xlu0 %v1151, 16
        %v1216 = vpop.permute.xlu0 %1215
        %1217 = vrot.lane.b32.xlu0 %v1153, 16
        %v1218 = vpop.permute.xlu0 %1217
        %1219 = vrot.lane.b32.xlu0 %v1155, 16
        %v1220 = vpop.permute.xlu0 %1219
        %1221 = vrot.lane.b32.xlu0 %v1157, 16
        %v1222 = vpop.permute.xlu0 %1221
        %1223 = vrot.lane.b32.xlu0 %v1159, 16
        %v1224 = vpop.permute.xlu0 %1223
        %1225 = vrot.lane.b32.xlu0 %v1161, 16
        %v1226 = vpop.permute.xlu0 %1225
        %1227 = vrot.lane.b32.xlu0 %v1163, 16
        %v1228 = vpop.permute.xlu0 %1227
        %1229 = vrot.lane.b32.xlu0 %v1165, 16
        %v1230 = vpop.permute.xlu0 %1229
        %1231 = vrot.lane.b32.xlu0 %v1167, 16
        %v1232 = vpop.permute.xlu0 %1231
        %1233 = vrot.lane.b32.xlu0 %v1169, 16
        %v1234 = vpop.permute.xlu0 %1233
        %1235 = vrot.lane.b32.xlu0 %v1171, 16
        %v1236 = vpop.permute.xlu0 %1235
        %1237 = vrot.lane.b32.xlu0 %v1110, 16
        %v1238 = vpop.permute.xlu0 %1237
        %1239 = vrot.lane.b32.xlu0 %v1112, 16
        %v1240 = vpop.permute.xlu0 %1239
        %1241 = vrot.lane.b32.xlu0 %v1114, 16
        %v1242 = vpop.permute.xlu0 %1241
        %1243 = vrot.lane.b32.xlu0 %v1116, 16
        %v1244 = vpop.permute.xlu0 %1243
        %1245 = vrot.lane.b32.xlu0 %v1118, 16
        %v1246 = vpop.permute.xlu0 %1245
        %1247 = vrot.lane.b32.xlu0 %v1120, 16
        %v1248 = vpop.permute.xlu0 %1247
        %1249 = vrot.lane.b32.xlu0 %v1122, 16
        %v1250 = vpop.permute.xlu0 %1249
        %1251 = vrot.lane.b32.xlu0 %v1124, 16
        %v1252 = vpop.permute.xlu0 %1251
        %1253 = vrot.lane.b32.xlu0 %v1126, 16
        %v1254 = vpop.permute.xlu0 %1253
        %1255 = vrot.lane.b32.xlu0 %v1128, 16
        %v1256 = vpop.permute.xlu0 %1255
        %1257 = vrot.lane.b32.xlu0 %v1130, 16
        %v1258 = vpop.permute.xlu0 %1257
        %1259 = vrot.lane.b32.xlu0 %v1132, 16
        %v1260 = vpop.permute.xlu0 %1259
        %1261 = vrot.lane.b32.xlu0 %v1134, 16
        %v1262 = vpop.permute.xlu0 %1261
        %1263 = vrot.lane.b32.xlu0 %v1136, 16
        %v1264 = vpop.permute.xlu0 %1263
        %1265 = vrot.lane.b32.xlu0 %v1138, 16
        %v1266 = vpop.permute.xlu0 %1265
        %1267 = vrot.lane.b32.xlu0 %v1140, 16
        %v1268 = vpop.permute.xlu0 %1267
        %1269 = vrot.lane.b32.xlu0 %v1142, 16
        %v1270 = vpop.permute.xlu0 %1269
        %1271 = vrot.lane.b32.xlu0 %v1144, 16
        %v1272 = vpop.permute.xlu0 %1271
        %1273 = vrot.lane.b32.xlu0 %v1146, 16
        %v1274 = vpop.permute.xlu0 %1273
        %1275 = vrot.lane.b32.xlu0 %v1148, 16
        %v1276 = vpop.permute.xlu0 %1275
        %1277 = vrot.lane.b32.xlu0 %v1150, 16
        %v1278 = vpop.permute.xlu0 %1277
        %1279 = vrot.lane.b32.xlu0 %v1152, 16
        %v1280 = vpop.permute.xlu0 %1279
        %1281 = vrot.lane.b32.xlu0 %v1154, 16
        %v1282 = vpop.permute.xlu0 %1281
        %1283 = vrot.lane.b32.xlu0 %v1156, 16
        %v1284 = vpop.permute.xlu0 %1283
        %1285 = vrot.lane.b32.xlu0 %v1158, 16
        %v1286 = vpop.permute.xlu0 %1285
        %1287 = vrot.lane.b32.xlu0 %v1160, 16
        %v1288 = vpop.permute.xlu0 %1287
        %1289 = vrot.lane.b32.xlu0 %v1162, 16
        %v1290 = vpop.permute.xlu0 %1289
        %1291 = vrot.lane.b32.xlu0 %v1164, 16
        %v1292 = vpop.permute.xlu0 %1291
        %1293 = vrot.lane.b32.xlu0 %v1166, 16
        %v1294 = vpop.permute.xlu0 %1293
        %1295 = vrot.lane.b32.xlu0 %v1168, 16
        %v1296 = vpop.permute.xlu0 %1295
        %1297 = vrot.lane.b32.xlu0 %v1170, 16
        %v1298 = vpop.permute.xlu0 %1297
        %1299 = vrot.lane.b32.xlu0 %v1172, 16
        %v1300 = vpop.permute.xlu0 %1299
        %vm1301 = vcmp.lt.s32.totalorder %v441, 16
        %v1302 = vsel %vm1301, %v1174, %v1238
        %v1303 = vsel %vm1301, %v1176, %v1240
        %v1304 = vsel %vm1301, %v1178, %v1242
        %v1305 = vsel %vm1301, %v1180, %v1244
        %v1306 = vsel %vm1301, %v1182, %v1246
        %v1307 = vsel %vm1301, %v1184, %v1248
        %v1308 = vsel %vm1301, %v1186, %v1250
        %v1309 = vsel %vm1301, %v1188, %v1252
        %v1310 = vsel %vm1301, %v1190, %v1254
        %v1311 = vsel %vm1301, %v1192, %v1256
        %v1312 = vsel %vm1301, %v1194, %v1258
        %v1313 = vsel %vm1301, %v1196, %v1260
        %v1314 = vsel %vm1301, %v1198, %v1262
        %v1315 = vsel %vm1301, %v1200, %v1264
        %v1316 = vsel %vm1301, %v1202, %v1266
        %v1317 = vsel %vm1301, %v1204, %v1268
        %v1318 = vsel %vm1301, %v1206, %v1270
        %v1319 = vsel %vm1301, %v1208, %v1272
        %v1320 = vsel %vm1301, %v1210, %v1274
        %v1321 = vsel %vm1301, %v1212, %v1276
        %v1322 = vsel %vm1301, %v1214, %v1278
        %v1323 = vsel %vm1301, %v1216, %v1280
        %v1324 = vsel %vm1301, %v1218, %v1282
        %v1325 = vsel %vm1301, %v1220, %v1284
        %v1326 = vsel %vm1301, %v1222, %v1286
        %v1327 = vsel %vm1301, %v1224, %v1288
        %v1328 = vsel %vm1301, %v1226, %v1290
        %v1329 = vsel %vm1301, %v1228, %v1292
        %v1330 = vsel %vm1301, %v1230, %v1294
        %v1331 = vsel %vm1301, %v1232, %v1296
        %v1332 = vsel %vm1301, %v1234, %v1298
        %v1333 = vsel %vm1301, %v1236, %v1300
        %v1334 = vsel %vm1301, %v1238, %v1174
        %v1335 = vsel %vm1301, %v1240, %v1176
        %v1336 = vsel %vm1301, %v1242, %v1178
        %v1337 = vsel %vm1301, %v1244, %v1180
        %v1338 = vsel %vm1301, %v1246, %v1182
        %v1339 = vsel %vm1301, %v1248, %v1184
        %v1340 = vsel %vm1301, %v1250, %v1186
        %v1341 = vsel %vm1301, %v1252, %v1188
        %v1342 = vsel %vm1301, %v1254, %v1190
        %v1343 = vsel %vm1301, %v1256, %v1192
        %v1344 = vsel %vm1301, %v1258, %v1194
        %v1345 = vsel %vm1301, %v1260, %v1196
        %v1346 = vsel %vm1301, %v1262, %v1198
        %v1347 = vsel %vm1301, %v1264, %v1200
        %v1348 = vsel %vm1301, %v1266, %v1202
        %v1349 = vsel %vm1301, %v1268, %v1204
        %v1350 = vsel %vm1301, %v1270, %v1206
        %v1351 = vsel %vm1301, %v1272, %v1208
        %v1352 = vsel %vm1301, %v1274, %v1210
        %v1353 = vsel %vm1301, %v1276, %v1212
        %v1354 = vsel %vm1301, %v1278, %v1214
        %v1355 = vsel %vm1301, %v1280, %v1216
        %v1356 = vsel %vm1301, %v1282, %v1218
        %v1357 = vsel %vm1301, %v1284, %v1220
        %v1358 = vsel %vm1301, %v1286, %v1222
        %v1359 = vsel %vm1301, %v1288, %v1224
        %v1360 = vsel %vm1301, %v1290, %v1226
        %v1361 = vsel %vm1301, %v1292, %v1228
        %v1362 = vsel %vm1301, %v1294, %v1230
        %v1363 = vsel %vm1301, %v1296, %v1232
        %v1364 = vsel %vm1301, %v1298, %v1234
        %v1365 = vsel %vm1301, %v1300, %v1236
        %v1367 = vlaneseq
        %v1368 = vshrl.u32 %v1367, 7
        %v1369 = vsub.s32 0, %v1368
        %v1370 = vrot.slane %v309, %v1369
        %v1371 = vlaneseq
        %v1372 = vshrl.u32 %v1371, 7
        %v1373 = vsub.s32 1, %v1372
        %v1374 = vrot.slane %v309, %v1373
        %v1377 = vmul.f32 %v1370, %v1334
        %v1378 = vmul.f32 %v1374, %v1302
        %v1379 = vmul.f32 %v1370, %v1335
        %v1380 = vmul.f32 %v1374, %v1303
        %v1381 = vmul.f32 %v1370, %v1336
        %v1382 = vmul.f32 %v1374, %v1304
        %v1383 = vmul.f32 %v1370, %v1337
        %v1384 = vmul.f32 %v1374, %v1305
        %v1385 = vmul.f32 %v1370, %v1338
        %v1386 = vmul.f32 %v1374, %v1306
        %v1387 = vmul.f32 %v1370, %v1339
        %v1388 = vmul.f32 %v1374, %v1307
        %v1389 = vmul.f32 %v1370, %v1340
        %v1390 = vmul.f32 %v1374, %v1308
        %v1391 = vmul.f32 %v1370, %v1341
        %v1392 = vmul.f32 %v1374, %v1309
        %v1393 = vmul.f32 %v1370, %v1342
        %v1394 = vmul.f32 %v1374, %v1310
        %v1395 = vmul.f32 %v1370, %v1343
        %v1396 = vmul.f32 %v1374, %v1311
        %v1397 = vmul.f32 %v1370, %v1344
        %v1398 = vmul.f32 %v1374, %v1312
        %v1399 = vmul.f32 %v1370, %v1345
        %v1400 = vmul.f32 %v1374, %v1313
        %v1401 = vmul.f32 %v1370, %v1346
        %v1402 = vmul.f32 %v1374, %v1314
        %v1403 = vmul.f32 %v1370, %v1347
        %v1404 = vmul.f32 %v1374, %v1315
        %v1405 = vmul.f32 %v1370, %v1348
        %v1406 = vmul.f32 %v1374, %v1316
        %v1407 = vmul.f32 %v1370, %v1349
        %v1408 = vmul.f32 %v1374, %v1317
        %v1409 = vmul.f32 %v1370, %v1350
        %v1410 = vmul.f32 %v1374, %v1318
        %v1411 = vmul.f32 %v1370, %v1351
        %v1412 = vmul.f32 %v1374, %v1319
        %v1413 = vmul.f32 %v1370, %v1352
        %v1414 = vmul.f32 %v1374, %v1320
        %v1415 = vmul.f32 %v1370, %v1353
        %v1416 = vmul.f32 %v1374, %v1321
        %v1417 = vmul.f32 %v1370, %v1354
        %v1418 = vmul.f32 %v1374, %v1322
        %v1419 = vmul.f32 %v1370, %v1355
        %v1420 = vmul.f32 %v1374, %v1323
        %v1421 = vmul.f32 %v1370, %v1356
        %v1422 = vmul.f32 %v1374, %v1324
        %v1423 = vmul.f32 %v1370, %v1357
        %v1424 = vmul.f32 %v1374, %v1325
        %v1425 = vmul.f32 %v1370, %v1358
        %v1426 = vmul.f32 %v1374, %v1326
        %v1427 = vmul.f32 %v1370, %v1359
        %v1428 = vmul.f32 %v1374, %v1327
        %v1429 = vmul.f32 %v1370, %v1360
        %v1430 = vmul.f32 %v1374, %v1328
        %v1431 = vmul.f32 %v1370, %v1361
        %v1432 = vmul.f32 %v1374, %v1329
        %v1433 = vmul.f32 %v1370, %v1362
        %v1434 = vmul.f32 %v1374, %v1330
        %v1435 = vmul.f32 %v1370, %v1363
        %v1436 = vmul.f32 %v1374, %v1331
        %v1437 = vmul.f32 %v1370, %v1364
        %v1438 = vmul.f32 %v1374, %v1332
        %v1439 = vmul.f32 %v1370, %v1365
        %v1440 = vmul.f32 %v1374, %v1333
        %1441 = vrot.lane.b32.xlu0 %v1109, 112
        %v1442 = vpop.permute.xlu0 %1441
        %1443 = vrot.lane.b32.xlu0 %v1111, 112
        %v1444 = vpop.permute.xlu0 %1443
        %1445 = vrot.lane.b32.xlu0 %v1113, 112
        %v1446 = vpop.permute.xlu0 %1445
        %1447 = vrot.lane.b32.xlu0 %v1115, 112
        %v1448 = vpop.permute.xlu0 %1447
        %1449 = vrot.lane.b32.xlu0 %v1117, 112
        %v1450 = vpop.permute.xlu0 %1449
        %1451 = vrot.lane.b32.xlu0 %v1119, 112
        %v1452 = vpop.permute.xlu0 %1451
        %1453 = vrot.lane.b32.xlu0 %v1121, 112
        %v1454 = vpop.permute.xlu0 %1453
        %1455 = vrot.lane.b32.xlu0 %v1123, 112
        %v1456 = vpop.permute.xlu0 %1455
        %1457 = vrot.lane.b32.xlu0 %v1125, 112
        %v1458 = vpop.permute.xlu0 %1457
        %1459 = vrot.lane.b32.xlu0 %v1127, 112
        %v1460 = vpop.permute.xlu0 %1459
        %1461 = vrot.lane.b32.xlu0 %v1129, 112
        %v1462 = vpop.permute.xlu0 %1461
        %1463 = vrot.lane.b32.xlu0 %v1131, 112
        %v1464 = vpop.permute.xlu0 %1463
        %1465 = vrot.lane.b32.xlu0 %v1133, 112
        %v1466 = vpop.permute.xlu0 %1465
        %1467 = vrot.lane.b32.xlu0 %v1135, 112
        %v1468 = vpop.permute.xlu0 %1467
        %1469 = vrot.lane.b32.xlu0 %v1137, 112
        %v1470 = vpop.permute.xlu0 %1469
        %1471 = vrot.lane.b32.xlu0 %v1139, 112
        %v1472 = vpop.permute.xlu0 %1471
        %1473 = vrot.lane.b32.xlu0 %v1141, 112
        %v1474 = vpop.permute.xlu0 %1473
        %1475 = vrot.lane.b32.xlu0 %v1143, 112
        %v1476 = vpop.permute.xlu0 %1475
        %1477 = vrot.lane.b32.xlu0 %v1145, 112
        %v1478 = vpop.permute.xlu0 %1477
        %1479 = vrot.lane.b32.xlu0 %v1147, 112
        %v1480 = vpop.permute.xlu0 %1479
        %1481 = vrot.lane.b32.xlu0 %v1149, 112
        %v1482 = vpop.permute.xlu0 %1481
        %1483 = vrot.lane.b32.xlu0 %v1151, 112
        %v1484 = vpop.permute.xlu0 %1483
        %1485 = vrot.lane.b32.xlu0 %v1153, 112
        %v1486 = vpop.permute.xlu0 %1485
        %1487 = vrot.lane.b32.xlu0 %v1155, 112
        %v1488 = vpop.permute.xlu0 %1487
        %1489 = vrot.lane.b32.xlu0 %v1157, 112
        %v1490 = vpop.permute.xlu0 %1489
        %1491 = vrot.lane.b32.xlu0 %v1159, 112
        %v1492 = vpop.permute.xlu0 %1491
        %1493 = vrot.lane.b32.xlu0 %v1161, 112
        %v1494 = vpop.permute.xlu0 %1493
        %1495 = vrot.lane.b32.xlu0 %v1163, 112
        %v1496 = vpop.permute.xlu0 %1495
        %1497 = vrot.lane.b32.xlu0 %v1165, 112
        %v1498 = vpop.permute.xlu0 %1497
        %1499 = vrot.lane.b32.xlu0 %v1167, 112
        %v1500 = vpop.permute.xlu0 %1499
        %1501 = vrot.lane.b32.xlu0 %v1169, 112
        %v1502 = vpop.permute.xlu0 %1501
        %1503 = vrot.lane.b32.xlu0 %v1171, 112
        %v1504 = vpop.permute.xlu0 %1503
        %1505 = vrot.lane.b32.xlu0 %v1110, 112
        %v1506 = vpop.permute.xlu0 %1505
        %1507 = vrot.lane.b32.xlu0 %v1112, 112
        %v1508 = vpop.permute.xlu0 %1507
        %1509 = vrot.lane.b32.xlu0 %v1114, 112
        %v1510 = vpop.permute.xlu0 %1509
        %1511 = vrot.lane.b32.xlu0 %v1116, 112
        %v1512 = vpop.permute.xlu0 %1511
        %1513 = vrot.lane.b32.xlu0 %v1118, 112
        %v1514 = vpop.permute.xlu0 %1513
        %1515 = vrot.lane.b32.xlu0 %v1120, 112
        %v1516 = vpop.permute.xlu0 %1515
        %1517 = vrot.lane.b32.xlu0 %v1122, 112
        %v1518 = vpop.permute.xlu0 %1517
        %1519 = vrot.lane.b32.xlu0 %v1124, 112
        %v1520 = vpop.permute.xlu0 %1519
        %1521 = vrot.lane.b32.xlu0 %v1126, 112
        %v1522 = vpop.permute.xlu0 %1521
        %1523 = vrot.lane.b32.xlu0 %v1128, 112
        %v1524 = vpop.permute.xlu0 %1523
        %1525 = vrot.lane.b32.xlu0 %v1130, 112
        %v1526 = vpop.permute.xlu0 %1525
        %1527 = vrot.lane.b32.xlu0 %v1132, 112
        %v1528 = vpop.permute.xlu0 %1527
        %1529 = vrot.lane.b32.xlu0 %v1134, 112
        %v1530 = vpop.permute.xlu0 %1529
        %1531 = vrot.lane.b32.xlu0 %v1136, 112
        %v1532 = vpop.permute.xlu0 %1531
        %1533 = vrot.lane.b32.xlu0 %v1138, 112
        %v1534 = vpop.permute.xlu0 %1533
        %1535 = vrot.lane.b32.xlu0 %v1140, 112
        %v1536 = vpop.permute.xlu0 %1535
        %1537 = vrot.lane.b32.xlu0 %v1142, 112
        %v1538 = vpop.permute.xlu0 %1537
        %1539 = vrot.lane.b32.xlu0 %v1144, 112
        %v1540 = vpop.permute.xlu0 %1539
        %1541 = vrot.lane.b32.xlu0 %v1146, 112
        %v1542 = vpop.permute.xlu0 %1541
        %1543 = vrot.lane.b32.xlu0 %v1148, 112
        %v1544 = vpop.permute.xlu0 %1543
        %1545 = vrot.lane.b32.xlu0 %v1150, 112
        %v1546 = vpop.permute.xlu0 %1545
        %1547 = vrot.lane.b32.xlu0 %v1152, 112
        %v1548 = vpop.permute.xlu0 %1547
        %1549 = vrot.lane.b32.xlu0 %v1154, 112
        %v1550 = vpop.permute.xlu0 %1549
        %1551 = vrot.lane.b32.xlu0 %v1156, 112
        %v1552 = vpop.permute.xlu0 %1551
        %1553 = vrot.lane.b32.xlu0 %v1158, 112
        %v1554 = vpop.permute.xlu0 %1553
        %1555 = vrot.lane.b32.xlu0 %v1160, 112
        %v1556 = vpop.permute.xlu0 %1555
        %1557 = vrot.lane.b32.xlu0 %v1162, 112
        %v1558 = vpop.permute.xlu0 %1557
        %1559 = vrot.lane.b32.xlu0 %v1164, 112
        %v1560 = vpop.permute.xlu0 %1559
        %1561 = vrot.lane.b32.xlu0 %v1166, 112
        %v1562 = vpop.permute.xlu0 %1561
        %1563 = vrot.lane.b32.xlu0 %v1168, 112
        %v1564 = vpop.permute.xlu0 %1563
        %1565 = vrot.lane.b32.xlu0 %v1170, 112
        %v1566 = vpop.permute.xlu0 %1565
        %1567 = vrot.lane.b32.xlu0 %v1172, 112
        %v1568 = vpop.permute.xlu0 %1567
        %vm1569 = vcmp.lt.s32.totalorder %v441, 112
        %v1570 = vsel %vm1569, %v1442, %v1506
        %v1571 = vsel %vm1569, %v1444, %v1508
        %v1572 = vsel %vm1569, %v1446, %v1510
        %v1573 = vsel %vm1569, %v1448, %v1512
        %v1574 = vsel %vm1569, %v1450, %v1514
        %v1575 = vsel %vm1569, %v1452, %v1516
        %v1576 = vsel %vm1569, %v1454, %v1518
        %v1577 = vsel %vm1569, %v1456, %v1520
        %v1578 = vsel %vm1569, %v1458, %v1522
        %v1579 = vsel %vm1569, %v1460, %v1524
        %v1580 = vsel %vm1569, %v1462, %v1526
        %v1581 = vsel %vm1569, %v1464, %v1528
        %v1582 = vsel %vm1569, %v1466, %v1530
        %v1583 = vsel %vm1569, %v1468, %v1532
        %v1584 = vsel %vm1569, %v1470, %v1534
        %v1585 = vsel %vm1569, %v1472, %v1536
        %v1586 = vsel %vm1569, %v1474, %v1538
        %v1587 = vsel %vm1569, %v1476, %v1540
        %v1588 = vsel %vm1569, %v1478, %v1542
        %v1589 = vsel %vm1569, %v1480, %v1544
        %v1590 = vsel %vm1569, %v1482, %v1546
        %v1591 = vsel %vm1569, %v1484, %v1548
        %v1592 = vsel %vm1569, %v1486, %v1550
        %v1593 = vsel %vm1569, %v1488, %v1552
        %v1594 = vsel %vm1569, %v1490, %v1554
        %v1595 = vsel %vm1569, %v1492, %v1556
        %v1596 = vsel %vm1569, %v1494, %v1558
        %v1597 = vsel %vm1569, %v1496, %v1560
        %v1598 = vsel %vm1569, %v1498, %v1562
        %v1599 = vsel %vm1569, %v1500, %v1564
        %v1600 = vsel %vm1569, %v1502, %v1566
        %v1601 = vsel %vm1569, %v1504, %v1568
        %v1602 = vsel %vm1569, %v1506, %v1442
        %v1603 = vsel %vm1569, %v1508, %v1444
        %v1604 = vsel %vm1569, %v1510, %v1446
        %v1605 = vsel %vm1569, %v1512, %v1448
        %v1606 = vsel %vm1569, %v1514, %v1450
        %v1607 = vsel %vm1569, %v1516, %v1452
        %v1608 = vsel %vm1569, %v1518, %v1454
        %v1609 = vsel %vm1569, %v1520, %v1456
        %v1610 = vsel %vm1569, %v1522, %v1458
        %v1611 = vsel %vm1569, %v1524, %v1460
        %v1612 = vsel %vm1569, %v1526, %v1462
        %v1613 = vsel %vm1569, %v1528, %v1464
        %v1614 = vsel %vm1569, %v1530, %v1466
        %v1615 = vsel %vm1569, %v1532, %v1468
        %v1616 = vsel %vm1569, %v1534, %v1470
        %v1617 = vsel %vm1569, %v1536, %v1472
        %v1618 = vsel %vm1569, %v1538, %v1474
        %v1619 = vsel %vm1569, %v1540, %v1476
        %v1620 = vsel %vm1569, %v1542, %v1478
        %v1621 = vsel %vm1569, %v1544, %v1480
        %v1622 = vsel %vm1569, %v1546, %v1482
        %v1623 = vsel %vm1569, %v1548, %v1484
        %v1624 = vsel %vm1569, %v1550, %v1486
        %v1625 = vsel %vm1569, %v1552, %v1488
        %v1626 = vsel %vm1569, %v1554, %v1490
        %v1627 = vsel %vm1569, %v1556, %v1492
        %v1628 = vsel %vm1569, %v1558, %v1494
        %v1629 = vsel %vm1569, %v1560, %v1496
        %v1630 = vsel %vm1569, %v1562, %v1498
        %v1631 = vsel %vm1569, %v1564, %v1500
        %v1632 = vsel %vm1569, %v1566, %v1502
        %v1633 = vsel %vm1569, %v1568, %v1504
        %v1635 = vlaneseq
        %v1636 = vshrl.u32 %v1635, 7
        %v1637 = vsub.s32 0, %v1636
        %v1638 = vrot.slane %v311, %v1637
        %v1639 = vlaneseq
        %v1640 = vshrl.u32 %v1639, 7
        %v1641 = vsub.s32 1, %v1640
        %v1642 = vrot.slane %v311, %v1641
        %v1645 = vmul.f32 %v1638, %v1570
        %v1646 = vmul.f32 %v1642, %v1602
        %v1647 = vmul.f32 %v1638, %v1571
        %v1648 = vmul.f32 %v1642, %v1603
        %v1649 = vmul.f32 %v1638, %v1572
        %v1650 = vmul.f32 %v1642, %v1604
        %v1651 = vmul.f32 %v1638, %v1573
        %v1652 = vmul.f32 %v1642, %v1605
        %v1653 = vmul.f32 %v1638, %v1574
        %v1654 = vmul.f32 %v1642, %v1606
        %v1655 = vmul.f32 %v1638, %v1575
        %v1656 = vmul.f32 %v1642, %v1607
        %v1657 = vmul.f32 %v1638, %v1576
        %v1658 = vmul.f32 %v1642, %v1608
        %v1659 = vmul.f32 %v1638, %v1577
        %v1660 = vmul.f32 %v1642, %v1609
        %v1661 = vmul.f32 %v1638, %v1578
        %v1662 = vmul.f32 %v1642, %v1610
        %v1663 = vmul.f32 %v1638, %v1579
        %v1664 = vmul.f32 %v1642, %v1611
        %v1665 = vmul.f32 %v1638, %v1580
        %v1666 = vmul.f32 %v1642, %v1612
        %v1667 = vmul.f32 %v1638, %v1581
        %v1668 = vmul.f32 %v1642, %v1613
        %v1669 = vmul.f32 %v1638, %v1582
        %v1670 = vmul.f32 %v1642, %v1614
        %v1671 = vmul.f32 %v1638, %v1583
        %v1672 = vmul.f32 %v1642, %v1615
        %v1673 = vmul.f32 %v1638, %v1584
        %v1674 = vmul.f32 %v1642, %v1616
        %v1675 = vmul.f32 %v1638, %v1585
        %v1676 = vmul.f32 %v1642, %v1617
        %v1677 = vmul.f32 %v1638, %v1586
        %v1678 = vmul.f32 %v1642, %v1618
        %v1679 = vmul.f32 %v1638, %v1587
        %v1680 = vmul.f32 %v1642, %v1619
        %v1681 = vmul.f32 %v1638, %v1588
        %v1682 = vmul.f32 %v1642, %v1620
        %v1683 = vmul.f32 %v1638, %v1589
        %v1684 = vmul.f32 %v1642, %v1621
        %v1685 = vmul.f32 %v1638, %v1590
        %v1686 = vmul.f32 %v1642, %v1622
        %v1687 = vmul.f32 %v1638, %v1591
        %v1688 = vmul.f32 %v1642, %v1623
        %v1689 = vmul.f32 %v1638, %v1592
        %v1690 = vmul.f32 %v1642, %v1624
        %v1691 = vmul.f32 %v1638, %v1593
        %v1692 = vmul.f32 %v1642, %v1625
        %v1693 = vmul.f32 %v1638, %v1594
        %v1694 = vmul.f32 %v1642, %v1626
        %v1695 = vmul.f32 %v1638, %v1595
        %v1696 = vmul.f32 %v1642, %v1627
        %v1697 = vmul.f32 %v1638, %v1596
        %v1698 = vmul.f32 %v1642, %v1628
        %v1699 = vmul.f32 %v1638, %v1597
        %v1700 = vmul.f32 %v1642, %v1629
        %v1701 = vmul.f32 %v1638, %v1598
        %v1702 = vmul.f32 %v1642, %v1630
        %v1703 = vmul.f32 %v1638, %v1599
        %v1704 = vmul.f32 %v1642, %v1631
        %v1705 = vmul.f32 %v1638, %v1600
        %v1706 = vmul.f32 %v1642, %v1632
        %v1707 = vmul.f32 %v1638, %v1601
        %v1708 = vmul.f32 %v1642, %v1633
        %v1709 = vstv %s230
        %v1710 = vmul.f32 %v1709, %v1377
        %v1711 = vmul.f32 %v1709, %v1378
        %v1712 = vmul.f32 %v1709, %v1379
        %v1713 = vmul.f32 %v1709, %v1380
        %v1714 = vmul.f32 %v1709, %v1381
        %v1715 = vmul.f32 %v1709, %v1382
        %v1716 = vmul.f32 %v1709, %v1383
        %v1717 = vmul.f32 %v1709, %v1384
        %v1718 = vmul.f32 %v1709, %v1385
        %v1719 = vmul.f32 %v1709, %v1386
        %v1720 = vmul.f32 %v1709, %v1387
        %v1721 = vmul.f32 %v1709, %v1388
        %v1722 = vmul.f32 %v1709, %v1389
        %v1723 = vmul.f32 %v1709, %v1390
        %v1724 = vmul.f32 %v1709, %v1391
        %v1725 = vmul.f32 %v1709, %v1392
        %v1726 = vmul.f32 %v1709, %v1393
        %v1727 = vmul.f32 %v1709, %v1394
        %v1728 = vmul.f32 %v1709, %v1395
        %v1729 = vmul.f32 %v1709, %v1396
        %v1730 = vmul.f32 %v1709, %v1397
        %v1731 = vmul.f32 %v1709, %v1398
        %v1732 = vmul.f32 %v1709, %v1399
        %v1733 = vmul.f32 %v1709, %v1400
        %v1734 = vmul.f32 %v1709, %v1401
        %v1735 = vmul.f32 %v1709, %v1402
        %v1736 = vmul.f32 %v1709, %v1403
        %v1737 = vmul.f32 %v1709, %v1404
        %v1738 = vmul.f32 %v1709, %v1405
        %v1739 = vmul.f32 %v1709, %v1406
        %v1740 = vmul.f32 %v1709, %v1407
        %v1741 = vmul.f32 %v1709, %v1408
        %v1742 = vmul.f32 %v1709, %v1409
        %v1743 = vmul.f32 %v1709, %v1410
        %v1744 = vmul.f32 %v1709, %v1411
        %v1745 = vmul.f32 %v1709, %v1412
        %v1746 = vmul.f32 %v1709, %v1413
        %v1747 = vmul.f32 %v1709, %v1414
        %v1748 = vmul.f32 %v1709, %v1415
        %v1749 = vmul.f32 %v1709, %v1416
        %v1750 = vmul.f32 %v1709, %v1417
        %v1751 = vmul.f32 %v1709, %v1418
        %v1752 = vmul.f32 %v1709, %v1419
        %v1753 = vmul.f32 %v1709, %v1420
        %v1754 = vmul.f32 %v1709, %v1421
        %v1755 = vmul.f32 %v1709, %v1422
        %v1756 = vmul.f32 %v1709, %v1423
        %v1757 = vmul.f32 %v1709, %v1424
        %v1758 = vmul.f32 %v1709, %v1425
        %v1759 = vmul.f32 %v1709, %v1426
        %v1760 = vmul.f32 %v1709, %v1427
        %v1761 = vmul.f32 %v1709, %v1428
        %v1762 = vmul.f32 %v1709, %v1429
        %v1763 = vmul.f32 %v1709, %v1430
        %v1764 = vmul.f32 %v1709, %v1431
        %v1765 = vmul.f32 %v1709, %v1432
        %v1766 = vmul.f32 %v1709, %v1433
        %v1767 = vmul.f32 %v1709, %v1434
        %v1768 = vmul.f32 %v1709, %v1435
        %v1769 = vmul.f32 %v1709, %v1436
        %v1770 = vmul.f32 %v1709, %v1437
        %v1771 = vmul.f32 %v1709, %v1438
        %v1772 = vmul.f32 %v1709, %v1439
        %v1773 = vmul.f32 %v1709, %v1440
        %v1774 = vstv %s234
        %v1775 = vmul.f32 %v1774, %v1109
        %v1776 = vmul.f32 %v1774, %v1110
        %v1777 = vmul.f32 %v1774, %v1111
        %v1778 = vmul.f32 %v1774, %v1112
        %v1779 = vmul.f32 %v1774, %v1113
        %v1780 = vmul.f32 %v1774, %v1114
        %v1781 = vmul.f32 %v1774, %v1115
        %v1782 = vmul.f32 %v1774, %v1116
        %v1783 = vmul.f32 %v1774, %v1117
        %v1784 = vmul.f32 %v1774, %v1118
        %v1785 = vmul.f32 %v1774, %v1119
        %v1786 = vmul.f32 %v1774, %v1120
        %v1787 = vmul.f32 %v1774, %v1121
        %v1788 = vmul.f32 %v1774, %v1122
        %v1789 = vmul.f32 %v1774, %v1123
        %v1790 = vmul.f32 %v1774, %v1124
        %v1791 = vmul.f32 %v1774, %v1125
        %v1792 = vmul.f32 %v1774, %v1126
        %v1793 = vmul.f32 %v1774, %v1127
        %v1794 = vmul.f32 %v1774, %v1128
        %v1795 = vmul.f32 %v1774, %v1129
        %v1796 = vmul.f32 %v1774, %v1130
        %v1797 = vmul.f32 %v1774, %v1131
        %v1798 = vmul.f32 %v1774, %v1132
        %v1799 = vmul.f32 %v1774, %v1133
        %v1800 = vmul.f32 %v1774, %v1134
        %v1801 = vmul.f32 %v1774, %v1135
        %v1802 = vmul.f32 %v1774, %v1136
        %v1803 = vmul.f32 %v1774, %v1137
        %v1804 = vmul.f32 %v1774, %v1138
        %v1805 = vmul.f32 %v1774, %v1139
        %v1806 = vmul.f32 %v1774, %v1140
        %v1807 = vmul.f32 %v1774, %v1141
        %v1808 = vmul.f32 %v1774, %v1142
        %v1809 = vmul.f32 %v1774, %v1143
        %v1810 = vmul.f32 %v1774, %v1144
        %v1811 = vmul.f32 %v1774, %v1145
        %v1812 = vmul.f32 %v1774, %v1146
        %v1813 = vmul.f32 %v1774, %v1147
        %v1814 = vmul.f32 %v1774, %v1148
        %v1815 = vmul.f32 %v1774, %v1149
        %v1816 = vmul.f32 %v1774, %v1150
        %v1817 = vmul.f32 %v1774, %v1151
        %v1818 = vmul.f32 %v1774, %v1152
        %v1819 = vmul.f32 %v1774, %v1153
        %v1820 = vmul.f32 %v1774, %v1154
        %v1821 = vmul.f32 %v1774, %v1155
        %v1822 = vmul.f32 %v1774, %v1156
        %v1823 = vmul.f32 %v1774, %v1157
        %v1824 = vmul.f32 %v1774, %v1158
        %v1825 = vmul.f32 %v1774, %v1159
        %v1826 = vmul.f32 %v1774, %v1160
        %v1827 = vmul.f32 %v1774, %v1161
        %v1828 = vmul.f32 %v1774, %v1162
        %v1829 = vmul.f32 %v1774, %v1163
        %v1830 = vmul.f32 %v1774, %v1164
        %v1831 = vmul.f32 %v1774, %v1165
        %v1832 = vmul.f32 %v1774, %v1166
        %v1833 = vmul.f32 %v1774, %v1167
        %v1834 = vmul.f32 %v1774, %v1168
        %v1835 = vmul.f32 %v1774, %v1169
        %v1836 = vmul.f32 %v1774, %v1170
        %v1837 = vmul.f32 %v1774, %v1171
        %v1838 = vmul.f32 %v1774, %v1172
        %v1839 = vadd.f32 %v1710, %v1775
        %v1840 = vadd.f32 %v1711, %v1776
        %v1841 = vadd.f32 %v1712, %v1777
        %v1842 = vadd.f32 %v1713, %v1778
        %v1843 = vadd.f32 %v1714, %v1779
        %v1844 = vadd.f32 %v1715, %v1780
        %v1845 = vadd.f32 %v1716, %v1781
        %v1846 = vadd.f32 %v1717, %v1782
        %v1847 = vadd.f32 %v1718, %v1783
        %v1848 = vadd.f32 %v1719, %v1784
        %v1849 = vadd.f32 %v1720, %v1785
        %v1850 = vadd.f32 %v1721, %v1786
        %v1851 = vadd.f32 %v1722, %v1787
        %v1852 = vadd.f32 %v1723, %v1788
        %v1853 = vadd.f32 %v1724, %v1789
        %v1854 = vadd.f32 %v1725, %v1790
        %v1855 = vadd.f32 %v1726, %v1791
        %v1856 = vadd.f32 %v1727, %v1792
        %v1857 = vadd.f32 %v1728, %v1793
        %v1858 = vadd.f32 %v1729, %v1794
        %v1859 = vadd.f32 %v1730, %v1795
        %v1860 = vadd.f32 %v1731, %v1796
        %v1861 = vadd.f32 %v1732, %v1797
        %v1862 = vadd.f32 %v1733, %v1798
        %v1863 = vadd.f32 %v1734, %v1799
        %v1864 = vadd.f32 %v1735, %v1800
        %v1865 = vadd.f32 %v1736, %v1801
        %v1866 = vadd.f32 %v1737, %v1802
        %v1867 = vadd.f32 %v1738, %v1803
        %v1868 = vadd.f32 %v1739, %v1804
        %v1869 = vadd.f32 %v1740, %v1805
        %v1870 = vadd.f32 %v1741, %v1806
        %v1871 = vadd.f32 %v1742, %v1807
        %v1872 = vadd.f32 %v1743, %v1808
        %v1873 = vadd.f32 %v1744, %v1809
        %v1874 = vadd.f32 %v1745, %v1810
        %v1875 = vadd.f32 %v1746, %v1811
        %v1876 = vadd.f32 %v1747, %v1812
        %v1877 = vadd.f32 %v1748, %v1813
        %v1878 = vadd.f32 %v1749, %v1814
        %v1879 = vadd.f32 %v1750, %v1815
        %v1880 = vadd.f32 %v1751, %v1816
        %v1881 = vadd.f32 %v1752, %v1817
        %v1882 = vadd.f32 %v1753, %v1818
        %v1883 = vadd.f32 %v1754, %v1819
        %v1884 = vadd.f32 %v1755, %v1820
        %v1885 = vadd.f32 %v1756, %v1821
        %v1886 = vadd.f32 %v1757, %v1822
        %v1887 = vadd.f32 %v1758, %v1823
        %v1888 = vadd.f32 %v1759, %v1824
        %v1889 = vadd.f32 %v1760, %v1825
        %v1890 = vadd.f32 %v1761, %v1826
        %v1891 = vadd.f32 %v1762, %v1827
        %v1892 = vadd.f32 %v1763, %v1828
        %v1893 = vadd.f32 %v1764, %v1829
        %v1894 = vadd.f32 %v1765, %v1830
        %v1895 = vadd.f32 %v1766, %v1831
        %v1896 = vadd.f32 %v1767, %v1832
        %v1897 = vadd.f32 %v1768, %v1833
        %v1898 = vadd.f32 %v1769, %v1834
        %v1899 = vadd.f32 %v1770, %v1835
        %v1900 = vadd.f32 %v1771, %v1836
        %v1901 = vadd.f32 %v1772, %v1837
        %v1902 = vadd.f32 %v1773, %v1838
        %v1903 = vstv %s238
        %v1904 = vmul.f32 %v1903, %v1645
        %v1905 = vmul.f32 %v1903, %v1646
        %v1906 = vmul.f32 %v1903, %v1647
        %v1907 = vmul.f32 %v1903, %v1648
        %v1908 = vmul.f32 %v1903, %v1649
        %v1909 = vmul.f32 %v1903, %v1650
        %v1910 = vmul.f32 %v1903, %v1651
        %v1911 = vmul.f32 %v1903, %v1652
        %v1912 = vmul.f32 %v1903, %v1653
        %v1913 = vmul.f32 %v1903, %v1654
        %v1914 = vmul.f32 %v1903, %v1655
        %v1915 = vmul.f32 %v1903, %v1656
        %v1916 = vmul.f32 %v1903, %v1657
        %v1917 = vmul.f32 %v1903, %v1658
        %v1918 = vmul.f32 %v1903, %v1659
        %v1919 = vmul.f32 %v1903, %v1660
        %v1920 = vmul.f32 %v1903, %v1661
        %v1921 = vmul.f32 %v1903, %v1662
        %v1922 = vmul.f32 %v1903, %v1663
        %v1923 = vmul.f32 %v1903, %v1664
        %v1924 = vmul.f32 %v1903, %v1665
        %v1925 = vmul.f32 %v1903, %v1666
        %v1926 = vmul.f32 %v1903, %v1667
        %v1927 = vmul.f32 %v1903, %v1668
        %v1928 = vmul.f32 %v1903, %v1669
        %v1929 = vmul.f32 %v1903, %v1670
        %v1930 = vmul.f32 %v1903, %v1671
        %v1931 = vmul.f32 %v1903, %v1672
        %v1932 = vmul.f32 %v1903, %v1673
        %v1933 = vmul.f32 %v1903, %v1674
        %v1934 = vmul.f32 %v1903, %v1675
        %v1935 = vmul.f32 %v1903, %v1676
        %v1936 = vmul.f32 %v1903, %v1677
        %v1937 = vmul.f32 %v1903, %v1678
        %v1938 = vmul.f32 %v1903, %v1679
        %v1939 = vmul.f32 %v1903, %v1680
        %v1940 = vmul.f32 %v1903, %v1681
        %v1941 = vmul.f32 %v1903, %v1682
        %v1942 = vmul.f32 %v1903, %v1683
        %v1943 = vmul.f32 %v1903, %v1684
        %v1944 = vmul.f32 %v1903, %v1685
        %v1945 = vmul.f32 %v1903, %v1686
        %v1946 = vmul.f32 %v1903, %v1687
        %v1947 = vmul.f32 %v1903, %v1688
        %v1948 = vmul.f32 %v1903, %v1689
        %v1949 = vmul.f32 %v1903, %v1690
        %v1950 = vmul.f32 %v1903, %v1691
        %v1951 = vmul.f32 %v1903, %v1692
        %v1952 = vmul.f32 %v1903, %v1693
        %v1953 = vmul.f32 %v1903, %v1694
        %v1954 = vmul.f32 %v1903, %v1695
        %v1955 = vmul.f32 %v1903, %v1696
        %v1956 = vmul.f32 %v1903, %v1697
        %v1957 = vmul.f32 %v1903, %v1698
        %v1958 = vmul.f32 %v1903, %v1699
        %v1959 = vmul.f32 %v1903, %v1700
        %v1960 = vmul.f32 %v1903, %v1701
        %v1961 = vmul.f32 %v1903, %v1702
        %v1962 = vmul.f32 %v1903, %v1703
        %v1963 = vmul.f32 %v1903, %v1704
        %v1964 = vmul.f32 %v1903, %v1705
        %v1965 = vmul.f32 %v1903, %v1706
        %v1966 = vmul.f32 %v1903, %v1707
        %v1967 = vmul.f32 %v1903, %v1708
        %v1968 = vadd.f32 %v1839, %v1904
        %v1969 = vadd.f32 %v1840, %v1905
        %v1970 = vadd.f32 %v1841, %v1906
        %v1971 = vadd.f32 %v1842, %v1907
        %v1972 = vadd.f32 %v1843, %v1908
        %v1973 = vadd.f32 %v1844, %v1909
        %v1974 = vadd.f32 %v1845, %v1910
        %v1975 = vadd.f32 %v1846, %v1911
        %v1976 = vadd.f32 %v1847, %v1912
        %v1977 = vadd.f32 %v1848, %v1913
        %v1978 = vadd.f32 %v1849, %v1914
        %v1979 = vadd.f32 %v1850, %v1915
        %v1980 = vadd.f32 %v1851, %v1916
        %v1981 = vadd.f32 %v1852, %v1917
        %v1982 = vadd.f32 %v1853, %v1918
        %v1983 = vadd.f32 %v1854, %v1919
        %v1984 = vadd.f32 %v1855, %v1920
        %v1985 = vadd.f32 %v1856, %v1921
        %v1986 = vadd.f32 %v1857, %v1922
        %v1987 = vadd.f32 %v1858, %v1923
        %v1988 = vadd.f32 %v1859, %v1924
        %v1989 = vadd.f32 %v1860, %v1925
        %v1990 = vadd.f32 %v1861, %v1926
        %v1991 = vadd.f32 %v1862, %v1927
        %v1992 = vadd.f32 %v1863, %v1928
        %v1993 = vadd.f32 %v1864, %v1929
        %v1994 = vadd.f32 %v1865, %v1930
        %v1995 = vadd.f32 %v1866, %v1931
        %v1996 = vadd.f32 %v1867, %v1932
        %v1997 = vadd.f32 %v1868, %v1933
        %v1998 = vadd.f32 %v1869, %v1934
        %v1999 = vadd.f32 %v1870, %v1935
        %v2000 = vadd.f32 %v1871, %v1936
        %v2001 = vadd.f32 %v1872, %v1937
        %v2002 = vadd.f32 %v1873, %v1938
        %v2003 = vadd.f32 %v1874, %v1939
        %v2004 = vadd.f32 %v1875, %v1940
        %v2005 = vadd.f32 %v1876, %v1941
        %v2006 = vadd.f32 %v1877, %v1942
        %v2007 = vadd.f32 %v1878, %v1943
        %v2008 = vadd.f32 %v1879, %v1944
        %v2009 = vadd.f32 %v1880, %v1945
        %v2010 = vadd.f32 %v1881, %v1946
        %v2011 = vadd.f32 %v1882, %v1947
        %v2012 = vadd.f32 %v1883, %v1948
        %v2013 = vadd.f32 %v1884, %v1949
        %v2014 = vadd.f32 %v1885, %v1950
        %v2015 = vadd.f32 %v1886, %v1951
        %v2016 = vadd.f32 %v1887, %v1952
        %v2017 = vadd.f32 %v1888, %v1953
        %v2018 = vadd.f32 %v1889, %v1954
        %v2019 = vadd.f32 %v1890, %v1955
        %v2020 = vadd.f32 %v1891, %v1956
        %v2021 = vadd.f32 %v1892, %v1957
        %v2022 = vadd.f32 %v1893, %v1958
        %v2023 = vadd.f32 %v1894, %v1959
        %v2024 = vadd.f32 %v1895, %v1960
        %v2025 = vadd.f32 %v1896, %v1961
        %v2026 = vadd.f32 %v1897, %v1962
        %v2027 = vadd.f32 %v1898, %v1963
        %v2028 = vadd.f32 %v1899, %v1964
        %v2029 = vadd.f32 %v1900, %v1965
        %v2030 = vadd.f32 %v1901, %v1966
        %v2031 = vadd.f32 %v1902, %v1967
        %2032 = vst [vmem:[%s227] sm:$0xff] %v1968
        %2033 = vst [vmem:[%s227 + $0x8] sm:$0xff] %v1969
        %2034 = vst [vmem:[%s227 + $0x10] sm:$0xff] %v1970
        %2035 = vst [vmem:[%s227 + $0x18] sm:$0xff] %v1971
        %2036 = vst [vmem:[%s227 + $0x20] sm:$0xff] %v1972
        %2037 = vst [vmem:[%s227 + $0x28] sm:$0xff] %v1973
        %2038 = vst [vmem:[%s227 + $0x30] sm:$0xff] %v1974
        %2039 = vst [vmem:[%s227 + $0x38] sm:$0xff] %v1975
        %2040 = vst [vmem:[%s227 + $0x40] sm:$0xff] %v1976
        %2041 = vst [vmem:[%s227 + $0x48] sm:$0xff] %v1977
        %2042 = vst [vmem:[%s227 + $0x50] sm:$0xff] %v1978
        %2043 = vst [vmem:[%s227 + $0x58] sm:$0xff] %v1979
        %2044 = vst [vmem:[%s227 + $0x60] sm:$0xff] %v1980
        %2045 = vst [vmem:[%s227 + $0x68] sm:$0xff] %v1981
        %2046 = vst [vmem:[%s227 + $0x70] sm:$0xff] %v1982
        %2047 = vst [vmem:[%s227 + $0x78] sm:$0xff] %v1983
        %2048 = vst [vmem:[%s227 + $0x80] sm:$0xff] %v1984
        %2049 = vst [vmem:[%s227 + $0x88] sm:$0xff] %v1985
        %2050 = vst [vmem:[%s227 + $0x90] sm:$0xff] %v1986
        %2051 = vst [vmem:[%s227 + $0x98] sm:$0xff] %v1987
        %2052 = vst [vmem:[%s227 + $0xa0] sm:$0xff] %v1988
        %2053 = vst [vmem:[%s227 + $0xa8] sm:$0xff] %v1989
        %2054 = vst [vmem:[%s227 + $0xb0] sm:$0xff] %v1990
        %2055 = vst [vmem:[%s227 + $0xb8] sm:$0xff] %v1991
        %2056 = vst [vmem:[%s227 + $0xc0] sm:$0xff] %v1992
        %2057 = vst [vmem:[%s227 + $0xc8] sm:$0xff] %v1993
        %2058 = vst [vmem:[%s227 + $0xd0] sm:$0xff] %v1994
        %2059 = vst [vmem:[%s227 + $0xd8] sm:$0xff] %v1995
        %2060 = vst [vmem:[%s227 + $0xe0] sm:$0xff] %v1996
        %2061 = vst [vmem:[%s227 + $0xe8] sm:$0xff] %v1997
        %2062 = vst [vmem:[%s227 + $0xf0] sm:$0xff] %v1998
        %2063 = vst [vmem:[%s227 + $0xf8] sm:$0xff] %v1999
        %2064 = vst [vmem:[%s227 + $0x100] sm:$0xff] %v2000
        %2065 = vst [vmem:[%s227 + $0x108] sm:$0xff] %v2001
        %2066 = vst [vmem:[%s227 + $0x110] sm:$0xff] %v2002
        %2067 = vst [vmem:[%s227 + $0x118] sm:$0xff] %v2003
        %2068 = vst [vmem:[%s227 + $0x120] sm:$0xff] %v2004
        %2069 = vst [vmem:[%s227 + $0x128] sm:$0xff] %v2005
        %2070 = vst [vmem:[%s227 + $0x130] sm:$0xff] %v2006
        %2071 = vst [vmem:[%s227 + $0x138] sm:$0xff] %v2007
        %2072 = vst [vmem:[%s227 + $0x140] sm:$0xff] %v2008
        %2073 = vst [vmem:[%s227 + $0x148] sm:$0xff] %v2009
        %2074 = vst [vmem:[%s227 + $0x150] sm:$0xff] %v2010
        %2075 = vst [vmem:[%s227 + $0x158] sm:$0xff] %v2011
        %2076 = vst [vmem:[%s227 + $0x160] sm:$0xff] %v2012
        %2077 = vst [vmem:[%s227 + $0x168] sm:$0xff] %v2013
        %2078 = vst [vmem:[%s227 + $0x170] sm:$0xff] %v2014
        %2079 = vst [vmem:[%s227 + $0x178] sm:$0xff] %v2015
        %2080 = vst [vmem:[%s227 + $0x180] sm:$0xff] %v2016
        %2081 = vst [vmem:[%s227 + $0x188] sm:$0xff] %v2017
        %2082 = vst [vmem:[%s227 + $0x190] sm:$0xff] %v2018
        %2083 = vst [vmem:[%s227 + $0x198] sm:$0xff] %v2019
        %2084 = vst [vmem:[%s227 + $0x1a0] sm:$0xff] %v2020
        %2085 = vst [vmem:[%s227 + $0x1a8] sm:$0xff] %v2021
        %2086 = vst [vmem:[%s227 + $0x1b0] sm:$0xff] %v2022
        %2087 = vst [vmem:[%s227 + $0x1b8] sm:$0xff] %v2023
        %2088 = vst [vmem:[%s227 + $0x1c0] sm:$0xff] %v2024
        %2089 = vst [vmem:[%s227 + $0x1c8] sm:$0xff] %v2025
        %2090 = vst [vmem:[%s227 + $0x1d0] sm:$0xff] %v2026
        %2091 = vst [vmem:[%s227 + $0x1d8] sm:$0xff] %v2027
        %2092 = vst [vmem:[%s227 + $0x1e0] sm:$0xff] %v2028
        %2093 = vst [vmem:[%s227 + $0x1e8] sm:$0xff] %v2029
        %2094 = vst [vmem:[%s227 + $0x1f0] sm:$0xff] %v2030
        %2095 = vst [vmem:[%s227 + $0x1f8] sm:$0xff] %v2031
        %s2096 = smul.u32 32, %s20
        %p2097 = scmp.lt.s32.totalorder %s19, 1
        %s2098 = scalar_select %p2097, %s19, 1
        %p2099 = scmp.lt.s32.totalorder %s2096, 31
        %s2100 = scalar_select %p2099, %s2096, 31
        %s2101 = smul.addr %s2100, 2
        %s2102 = smul.addr %s2098, 64
        %s2103 = sadd.s32 %s2101, %s2102
        %s2104 = smul.addr %s2103, 8
        %s2105 = scalar_lea.vmem %s3, %s2104
        // Predicated region
        $region37: #{offset_head_forward.3} parent=31 // pred_check
          %p2106 = pneg %p117
        $region38: #{offset_head_forward.3} parent=31 // pred_check_branch
          %2108 = sbr.rel (%p2106) target = $region40
        $region39: #{offset_head_forward.3} parent=31 // pred_region
          %s2109 = smul.u32 32, %s20
        $region40: #{offset_head_forward.3} parent=31 // pred_fallthru
          _
      $region32: #{offset_head_forward.3} parent=5 // pred_fallthru
        _
      %p2110 = scmp.le.s32.totalorder 2, %s10
      // Predicated region
      $region41: #{offset_head_forward.3} parent=5 // pred_check
        %p2111 = pneg %p2110
      $region42: #{offset_head_forward.3} parent=5 // pred_check_branch
        %2113 = sbr.rel (%p2111) target = $region44
      $region43: #{offset_head_forward.3} parent=5 // pred_region
        %s2114 = ssub.s32 %s10, 2
        // Predicated region
        $region45: #{offset_head_forward.3} parent=43 // pred_check
          %p2115 = pneg %p123
        $region46: #{offset_head_forward.3} parent=43 // pred_check_branch
          %2117 = sbr.rel (%p2115) target = $region48
        $region47: #{offset_head_forward.3} parent=43 // pred_region
          %s2118 = smul.u32 32, %s22
          %p2119 = scmp.lt.s32.totalorder %s21, 1
          %s2120 = scalar_select %p2119, %s21, 1
          %p2121 = scmp.lt.s32.totalorder %s2118, 31
          %s2122 = scalar_select %p2121, %s2118, 31
          %s2123 = smul.addr %s2122, 2
          %s2124 = smul.addr %s2120, 64
          %s2125 = sadd.s32 %s2123, %s2124
          %s2126 = smul.addr %s2125, 8
          %s2127 = scalar_lea.vmem %s3, %s2126
        $region48: #{offset_head_forward.3} parent=43 // pred_fallthru
          _
      $region44: #{offset_head_forward.3} parent=5 // pred_fallthru
        _
    $region6: #{offset_head_forward.3} parent=1 // loop_footer
      %s14 = sadd.s32 1, %s10
    $region7: #{offset_head_forward.3} parent=1 // loop_footer_branch
      %9 = sbr.rel target = $region3
    $region8: #{offset_head_forward.3} parent=1 // loop_exit
      _
    %2128 = vsyncpa [#allocation3], 1
    %s2129 = scalar_lea.sflag [#allocation3], 1
    %2130 = vsyncpa %s2129, 1

</llo_original>
